<compile_context>
chip_gen: v5e
topology: v5e:2x2
jax: 0.10.0
libtpu: 0.0.40
codegen_flags: <defaults>
</compile_context>

<pallas_src>
import numpy as np

import jax
import jax.numpy as jnp
from jax import lax
from jax.experimental import pallas as pl
from jax.experimental.pallas import tpu as pltpu


# ----------------------------------------------------------------------------
# Fused encoder kernel (one grid step == one batch sample)
# ----------------------------------------------------------------------------
def _make_encoder_kernel(OH, OW, C1, C2, NHEAD):
    W1 = OW * C1          # conv1-output / conv2-input activation row width
    W2 = OW * C2          # conv2-output / conv3 activation row width

    def kernel(p1_ref, w1_ref, b1_ref,      # conv1 patches + kron weight + bias
               w2_ref, b2_ref,              # conv2 kron taps (9, W1, W2) + bias
               w3_ref, b3_ref,              # conv3 kron taps (9, W2, W2) + bias
               wh_ref, bh_ref,              # fused mu|ls head (OH, W2, NHEAD)
               out_ref,                     # (OH, NHEAD) result (row-broadcast)
               pad1_ref, pad2_ref):         # VMEM zero-padded activation slabs
        # ---- conv1 (stride 2): patches were gathered in the wrapper --------
        h1 = jnp.dot(p1_ref[...], w1_ref[...],
                     preferred_element_type=jnp.float32)
        h1 = jnp.maximum(h1 + b1_ref[...], 0.0).astype(pad1_ref.dtype)

        pad1_ref[...] = jnp.zeros_like(pad1_ref)
        pad1_ref[1:1 + OH, C1:C1 + W1] = h1          # interior of padded slab

        # ---- conv2: 9 shifted contiguous slices x block-diagonal matmuls ---
        acc = jnp.zeros((OH, W2), jnp.float32)
        for kh in range(3):
            for kw in range(3):
                a = pad1_ref[kh:kh + OH, kw * C1:kw * C1 + W1]
                acc = acc + jnp.dot(a, w2_ref[kh * 3 + kw],
                                    preferred_element_type=jnp.float32)
        h2 = jnp.maximum(acc + b2_ref[...], 0.0).astype(pad2_ref.dtype)

        pad2_ref[...] = jnp.zeros_like(pad2_ref)
        pad2_ref[1:1 + OH, C2:C2 + W2] = h2

        # ---- conv3 ----------------------------------------------------------
        acc = jnp.zeros((OH, W2), jnp.float32)
        for kh in range(3):
            for kw in range(3):
                a = pad2_ref[kh:kh + OH, kw * C2:kw * C2 + W2]
                acc = acc + jnp.dot(a, w3_ref[kh * 3 + kw],
                                    preferred_element_type=jnp.float32)
        h3 = jnp.maximum(acc + b3_ref[...], 0.0).astype(jnp.bfloat16)

        # ---- fused mu / log_sigma heads (NCHW flatten folded into wh) ------
        head = jnp.zeros((1, NHEAD), jnp.float32)
        for r in range(OH):
            head = head + jnp.dot(h3[r:r + 1, :], wh_ref[r],
                                  preferred_element_type=jnp.float32)
        head = head + bh_ref[...]
        out_ref[...] = jnp.broadcast_to(head, out_ref.shape)

    return kernel


# ----------------------------------------------------------------------------
# Wrapper-side glue
# ----------------------------------------------------------------------------
def _conv1_patches(x_nchw, OH, OW):
    """stride-2 / pad-1 / 3x3 im2col of the raw input only.
    Layout: row = n*OH + oh, col = ow*(C*9) + c*9 + kh*3 + kw
    (matches the kron'd PyTorch weight reshape)."""
    N, C, H, W = x_nchw.shape
    xp = jnp.pad(x_nchw, ((0, 0), (0, 0), (1, 1), (1, 1)))
    taps = [xp[:, :, kh:kh + 2 * OH:2, kw:kw + 2 * OW:2]
            for kh in range(3) for kw in range(3)]
    p = jnp.stack(taps, axis=2)                 # (N, C, 9, OH, OW)
    p = p.transpose(0, 3, 4, 1, 2)              # (N, OH, OW, C, 9)
    return p.reshape(N * OH, OW * C * 9)


def make_encoder_forward(params, image_size):
    """Repack the PyTorch-layout weights ONCE (kron'd conv taps, NCHW-flatten
    folded into the fused mu|ls head weight, bf16 cast) and return a jitted
    forward(x) -> (mu, log_sigma) closure."""
    OH = OW = (image_size + 2 - 3) // 2 + 1     # stride-2, pad-1, k=3
    C1 = params["w1"].shape[0]                  # 16
    C2 = params["w2"].shape[0]                  # 32
    C_in = params["w1"].shape[1]
    n_out = params["wmu"].shape[0]
    NHEAD = 2 * n_out
    bf16 = jnp.bfloat16
    eye = jnp.eye(OW, dtype=jnp.float32)

    # conv1: (C_out, C_in, 3, 3) -> block-diagonal over the OW output columns
    w1mat = params["w1"].reshape(C1, C_in * 9).T            # (C_in*9, C1)
    w1k = jnp.kron(eye, w1mat).astype(bf16)                 # (OW*C_in*9, OW*C1)
    b1t = jnp.tile(params["b1"], OW)[None, :].astype(jnp.float32)

    def kron_taps(w):                                       # (Co, Ci, 3, 3)
        return jnp.stack([jnp.kron(eye, w[:, :, kh, kw].T)
                          for kh in range(3) for kw in range(3)])
    w2k = kron_taps(params["w2"]).astype(bf16)              # (9, OW*C1, OW*C2)
    b2t = jnp.tile(params["b2"], OW)[None, :].astype(jnp.float32)
    w3k = kron_taps(params["w3"]).astype(bf16)              # (9, OW*C2, OW*C2)
    b3t = jnp.tile(params["b3"], OW)[None, :].astype(jnp.float32)

    # heads: fold PyTorch's NCHW flatten into the weight; fuse mu & log_sigma
    def head_perm(w):                                       # (n_out, C2*OH*OW)
        return (w.reshape(n_out, C2, OH, OW)
                 .transpose(2, 3, 1, 0)                     # (OH, OW, C2, n_out)
                 .reshape(OH, OW * C2, n_out))
    whead = jnp.concatenate([head_perm(params["wmu"]),
                             head_perm(params["wls"])], axis=-1).astype(bf16)
    bhead = jnp.concatenate([params["bmu"],
                             params["bls"]])[None, :].astype(jnp.float32)

    kernel = _make_encoder_kernel(OH, OW, C1, C2, NHEAD)
    K1 = OW * C_in * 9

    @jax.jit
    def forward(x_nchw):
        N = x_nchw.shape[0]
        p1 = _conv1_patches(x_nchw, OH, OW).astype(bf16)    # (N*OH, OW*C_in*9)
        out = pl.pallas_call(
            kernel,
            out_shape=jax.ShapeDtypeStruct((N, OH, NHEAD), jnp.float32),
            grid=(N,),
            in_specs=[
                pl.BlockSpec((OH, K1), lambda n: (n, 0)),
                pl.BlockSpec((K1, OW * C1), lambda n: (0, 0)),
                pl.BlockSpec((1, OW * C1), lambda n: (0, 0)),
                pl.BlockSpec((9, OW * C1, OW * C2), lambda n: (0, 0, 0)),
                pl.BlockSpec((1, OW * C2), lambda n: (0, 0)),
                pl.BlockSpec((9, OW * C2, OW * C2), lambda n: (0, 0, 0)),
                pl.BlockSpec((1, OW * C2), lambda n: (0, 0)),
                pl.BlockSpec((OH, OW * C2, NHEAD), lambda n: (0, 0, 0)),
                pl.BlockSpec((1, NHEAD), lambda n: (0, 0)),
            ],
            out_specs=pl.BlockSpec((None, OH, NHEAD), lambda n: (n, 0, 0)),
            scratch_shapes=[
                pltpu.VMEM((OH + 2, (OW + 2) * C1), jnp.bfloat16),
                pltpu.VMEM((OH + 2, (OW + 2) * C2), jnp.bfloat16),
            ],
            compiler_params=pltpu.CompilerParams(
                dimension_semantics=("parallel",)),
        )(p1, w1k, b1t, w2k, b2t, w3k, b3t, whead, bhead)
        heads = out[:, 0, :]                                # (N, 2*n_out)
        return heads[:, :n_out], heads[:, n_out:]

    return forward


# ----------------------------------------------------------------------------
# Parameter init (matches the PyTorch module's shapes)
# ----------------------------------------------------------------------------
def init_encoder_params(key, image_size, linear_output, image_channels):
    flat = int(image_size ** 2 / 4) * 32
    ks = jax.random.split(key, 10)
    s = 0.05
    return {
        "w1": jax.random.normal(ks[0], (16, image_channels, 3, 3), jnp.float32) * s,
        "b1": jax.random.normal(ks[1], (16,), jnp.float32) * s,
        "w2": jax.random.normal(ks[2], (32, 16, 3, 3), jnp.float32) * s,
        "b2": jax.random.normal(ks[3], (32,), jnp.float32) * s,
        "w3": jax.random.normal(ks[4], (32, 32, 3, 3), jnp.float32) * s,
        "b3": jax.random.normal(ks[5], (32,), jnp.float32) * s,
        "wmu": jax.random.normal(ks[6], (linear_output, flat), jnp.float32) * s,
        "bmu": jax.random.normal(ks[7], (linear_output,), jnp.float32) * s,
        "wls": jax.random.normal(ks[8], (linear_output, flat), jnp.float32) * s,
        "bls": jax.random.normal(ks[9], (linear_output,), jnp.float32) * s,
    }


# ----------------------------------------------------------------------------
# Pure-JAX reference (f32) for correctness check
# ----------------------------------------------------------------------------
def encoder_reference(params, x_nchw):
    def conv(x, w, b, stride):
        y = lax.conv_general_dilated(
            x, w, window_strides=(stride, stride), padding=((1, 1), (1, 1)),
            dimension_numbers=("NCHW", "OIHW", "NCHW"))
        return y + b.reshape(1, -1, 1, 1)

    h = jnp.maximum(conv(x_nchw, params["w1"], params["b1"], 2), 0.0)
    h = jnp.maximum(conv(h, params["w2"], params["b2"], 1), 0.0)
    h = jnp.maximum(conv(h, params["w3"], params["b3"], 1), 0.0)
    h_flat = h.reshape(h.shape[0], -1)
    mu = h_flat @ params["wmu"].T + params["bmu"]
    ls = h_flat @ params["wls"].T + params["bls"]
    return mu, ls


# ----------------------------------------------------------------------------
if __name__ == "__main__":
    image_size = 16
    image_channels = 4
    linear_output = 32
    batch = 2

    key = jax.random.PRNGKey(0)
    k_params, k_x = jax.random.split(key)
    params = init_encoder_params(k_params, image_size, linear_output,
                                 image_channels)
    x = jax.random.normal(k_x, (batch, image_channels, image_size, image_size),
                          jnp.float32)

    forward = make_encoder_forward(params, image_size)   # one-time weight repack
    mu, log_sigma = forward(x)
    mu = jax.block_until_ready(mu)
    log_sigma = jax.block_until_ready(log_sigma)

    mu_ref, ls_ref = encoder_reference(params, x)
    np.testing.assert_allclose(np.asarray(mu), np.asarray(mu_ref),
                               rtol=2e-2, atol=2e-2)
    np.testing.assert_allclose(np.asarray(log_sigma), np.asarray(ls_ref),
                               rtol=2e-2, atol=2e-2)

    assert mu.shape == (batch, linear_output)
    assert log_sigma.shape == (batch, linear_output)
    print("KERNEL_OK")
</pallas_src>

<mosaic_0001>
module attributes {stable_mosaic.version = 11 : i64} {
  func.func @kernel(%arg0: i32, %arg1: memref<8x288xbf16, #tpu.memory_space<vmem>>, %arg2: memref<288x128xbf16, #tpu.memory_space<vmem>>, %arg3: memref<1x128xf32, #tpu.memory_space<vmem>>, %arg4: memref<9x128x256xbf16, #tpu.memory_space<vmem>>, %arg5: memref<1x256xf32, #tpu.memory_space<vmem>>, %arg6: memref<9x256x256xbf16, #tpu.memory_space<vmem>>, %arg7: memref<1x256xf32, #tpu.memory_space<vmem>>, %arg8: memref<8x256x64xbf16, #tpu.memory_space<vmem>>, %arg9: memref<1x64xf32, #tpu.memory_space<vmem>>, %arg10: memref<1x8x64xf32, #tpu.memory_space<vmem>>, %arg11: memref<10x160xbf16, #tpu.memory_space<vmem>>, %arg12: memref<10x320xbf16, #tpu.memory_space<vmem>>) attributes {dimension_semantics = [#tpu.dimension_semantics<parallel>], iteration_bounds = array<i64: 2>, scalar_prefetch = 0 : i64, scratch_operands = 2 : i64, tpu.core_type = #tpu.core_type<tc>, window_params = [{transform_indices = @transform_0, window_bounds = array<i64: 8, 288>}, {pipeline_mode = #tpu.pipeline_mode<synchronous>, transform_indices = @transform_1, window_bounds = array<i64: 288, 128>}, {pipeline_mode = #tpu.pipeline_mode<synchronous>, transform_indices = @transform_2, window_bounds = array<i64: 1, 128>}, {pipeline_mode = #tpu.pipeline_mode<synchronous>, transform_indices = @transform_3, window_bounds = array<i64: 9, 128, 256>}, {pipeline_mode = #tpu.pipeline_mode<synchronous>, transform_indices = @transform_4, window_bounds = array<i64: 1, 256>}, {pipeline_mode = #tpu.pipeline_mode<synchronous>, transform_indices = @transform_5, window_bounds = array<i64: 9, 256, 256>}, {pipeline_mode = #tpu.pipeline_mode<synchronous>, transform_indices = @transform_6, window_bounds = array<i64: 1, 256>}, {pipeline_mode = #tpu.pipeline_mode<synchronous>, transform_indices = @transform_7, window_bounds = array<i64: 8, 256, 64>}, {pipeline_mode = #tpu.pipeline_mode<synchronous>, transform_indices = @transform_8, window_bounds = array<i64: 1, 64>}, {transform_indices = @transform_9, window_bounds = array<i64: 1, 8, 64>}]} {
    %c0 = arith.constant 0 : index
    %c0_0 = arith.constant 0 : index
    %0 = vector.load %arg1[%c0, %c0_0] : memref<8x288xbf16, #tpu.memory_space<vmem>>, vector<8x288xbf16>
    %c0_1 = arith.constant 0 : index
    %c0_2 = arith.constant 0 : index
    %1 = vector.load %arg2[%c0_1, %c0_2] : memref<288x128xbf16, #tpu.memory_space<vmem>>, vector<288x128xbf16>
    %cst = arith.constant dense<0.000000e+00> : vector<8x128xf32>
    %2 = tpu.matmul %0, %1, %cst {dimension_numbers = #tpu.dot_dimension_numbers<[1], [0], [0], [1], [0, 0, 1, 1], [], []>} : vector<8x288xbf16>, vector<288x128xbf16>, vector<8x128xf32> -> vector<8x128xf32>
    %c0_3 = arith.constant 0 : index
    %c0_4 = arith.constant 0 : index
    %3 = vector.load %arg3[%c0_3, %c0_4] : memref<1x128xf32, #tpu.memory_space<vmem>>, vector<1x128xf32>
    %4 = vector.broadcast %3 : vector<1x128xf32> to vector<8x128xf32>
    %5 = arith.addf %2, %4 : vector<8x128xf32>
    %cst_5 = arith.constant 0.000000e+00 : f32
    %6 = vector.broadcast %cst_5 : f32 to vector<8x128xf32>
    %7 = arith.maximumf %5, %6 : vector<8x128xf32>
    %8 = arith.truncf %7 : vector<8x128xf32> to vector<8x128xbf16>
    %cst_6 = arith.constant 0.000000e+00 : bf16
    %9 = vector.broadcast %cst_6 : bf16 to vector<10x160xbf16>
    %c0_7 = arith.constant 0 : index
    %c0_8 = arith.constant 0 : index
    %10 = vector.load %arg11[%c0_7, %c0_8] : memref<10x160xbf16, #tpu.memory_space<vmem>>, vector<10x160xbf16>
    tpu.vector_store %arg11[%c0_7, %c0_8], %9 {strides = array<i32>} : memref<10x160xbf16, #tpu.memory_space<vmem>>, vector<10x160xbf16>,
    %c1 = arith.constant 1 : index
    %c16 = arith.constant 16 : index
    %11 = vector.load %arg11[%c1, %c16] : memref<10x160xbf16, #tpu.memory_space<vmem>>, vector<8x128xbf16>
    tpu.vector_store %arg11[%c1, %c16], %8 {strides = array<i32>} : memref<10x160xbf16, #tpu.memory_space<vmem>>, vector<8x128xbf16>,
    %cst_9 = arith.constant 0.000000e+00 : f32
    %12 = vector.broadcast %cst_9 : f32 to vector<8x256xf32>
    %c0_10 = arith.constant 0 : index
    %c0_11 = arith.constant 0 : index
    %13 = vector.load %arg11[%c0_10, %c0_11] : memref<10x160xbf16, #tpu.memory_space<vmem>>, vector<8x128xbf16>
    %c0_12 = arith.constant 0 : index
    %c0_13 = arith.constant 0 : index
    %c0_14 = arith.constant 0 : index
    %14 = vector.load %arg4[%c0_12, %c0_13, %c0_14] : memref<9x128x256xbf16, #tpu.memory_space<vmem>>, vector<1x128x256xbf16>
    %15 = vector.shape_cast %14 : vector<1x128x256xbf16> to vector<128x256xbf16>
    %cst_15 = arith.constant dense<0.000000e+00> : vector<8x256xf32>
    %16 = tpu.matmul %13, %15, %cst_15 {dimension_numbers = #tpu.dot_dimension_numbers<[1], [0], [0], [1], [0, 0, 1, 1], [], []>} : vector<8x128xbf16>, vector<128x256xbf16>, vector<8x256xf32> -> vector<8x256xf32>
    %17 = arith.addf %12, %16 : vector<8x256xf32>
    %c0_16 = arith.constant 0 : index
    %c16_17 = arith.constant 16 : index
    %18 = vector.load %arg11[%c0_16, %c16_17] : memref<10x160xbf16, #tpu.memory_space<vmem>>, vector<8x128xbf16>
    %c1_18 = arith.constant 1 : index
    %c0_19 = arith.constant 0 : index
    %c0_20 = arith.constant 0 : index
    %19 = vector.load %arg4[%c1_18, %c0_19, %c0_20] : memref<9x128x256xbf16, #tpu.memory_space<vmem>>, vector<1x128x256xbf16>
    %20 = vector.shape_cast %19 : vector<1x128x256xbf16> to vector<128x256xbf16>
    %cst_21 = arith.constant dense<0.000000e+00> : vector<8x256xf32>
    %21 = tpu.matmul %18, %20, %cst_21 {dimension_numbers = #tpu.dot_dimension_numbers<[1], [0], [0], [1], [0, 0, 1, 1], [], []>} : vector<8x128xbf16>, vector<128x256xbf16>, vector<8x256xf32> -> vector<8x256xf32>
    %22 = arith.addf %17, %21 : vector<8x256xf32>
    %c0_22 = arith.constant 0 : index
    %c32 = arith.constant 32 : index
    %23 = vector.load %arg11[%c0_22, %c32] : memref<10x160xbf16, #tpu.memory_space<vmem>>, vector<8x128xbf16>
    %c2 = arith.constant 2 : index
    %c0_23 = arith.constant 0 : index
    %c0_24 = arith.constant 0 : index
    %24 = vector.load %arg4[%c2, %c0_23, %c0_24] : memref<9x128x256xbf16, #tpu.memory_space<vmem>>, vector<1x128x256xbf16>
    %25 = vector.shape_cast %24 : vector<1x128x256xbf16> to vector<128x256xbf16>
    %cst_25 = arith.constant dense<0.000000e+00> : vector<8x256xf32>
    %26 = tpu.matmul %23, %25, %cst_25 {dimension_numbers = #tpu.dot_dimension_numbers<[1], [0], [0], [1], [0, 0, 1, 1], [], []>} : vector<8x128xbf16>, vector<128x256xbf16>, vector<8x256xf32> -> vector<8x256xf32>
    %27 = arith.addf %22, %26 : vector<8x256xf32>
    %c1_26 = arith.constant 1 : index
    %c0_27 = arith.constant 0 : index
    %28 = vector.load %arg11[%c1_26, %c0_27] : memref<10x160xbf16, #tpu.memory_space<vmem>>, vector<8x128xbf16>
    %c3 = arith.constant 3 : index
    %c0_28 = arith.constant 0 : index
    %c0_29 = arith.constant 0 : index
    %29 = vector.load %arg4[%c3, %c0_28, %c0_29] : memref<9x128x256xbf16, #tpu.memory_space<vmem>>, vector<1x128x256xbf16>
    %30 = vector.shape_cast %29 : vector<1x128x256xbf16> to vector<128x256xbf16>
    %cst_30 = arith.constant dense<0.000000e+00> : vector<8x256xf32>
    %31 = tpu.matmul %28, %30, %cst_30 {dimension_numbers = #tpu.dot_dimension_numbers<[1], [0], [0], [1], [0, 0, 1, 1], [], []>} : vector<8x128xbf16>, vector<128x256xbf16>, vector<8x256xf32> -> vector<8x256xf32>
    %32 = arith.addf %27, %31 : vector<8x256xf32>
    %c1_31 = arith.constant 1 : index
    %c16_32 = arith.constant 16 : index
    %33 = vector.load %arg11[%c1_31, %c16_32] : memref<10x160xbf16, #tpu.memory_space<vmem>>, vector<8x128xbf16>
    %c4 = arith.constant 4 : index
    %c0_33 = arith.constant 0 : index
    %c0_34 = arith.constant 0 : index
    %34 = vector.load %arg4[%c4, %c0_33, %c0_34] : memref<9x128x256xbf16, #tpu.memory_space<vmem>>, vector<1x128x256xbf16>
    %35 = vector.shape_cast %34 : vector<1x128x256xbf16> to vector<128x256xbf16>
    %cst_35 = arith.constant dense<0.000000e+00> : vector<8x256xf32>
    %36 = tpu.matmul %33, %35, %cst_35 {dimension_numbers = #tpu.dot_dimension_numbers<[1], [0], [0], [1], [0, 0, 1, 1], [], []>} : vector<8x128xbf16>, vector<128x256xbf16>, vector<8x256xf32> -> vector<8x256xf32>
    %37 = arith.addf %32, %36 : vector<8x256xf32>
    %c1_36 = arith.constant 1 : index
    %c32_37 = arith.constant 32 : index
    %38 = vector.load %arg11[%c1_36, %c32_37] : memref<10x160xbf16, #tpu.memory_space<vmem>>, vector<8x128xbf16>
    %c5 = arith.constant 5 : index
    %c0_38 = arith.constant 0 : index
    %c0_39 = arith.constant 0 : index
    %39 = vector.load %arg4[%c5, %c0_38, %c0_39] : memref<9x128x256xbf16, #tpu.memory_space<vmem>>, vector<1x128x256xbf16>
    %40 = vector.shape_cast %39 : vector<1x128x256xbf16> to vector<128x256xbf16>
    %cst_40 = arith.constant dense<0.000000e+00> : vector<8x256xf32>
    %41 = tpu.matmul %38, %40, %cst_40 {dimension_numbers = #tpu.dot_dimension_numbers<[1], [0], [0], [1], [0, 0, 1, 1], [], []>} : vector<8x128xbf16>, vector<128x256xbf16>, vector<8x256xf32> -> vector<8x256xf32>
    %42 = arith.addf %37, %41 : vector<8x256xf32>
    %c2_41 = arith.constant 2 : index
    %c0_42 = arith.constant 0 : index
    %43 = vector.load %arg11[%c2_41, %c0_42] : memref<10x160xbf16, #tpu.memory_space<vmem>>, vector<8x128xbf16>
    %c6 = arith.constant 6 : index
    %c0_43 = arith.constant 0 : index
    %c0_44 = arith.constant 0 : index
    %44 = vector.load %arg4[%c6, %c0_43, %c0_44] : memref<9x128x256xbf16, #tpu.memory_space<vmem>>, vector<1x128x256xbf16>
    %45 = vector.shape_cast %44 : vector<1x128x256xbf16> to vector<128x256xbf16>
    %cst_45 = arith.constant dense<0.000000e+00> : vector<8x256xf32>
    %46 = tpu.matmul %43, %45, %cst_45 {dimension_numbers = #tpu.dot_dimension_numbers<[1], [0], [0], [1], [0, 0, 1, 1], [], []>} : vector<8x128xbf16>, vector<128x256xbf16>, vector<8x256xf32> -> vector<8x256xf32>
    %47 = arith.addf %42, %46 : vector<8x256xf32>
    %c2_46 = arith.constant 2 : index
    %c16_47 = arith.constant 16 : index
    %48 = vector.load %arg11[%c2_46, %c16_47] : memref<10x160xbf16, #tpu.memory_space<vmem>>, vector<8x128xbf16>
    %c7 = arith.constant 7 : index
    %c0_48 = arith.constant 0 : index
    %c0_49 = arith.constant 0 : index
    %49 = vector.load %arg4[%c7, %c0_48, %c0_49] : memref<9x128x256xbf16, #tpu.memory_space<vmem>>, vector<1x128x256xbf16>
    %50 = vector.shape_cast %49 : vector<1x128x256xbf16> to vector<128x256xbf16>
    %cst_50 = arith.constant dense<0.000000e+00> : vector<8x256xf32>
    %51 = tpu.matmul %48, %50, %cst_50 {dimension_numbers = #tpu.dot_dimension_numbers<[1], [0], [0], [1], [0, 0, 1, 1], [], []>} : vector<8x128xbf16>, vector<128x256xbf16>, vector<8x256xf32> -> vector<8x256xf32>
    %52 = arith.addf %47, %51 : vector<8x256xf32>
    %c2_51 = arith.constant 2 : index
    %c32_52 = arith.constant 32 : index
    %53 = vector.load %arg11[%c2_51, %c32_52] : memref<10x160xbf16, #tpu.memory_space<vmem>>, vector<8x128xbf16>
    %c8 = arith.constant 8 : index
    %c0_53 = arith.constant 0 : index
    %c0_54 = arith.constant 0 : index
    %54 = vector.load %arg4[%c8, %c0_53, %c0_54] : memref<9x128x256xbf16, #tpu.memory_space<vmem>>, vector<1x128x256xbf16>
    %55 = vector.shape_cast %54 : vector<1x128x256xbf16> to vector<128x256xbf16>
    %cst_55 = arith.constant dense<0.000000e+00> : vector<8x256xf32>
    %56 = tpu.matmul %53, %55, %cst_55 {dimension_numbers = #tpu.dot_dimension_numbers<[1], [0], [0], [1], [0, 0, 1, 1], [], []>} : vector<8x128xbf16>, vector<128x256xbf16>, vector<8x256xf32> -> vector<8x256xf32>
    %57 = arith.addf %52, %56 : vector<8x256xf32>
    %c0_56 = arith.constant 0 : index
    %c0_57 = arith.constant 0 : index
    %58 = vector.load %arg5[%c0_56, %c0_57] : memref<1x256xf32, #tpu.memory_space<vmem>>, vector<1x256xf32>
    %59 = vector.broadcast %58 : vector<1x256xf32> to vector<8x256xf32>
    %60 = arith.addf %57, %59 : vector<8x256xf32>
    %cst_58 = arith.constant 0.000000e+00 : f32
    %61 = vector.broadcast %cst_58 : f32 to vector<8x256xf32>
    %62 = arith.maximumf %60, %61 : vector<8x256xf32>
    %63 = arith.truncf %62 : vector<8x256xf32> to vector<8x256xbf16>
    %cst_59 = arith.constant 0.000000e+00 : bf16
    %64 = vector.broadcast %cst_59 : bf16 to vector<10x320xbf16>
    %c0_60 = arith.constant 0 : index
    %c0_61 = arith.constant 0 : index
    %65 = vector.load %arg12[%c0_60, %c0_61] : memref<10x320xbf16, #tpu.memory_space<vmem>>, vector<10x320xbf16>
    tpu.vector_store %arg12[%c0_60, %c0_61], %64 {strides = array<i32>} : memref<10x320xbf16, #tpu.memory_space<vmem>>, vector<10x320xbf16>,
    %c1_62 = arith.constant 1 : index
    %c32_63 = arith.constant 32 : index
    %66 = vector.load %arg12[%c1_62, %c32_63] : memref<10x320xbf16, #tpu.memory_space<vmem>>, vector<8x256xbf16>
    tpu.vector_store %arg12[%c1_62, %c32_63], %63 {strides = array<i32>} : memref<10x320xbf16, #tpu.memory_space<vmem>>, vector<8x256xbf16>,
    %cst_64 = arith.constant 0.000000e+00 : f32
    %67 = vector.broadcast %cst_64 : f32 to vector<8x256xf32>
    %c0_65 = arith.constant 0 : index
    %c0_66 = arith.constant 0 : index
    %68 = vector.load %arg12[%c0_65, %c0_66] : memref<10x320xbf16, #tpu.memory_space<vmem>>, vector<8x256xbf16>
    %c0_67 = arith.constant 0 : index
    %c0_68 = arith.constant 0 : index
    %c0_69 = arith.constant 0 : index
    %69 = vector.load %arg6[%c0_67, %c0_68, %c0_69] : memref<9x256x256xbf16, #tpu.memory_space<vmem>>, vector<1x256x256xbf16>
    %70 = vector.shape_cast %69 : vector<1x256x256xbf16> to vector<256x256xbf16>
    %cst_70 = arith.constant dense<0.000000e+00> : vector<8x256xf32>
    %71 = tpu.matmul %68, %70, %cst_70 {dimension_numbers = #tpu.dot_dimension_numbers<[1], [0], [0], [1], [0, 0, 1, 1], [], []>} : vector<8x256xbf16>, vector<256x256xbf16>, vector<8x256xf32> -> vector<8x256xf32>
    %72 = arith.addf %67, %71 : vector<8x256xf32>
    %c0_71 = arith.constant 0 : index
    %c32_72 = arith.constant 32 : index
    %73 = vector.load %arg12[%c0_71, %c32_72] : memref<10x320xbf16, #tpu.memory_space<vmem>>, vector<8x256xbf16>
    %c1_73 = arith.constant 1 : index
    %c0_74 = arith.constant 0 : index
    %c0_75 = arith.constant 0 : index
    %74 = vector.load %arg6[%c1_73, %c0_74, %c0_75] : memref<9x256x256xbf16, #tpu.memory_space<vmem>>, vector<1x256x256xbf16>
    %75 = vector.shape_cast %74 : vector<1x256x256xbf16> to vector<256x256xbf16>
    %cst_76 = arith.constant dense<0.000000e+00> : vector<8x256xf32>
    %76 = tpu.matmul %73, %75, %cst_76 {dimension_numbers = #tpu.dot_dimension_numbers<[1], [0], [0], [1], [0, 0, 1, 1], [], []>} : vector<8x256xbf16>, vector<256x256xbf16>, vector<8x256xf32> -> vector<8x256xf32>
    %77 = arith.addf %72, %76 : vector<8x256xf32>
    %c0_77 = arith.constant 0 : index
    %c64 = arith.constant 64 : index
    %78 = vector.load %arg12[%c0_77, %c64] : memref<10x320xbf16, #tpu.memory_space<vmem>>, vector<8x256xbf16>
    %c2_78 = arith.constant 2 : index
    %c0_79 = arith.constant 0 : index
    %c0_80 = arith.constant 0 : index
    %79 = vector.load %arg6[%c2_78, %c0_79, %c0_80] : memref<9x256x256xbf16, #tpu.memory_space<vmem>>, vector<1x256x256xbf16>
    %80 = vector.shape_cast %79 : vector<1x256x256xbf16> to vector<256x256xbf16>
    %cst_81 = arith.constant dense<0.000000e+00> : vector<8x256xf32>
    %81 = tpu.matmul %78, %80, %cst_81 {dimension_numbers = #tpu.dot_dimension_numbers<[1], [0], [0], [1], [0, 0, 1, 1], [], []>} : vector<8x256xbf16>, vector<256x256xbf16>, vector<8x256xf32> -> vector<8x256xf32>
    %82 = arith.addf %77, %81 : vector<8x256xf32>
    %c1_82 = arith.constant 1 : index
    %c0_83 = arith.constant 0 : index
    %83 = vector.load %arg12[%c1_82, %c0_83] : memref<10x320xbf16, #tpu.memory_space<vmem>>, vector<8x256xbf16>
    %c3_84 = arith.constant 3 : index
    %c0_85 = arith.constant 0 : index
    %c0_86 = arith.constant 0 : index
    %84 = vector.load %arg6[%c3_84, %c0_85, %c0_86] : memref<9x256x256xbf16, #tpu.memory_space<vmem>>, vector<1x256x256xbf16>
    %85 = vector.shape_cast %84 : vector<1x256x256xbf16> to vector<256x256xbf16>
    %cst_87 = arith.constant dense<0.000000e+00> : vector<8x256xf32>
    %86 = tpu.matmul %83, %85, %cst_87 {dimension_numbers = #tpu.dot_dimension_numbers<[1], [0], [0], [1], [0, 0, 1, 1], [], []>} : vector<8x256xbf16>, vector<256x256xbf16>, vector<8x256xf32> -> vector<8x256xf32>
    %87 = arith.addf %82, %86 : vector<8x256xf32>
    %c1_88 = arith.constant 1 : index
    %c32_89 = arith.constant 32 : index
    %88 = vector.load %arg12[%c1_88, %c32_89] : memref<10x320xbf16, #tpu.memory_space<vmem>>, vector<8x256xbf16>
    %c4_90 = arith.constant 4 : index
    %c0_91 = arith.constant 0 : index
    %c0_92 = arith.constant 0 : index
    %89 = vector.load %arg6[%c4_90, %c0_91, %c0_92] : memref<9x256x256xbf16, #tpu.memory_space<vmem>>, vector<1x256x256xbf16>
    %90 = vector.shape_cast %89 : vector<1x256x256xbf16> to vector<256x256xbf16>
    %cst_93 = arith.constant dense<0.000000e+00> : vector<8x256xf32>
    %91 = tpu.matmul %88, %90, %cst_93 {dimension_numbers = #tpu.dot_dimension_numbers<[1], [0], [0], [1], [0, 0, 1, 1], [], []>} : vector<8x256xbf16>, vector<256x256xbf16>, vector<8x256xf32> -> vector<8x256xf32>
    %92 = arith.addf %87, %91 : vector<8x256xf32>
    %c1_94 = arith.constant 1 : index
    %c64_95 = arith.constant 64 : index
    %93 = vector.load %arg12[%c1_94, %c64_95] : memref<10x320xbf16, #tpu.memory_space<vmem>>, vector<8x256xbf16>
    %c5_96 = arith.constant 5 : index
    %c0_97 = arith.constant 0 : index
    %c0_98 = arith.constant 0 : index
    %94 = vector.load %arg6[%c5_96, %c0_97, %c0_98] : memref<9x256x256xbf16, #tpu.memory_space<vmem>>, vector<1x256x256xbf16>
    %95 = vector.shape_cast %94 : vector<1x256x256xbf16> to vector<256x256xbf16>
    %cst_99 = arith.constant dense<0.000000e+00> : vector<8x256xf32>
    %96 = tpu.matmul %93, %95, %cst_99 {dimension_numbers = #tpu.dot_dimension_numbers<[1], [0], [0], [1], [0, 0, 1, 1], [], []>} : vector<8x256xbf16>, vector<256x256xbf16>, vector<8x256xf32> -> vector<8x256xf32>
    %97 = arith.addf %92, %96 : vector<8x256xf32>
    %c2_100 = arith.constant 2 : index
    %c0_101 = arith.constant 0 : index
    %98 = vector.load %arg12[%c2_100, %c0_101] : memref<10x320xbf16, #tpu.memory_space<vmem>>, vector<8x256xbf16>
    %c6_102 = arith.constant 6 : index
    %c0_103 = arith.constant 0 : index
    %c0_104 = arith.constant 0 : index
    %99 = vector.load %arg6[%c6_102, %c0_103, %c0_104] : memref<9x256x256xbf16, #tpu.memory_space<vmem>>, vector<1x256x256xbf16>
    %100 = vector.shape_cast %99 : vector<1x256x256xbf16> to vector<256x256xbf16>
    %cst_105 = arith.constant dense<0.000000e+00> : vector<8x256xf32>
    %101 = tpu.matmul %98, %100, %cst_105 {dimension_numbers = #tpu.dot_dimension_numbers<[1], [0], [0], [1], [0, 0, 1, 1], [], []>} : vector<8x256xbf16>, vector<256x256xbf16>, vector<8x256xf32> -> vector<8x256xf32>
    %102 = arith.addf %97, %101 : vector<8x256xf32>
    %c2_106 = arith.constant 2 : index
    %c32_107 = arith.constant 32 : index
    %103 = vector.load %arg12[%c2_106, %c32_107] : memref<10x320xbf16, #tpu.memory_space<vmem>>, vector<8x256xbf16>
    %c7_108 = arith.constant 7 : index
    %c0_109 = arith.constant 0 : index
    %c0_110 = arith.constant 0 : index
    %104 = vector.load %arg6[%c7_108, %c0_109, %c0_110] : memref<9x256x256xbf16, #tpu.memory_space<vmem>>, vector<1x256x256xbf16>
    %105 = vector.shape_cast %104 : vector<1x256x256xbf16> to vector<256x256xbf16>
    %cst_111 = arith.constant dense<0.000000e+00> : vector<8x256xf32>
    %106 = tpu.matmul %103, %105, %cst_111 {dimension_numbers = #tpu.dot_dimension_numbers<[1], [0], [0], [1], [0, 0, 1, 1], [], []>} : vector<8x256xbf16>, vector<256x256xbf16>, vector<8x256xf32> -> vector<8x256xf32>
    %107 = arith.addf %102, %106 : vector<8x256xf32>
    %c2_112 = arith.constant 2 : index
    %c64_113 = arith.constant 64 : index
    %108 = vector.load %arg12[%c2_112, %c64_113] : memref<10x320xbf16, #tpu.memory_space<vmem>>, vector<8x256xbf16>
    %c8_114 = arith.constant 8 : index
    %c0_115 = arith.constant 0 : index
    %c0_116 = arith.constant 0 : index
    %109 = vector.load %arg6[%c8_114, %c0_115, %c0_116] : memref<9x256x256xbf16, #tpu.memory_space<vmem>>, vector<1x256x256xbf16>
    %110 = vector.shape_cast %109 : vector<1x256x256xbf16> to vector<256x256xbf16>
    %cst_117 = arith.constant dense<0.000000e+00> : vector<8x256xf32>
    %111 = tpu.matmul %108, %110, %cst_117 {dimension_numbers = #tpu.dot_dimension_numbers<[1], [0], [0], [1], [0, 0, 1, 1], [], []>} : vector<8x256xbf16>, vector<256x256xbf16>, vector<8x256xf32> -> vector<8x256xf32>
    %112 = arith.addf %107, %111 : vector<8x256xf32>
    %c0_118 = arith.constant 0 : index
    %c0_119 = arith.constant 0 : index
    %113 = vector.load %arg7[%c0_118, %c0_119] : memref<1x256xf32, #tpu.memory_space<vmem>>, vector<1x256xf32>
    %114 = vector.broadcast %113 : vector<1x256xf32> to vector<8x256xf32>
    %115 = arith.addf %112, %114 : vector<8x256xf32>
    %cst_120 = arith.constant 0.000000e+00 : f32
    %116 = vector.broadcast %cst_120 : f32 to vector<8x256xf32>
    %117 = arith.maximumf %115, %116 : vector<8x256xf32>
    %118 = arith.truncf %117 : vector<8x256xf32> to vector<8x256xbf16>
    %cst_121 = arith.constant 0.000000e+00 : f32
    %119 = vector.broadcast %cst_121 : f32 to vector<1x64xf32>
    %120 = vector.extract_strided_slice %118 {offsets = [0, 0], sizes = [1, 256], strides = [1, 1]} : vector<8x256xbf16> to vector<1x256xbf16>
    %c0_122 = arith.constant 0 : index
    %c0_123 = arith.constant 0 : index
    %c0_124 = arith.constant 0 : index
    %121 = vector.load %arg8[%c0_122, %c0_123, %c0_124] : memref<8x256x64xbf16, #tpu.memory_space<vmem>>, vector<1x256x64xbf16>
    %122 = vector.shape_cast %121 : vector<1x256x64xbf16> to vector<256x64xbf16>
    %cst_125 = arith.constant dense<0.000000e+00> : vector<1x64xf32>
    %123 = tpu.matmul %120, %122, %cst_125 {dimension_numbers = #tpu.dot_dimension_numbers<[1], [0], [0], [1], [0, 0, 1, 1], [], []>} : vector<1x256xbf16>, vector<256x64xbf16>, vector<1x64xf32> -> vector<1x64xf32>
    %124 = arith.addf %119, %123 : vector<1x64xf32>
    %125 = vector.extract_strided_slice %118 {offsets = [1, 0], sizes = [1, 256], strides = [1, 1]} : vector<8x256xbf16> to vector<1x256xbf16>
    %c1_126 = arith.constant 1 : index
    %c0_127 = arith.constant 0 : index
    %c0_128 = arith.constant 0 : index
    %126 = vector.load %arg8[%c1_126, %c0_127, %c0_128] : memref<8x256x64xbf16, #tpu.memory_space<vmem>>, vector<1x256x64xbf16>
    %127 = vector.shape_cast %126 : vector<1x256x64xbf16> to vector<256x64xbf16>
    %cst_129 = arith.constant dense<0.000000e+00> : vector<1x64xf32>
    %128 = tpu.matmul %125, %127, %cst_129 {dimension_numbers = #tpu.dot_dimension_numbers<[1], [0], [0], [1], [0, 0, 1, 1], [], []>} : vector<1x256xbf16>, vector<256x64xbf16>, vector<1x64xf32> -> vector<1x64xf32>
    %129 = arith.addf %124, %128 : vector<1x64xf32>
    %130 = vector.extract_strided_slice %118 {offsets = [2, 0], sizes = [1, 256], strides = [1, 1]} : vector<8x256xbf16> to vector<1x256xbf16>
    %c2_130 = arith.constant 2 : index
    %c0_131 = arith.constant 0 : index
    %c0_132 = arith.constant 0 : index
    %131 = vector.load %arg8[%c2_130, %c0_131, %c0_132] : memref<8x256x64xbf16, #tpu.memory_space<vmem>>, vector<1x256x64xbf16>
    %132 = vector.shape_cast %131 : vector<1x256x64xbf16> to vector<256x64xbf16>
    %cst_133 = arith.constant dense<0.000000e+00> : vector<1x64xf32>
    %133 = tpu.matmul %130, %132, %cst_133 {dimension_numbers = #tpu.dot_dimension_numbers<[1], [0], [0], [1], [0, 0, 1, 1], [], []>} : vector<1x256xbf16>, vector<256x64xbf16>, vector<1x64xf32> -> vector<1x64xf32>
    %134 = arith.addf %129, %133 : vector<1x64xf32>
    %135 = vector.extract_strided_slice %118 {offsets = [3, 0], sizes = [1, 256], strides = [1, 1]} : vector<8x256xbf16> to vector<1x256xbf16>
    %c3_134 = arith.constant 3 : index
    %c0_135 = arith.constant 0 : index
    %c0_136 = arith.constant 0 : index
    %136 = vector.load %arg8[%c3_134, %c0_135, %c0_136] : memref<8x256x64xbf16, #tpu.memory_space<vmem>>, vector<1x256x64xbf16>
    %137 = vector.shape_cast %136 : vector<1x256x64xbf16> to vector<256x64xbf16>
    %cst_137 = arith.constant dense<0.000000e+00> : vector<1x64xf32>
    %138 = tpu.matmul %135, %137, %cst_137 {dimension_numbers = #tpu.dot_dimension_numbers<[1], [0], [0], [1], [0, 0, 1, 1], [], []>} : vector<1x256xbf16>, vector<256x64xbf16>, vector<1x64xf32> -> vector<1x64xf32>
    %139 = arith.addf %134, %138 : vector<1x64xf32>
    %140 = vector.extract_strided_slice %118 {offsets = [4, 0], sizes = [1, 256], strides = [1, 1]} : vector<8x256xbf16> to vector<1x256xbf16>
    %c4_138 = arith.constant 4 : index
    %c0_139 = arith.constant 0 : index
    %c0_140 = arith.constant 0 : index
    %141 = vector.load %arg8[%c4_138, %c0_139, %c0_140] : memref<8x256x64xbf16, #tpu.memory_space<vmem>>, vector<1x256x64xbf16>
    %142 = vector.shape_cast %141 : vector<1x256x64xbf16> to vector<256x64xbf16>
    %cst_141 = arith.constant dense<0.000000e+00> : vector<1x64xf32>
    %143 = tpu.matmul %140, %142, %cst_141 {dimension_numbers = #tpu.dot_dimension_numbers<[1], [0], [0], [1], [0, 0, 1, 1], [], []>} : vector<1x256xbf16>, vector<256x64xbf16>, vector<1x64xf32> -> vector<1x64xf32>
    %144 = arith.addf %139, %143 : vector<1x64xf32>
    %145 = vector.extract_strided_slice %118 {offsets = [5, 0], sizes = [1, 256], strides = [1, 1]} : vector<8x256xbf16> to vector<1x256xbf16>
    %c5_142 = arith.constant 5 : index
    %c0_143 = arith.constant 0 : index
    %c0_144 = arith.constant 0 : index
    %146 = vector.load %arg8[%c5_142, %c0_143, %c0_144] : memref<8x256x64xbf16, #tpu.memory_space<vmem>>, vector<1x256x64xbf16>
    %147 = vector.shape_cast %146 : vector<1x256x64xbf16> to vector<256x64xbf16>
    %cst_145 = arith.constant dense<0.000000e+00> : vector<1x64xf32>
    %148 = tpu.matmul %145, %147, %cst_145 {dimension_numbers = #tpu.dot_dimension_numbers<[1], [0], [0], [1], [0, 0, 1, 1], [], []>} : vector<1x256xbf16>, vector<256x64xbf16>, vector<1x64xf32> -> vector<1x64xf32>
    %149 = arith.addf %144, %148 : vector<1x64xf32>
    %150 = vector.extract_strided_slice %118 {offsets = [6, 0], sizes = [1, 256], strides = [1, 1]} : vector<8x256xbf16> to vector<1x256xbf16>
    %c6_146 = arith.constant 6 : index
    %c0_147 = arith.constant 0 : index
    %c0_148 = arith.constant 0 : index
    %151 = vector.load %arg8[%c6_146, %c0_147, %c0_148] : memref<8x256x64xbf16, #tpu.memory_space<vmem>>, vector<1x256x64xbf16>
    %152 = vector.shape_cast %151 : vector<1x256x64xbf16> to vector<256x64xbf16>
    %cst_149 = arith.constant dense<0.000000e+00> : vector<1x64xf32>
    %153 = tpu.matmul %150, %152, %cst_149 {dimension_numbers = #tpu.dot_dimension_numbers<[1], [0], [0], [1], [0, 0, 1, 1], [], []>} : vector<1x256xbf16>, vector<256x64xbf16>, vector<1x64xf32> -> vector<1x64xf32>
    %154 = arith.addf %149, %153 : vector<1x64xf32>
    %155 = vector.extract_strided_slice %118 {offsets = [7, 0], sizes = [1, 256], strides = [1, 1]} : vector<8x256xbf16> to vector<1x256xbf16>
    %c7_150 = arith.constant 7 : index
    %c0_151 = arith.constant 0 : index
    %c0_152 = arith.constant 0 : index
    %156 = vector.load %arg8[%c7_150, %c0_151, %c0_152] : memref<8x256x64xbf16, #tpu.memory_space<vmem>>, vector<1x256x64xbf16>
    %157 = vector.shape_cast %156 : vector<1x256x64xbf16> to vector<256x64xbf16>
    %cst_153 = arith.constant dense<0.000000e+00> : vector<1x64xf32>
    %158 = tpu.matmul %155, %157, %cst_153 {dimension_numbers = #tpu.dot_dimension_numbers<[1], [0], [0], [1], [0, 0, 1, 1], [], []>} : vector<1x256xbf16>, vector<256x64xbf16>, vector<1x64xf32> -> vector<1x64xf32>
    %159 = arith.addf %154, %158 : vector<1x64xf32>
    %c0_154 = arith.constant 0 : index
    %c0_155 = arith.constant 0 : index
    %160 = vector.load %arg9[%c0_154, %c0_155] : memref<1x64xf32, #tpu.memory_space<vmem>>, vector<1x64xf32>
    %161 = arith.addf %159, %160 : vector<1x64xf32>
    %162 = vector.shape_cast %161 : vector<1x64xf32> to vector<1x64xf32>
    %163 = vector.broadcast %162 : vector<1x64xf32> to vector<8x64xf32>
    %c0_156 = arith.constant 0 : index
    %c0_157 = arith.constant 0 : index
    %c0_158 = arith.constant 0 : index
    %164 = vector.load %arg10[%c0_156, %c0_157, %c0_158] : memref<1x8x64xf32, #tpu.memory_space<vmem>>, vector<1x8x64xf32>
    %165 = vector.shape_cast %164 : vector<1x8x64xf32> to vector<8x64xf32>
    %166 = vector.shape_cast %163 : vector<8x64xf32> to vector<1x8x64xf32>
    tpu.vector_store %arg10[%c0_156, %c0_157, %c0_158], %166 {strides = array<i32>} : memref<1x8x64xf32, #tpu.memory_space<vmem>>, vector<1x8x64xf32>,
    return
  }
  func.func @transform_0(%arg0: i32) -> (i32, i32) {
    %c0_i32 = arith.constant 0 : i32
    %c0_i32_0 = arith.constant 0 : i32
    return %arg0, %c0_i32 : i32, i32
  }
  func.func @transform_1(%arg0: i32) -> (i32, i32) {
    %c0_i32 = arith.constant 0 : i32
    %c0_i32_0 = arith.constant 0 : i32
    %c0_i32_1 = arith.constant 0 : i32
    return %c0_i32, %c0_i32_0 : i32, i32
  }
  func.func @transform_2(%arg0: i32) -> (i32, i32) {
    %c0_i32 = arith.constant 0 : i32
    %c0_i32_0 = arith.constant 0 : i32
    %c0_i32_1 = arith.constant 0 : i32
    return %c0_i32, %c0_i32_0 : i32, i32
  }
  func.func @transform_3(%arg0: i32) -> (i32, i32, i32) {
    %c0_i32 = arith.constant 0 : i32
    %c0_i32_0 = arith.constant 0 : i32
    %c0_i32_1 = arith.constant 0 : i32
    %c0_i32_2 = arith.constant 0 : i32
    return %c0_i32, %c0_i32_0, %c0_i32_1 : i32, i32, i32
  }
  func.func @transform_4(%arg0: i32) -> (i32, i32) {
    %c0_i32 = arith.constant 0 : i32
    %c0_i32_0 = arith.constant 0 : i32
    %c0_i32_1 = arith.constant 0 : i32
    return %c0_i32, %c0_i32_0 : i32, i32
  }
  func.func @transform_5(%arg0: i32) -> (i32, i32, i32) {
    %c0_i32 = arith.constant 0 : i32
    %c0_i32_0 = arith.constant 0 : i32
    %c0_i32_1 = arith.constant 0 : i32
    %c0_i32_2 = arith.constant 0 : i32
    return %c0_i32, %c0_i32_0, %c0_i32_1 : i32, i32, i32
  }
  func.func @transform_6(%arg0: i32) -> (i32, i32) {
    %c0_i32 = arith.constant 0 : i32
    %c0_i32_0 = arith.constant 0 : i32
    %c0_i32_1 = arith.constant 0 : i32
    return %c0_i32, %c0_i32_0 : i32, i32
  }
  func.func @transform_7(%arg0: i32) -> (i32, i32, i32) {
    %c0_i32 = arith.constant 0 : i32
    %c0_i32_0 = arith.constant 0 : i32
    %c0_i32_1 = arith.constant 0 : i32
    %c0_i32_2 = arith.constant 0 : i32
    return %c0_i32, %c0_i32_0, %c0_i32_1 : i32, i32, i32
  }
  func.func @transform_8(%arg0: i32) -> (i32, i32) {
    %c0_i32 = arith.constant 0 : i32
    %c0_i32_0 = arith.constant 0 : i32
    %c0_i32_1 = arith.constant 0 : i32
    return %c0_i32, %c0_i32_0 : i32, i32
  }
  func.func @transform_9(%arg0: i32) -> (i32, i32, i32) {
    %c0_i32 = arith.constant 0 : i32
    %c0_i32_0 = arith.constant 0 : i32
    %c0_i32_1 = arith.constant 0 : i32
    return %arg0, %c0_i32, %c0_i32_0 : i32, i32, i32
  }
}

</mosaic_0001>

<llo_original>
// kernel: forward.1
$region0: #{forward.1}
  #allocation0 [shape = 'u32[]', space=smem, size = 0x4, offset = 0x4, fixed_abs, tag = 'smem constant byte address 0x4 - core index']
  #allocation1 [shape = 'u32[72,128]{1,0:T(1,128)}', space=vmem, size = 0x9000, scoped, tag = 'internal scratch']
  #allocation2 [shape = 'bf16[10,160]{1,0:T(8,128)(2,1)}', space=vmem, size = 0x2000, scoped, tag = 'scratch operand']
  #allocation3 [shape = 'bf16[10,320]{1,0:T(8,128)(2,1)}', space=vmem, size = 0x3000, scoped, tag = 'scratch operand']
  %s0 = inlined_call_operand.vmem [shape: bf16[16,288], index: 0, kind: input, shape index: {}]
  %s1 = inlined_call_operand.hbm [shape: bf16[288,128], index: 1, kind: input, shape index: {}]
  %s2 = inlined_call_operand.hbm [shape: f32[1,128], index: 2, kind: input, shape index: {}]
  %s3 = inlined_call_operand.hbm [shape: bf16[9,128,256], index: 3, kind: input, shape index: {}]
  %s4 = inlined_call_operand.hbm [shape: f32[1,256], index: 4, kind: input, shape index: {}]
  %s5 = inlined_call_operand.hbm [shape: bf16[9,256,256], index: 5, kind: input, shape index: {}]
  %s6 = inlined_call_operand.hbm [shape: f32[1,256], index: 6, kind: input, shape index: {}]
  %s7 = inlined_call_operand.hbm [shape: bf16[8,256,64], index: 7, kind: input, shape index: {}]
  %s8 = inlined_call_operand.hbm [shape: f32[1,64], index: 8, kind: input, shape index: {}]
  %s9 = inlined_call_operand.vmem [shape: f32[2,8,64], index: 9, kind: output, shape index: {}]
  %s10 = sld [smem:[#allocation0]]
  $region101: #{forward.1} parent=0
    _
  %s12 = ssub.s32 1, %s10
  %s13 = scalar_select 0, %s12, %s10
  $region1: #{forward.1} parent=0
    #allocation4 [shape = 'u8[73728]{0}', space=vmem, size = 0x12000, scoped, tag = 'input window, operand 1, single buffered']
    #allocation5 [shape = 's32[2]{0}', space=sflag, size = 0x8, scoped, tag = 'scoped memory for forward.1']
    #allocation6 [shape = 'u8[512]{0}', space=vmem, size = 0x400, scoped, tag = 'input window, operand 2, single buffered']
    #allocation7 [shape = 's32[1]{0}', space=sflag, size = 0x4, scoped, tag = 'scoped memory for forward.1']
    #allocation8 [shape = 'u8[589824]{0}', space=vmem, size = 0x90000, scoped, tag = 'input window, operand 3, single buffered']
    #allocation9 [shape = 'u8[1024]{0}', space=vmem, size = 0x400, scoped, tag = 'input window, operand 4, single buffered']
    #allocation10 [shape = 's32[1]{0}', space=sflag, size = 0x4, scoped, tag = 'scoped memory for forward.1']
    #allocation11 [shape = 'u8[1179648]{0}', space=vmem, size = 0x120000, scoped, tag = 'input window, operand 5, single buffered']
    #allocation12 [shape = 'u8[1024]{0}', space=vmem, size = 0x400, scoped, tag = 'input window, operand 6, single buffered']
    #allocation13 [shape = 's32[1]{0}', space=sflag, size = 0x4, scoped, tag = 'scoped memory for forward.1']
    #allocation14 [shape = 'u8[524288]{0}', space=vmem, size = 0x80000, scoped, tag = 'input window, operand 7, single buffered']
    #allocation15 [shape = 'u8[512]{0}', space=vmem, size = 0x400, scoped, tag = 'input window, operand 8, single buffered']
    #allocation16 [shape = 's32[1]{0}', space=sflag, size = 0x4, scoped, tag = 'scoped memory for forward.1']
    %14 = vsyncpa [#allocation5], 0
    %15 = vsyncpa [#allocation7], 0
    %16 = vsyncpa [#allocation10], 0
    %17 = vsyncpa [#allocation13], 0
    %18 = vsyncpa [#allocation16], 0
    loop: start=0, step=1, limit=4
    $region2: #{forward.1} parent=1 // loop_pre_header
      _
    $region3: #{forward.1} parent=1 // loop_header
      %s20 = sphi 0, %s24
      %p21 = scmp.ge.s32.totalorder %s20, 4
      %s30 = sphi 0, %s32
      %s33 = sphi 0, %s30
      %s34 = sphi 0, %s33
      %s50 = sphi 0, %s34
      %s54 = sphi 0, %s54
      %s56 = sphi 0, %s54
      %s57 = sphi 0, %s56
      %s71 = sphi 0, %s57
      %s75 = sphi 0, %s75
      %s77 = sphi 0, %s75
      %s78 = sphi 0, %s77
      %s92 = sphi 0, %s78
      %s96 = sphi 0, %s96
      %s98 = sphi 0, %s96
      %s99 = sphi 0, %s98
      %s113 = sphi 0, %s99
      %s117 = sphi 0, %s117
      %s119 = sphi 0, %s117
      %s120 = sphi 0, %s119
      %s134 = sphi 0, %s120
      %s138 = sphi 0, %s138
      %s140 = sphi 0, %s138
      %s141 = sphi 0, %s140
      %s155 = sphi 0, %s141
      %s159 = sphi 0, %s159
      %s161 = sphi 0, %s159
      %s162 = sphi 0, %s161
      %s176 = sphi 0, %s162
      %s180 = sphi 0, %s180
      %s182 = sphi 0, %s180
      %s183 = sphi 0, %s182
      %s197 = sphi 0, %s183
      %s201 = sphi 0, %s201
      %s203 = sphi 0, %s201
      %s204 = sphi 0, %s203
      %s218 = sphi 0, %s204
      %s224 = sphi 0, %s226
      %s227 = sphi 0, %s224
      %s228 = sphi 0, %s227
      %s244 = sphi 0, %s228
    $region4: #{forward.1} parent=1 // loop_header_branch
      %23 = sbr.rel (%p21) target = $region8
    $region5: #{forward.1} parent=1 // loop_body
      %s25 = ssub.s32 %s20, 1
      %s26 = ssub.s32 %s20, 2
      %s27 = sadd.s32 %s20, 1
      %s28 = ssub.s32 %s20, %s27
      %p29 = scmp.eq.s32.totalorder %s28, 0
      %s31 = sadd.s32 %s30, 1
      %s32 = scalar_select %p29, %s30, %s31
      %p35 = pneg %p29
      %p36 = scmp.eq.s32.totalorder %s20, 1
      %p37 = por %p35, %p36
      %p38 = scmp.ne.s32.totalorder %s30, %s33
      %p39 = scmp.eq.s32.totalorder %s20, 0
      %p40 = por %p38, %p39
      %p41 = scmp.ne.s32.totalorder %s30, %s33
      %p42 = scmp.eq.s32.totalorder %s25, 1
      %p43 = por %p41, %p42
      %p44 = scmp.ne.s32.totalorder %s33, %s34
      %p45 = scmp.eq.s32.totalorder %s25, 0
      %p46 = por %p44, %p45
      %p47 = scmp.ne.s32.totalorder %s33, %s34
      %p48 = scmp.eq.s32.totalorder %s26, 1
      %p49 = por %p47, %p48
      %p51 = scmp.ne.s32.totalorder %s34, %s50
      %p52 = scmp.eq.s32.totalorder %s26, 0
      %p53 = por %p51, %p52
      %s55 = sadd.s32 %s54, 1
      %p58 = scmp.eq.s32.totalorder %s20, 1
      %p59 = scmp.ne.s32.totalorder %s54, %s56
      %p60 = scmp.eq.s32.totalorder %s20, 0
      %p61 = por %p59, %p60
      %p62 = scmp.ne.s32.totalorder %s54, %s56
      %p63 = scmp.eq.s32.totalorder %s25, 1
      %p64 = por %p62, %p63
      %p65 = scmp.ne.s32.totalorder %s56, %s57
      %p66 = scmp.eq.s32.totalorder %s25, 0
      %p67 = por %p65, %p66
      %p68 = scmp.ne.s32.totalorder %s56, %s57
      %p69 = scmp.eq.s32.totalorder %s26, 1
      %p70 = por %p68, %p69
      %p72 = scmp.ne.s32.totalorder %s57, %s71
      %p73 = scmp.eq.s32.totalorder %s26, 0
      %p74 = por %p72, %p73
      %s76 = sadd.s32 %s75, 1
      %p79 = scmp.eq.s32.totalorder %s20, 1
      %p80 = scmp.ne.s32.totalorder %s75, %s77
      %p81 = scmp.eq.s32.totalorder %s20, 0
      %p82 = por %p80, %p81
      %p83 = scmp.ne.s32.totalorder %s75, %s77
      %p84 = scmp.eq.s32.totalorder %s25, 1
      %p85 = por %p83, %p84
      %p86 = scmp.ne.s32.totalorder %s77, %s78
      %p87 = scmp.eq.s32.totalorder %s25, 0
      %p88 = por %p86, %p87
      %p89 = scmp.ne.s32.totalorder %s77, %s78
      %p90 = scmp.eq.s32.totalorder %s26, 1
      %p91 = por %p89, %p90
      %p93 = scmp.ne.s32.totalorder %s78, %s92
      %p94 = scmp.eq.s32.totalorder %s26, 0
      %p95 = por %p93, %p94
      %s97 = sadd.s32 %s96, 1
      %p100 = scmp.eq.s32.totalorder %s20, 1
      %p101 = scmp.ne.s32.totalorder %s96, %s98
      %p102 = scmp.eq.s32.totalorder %s20, 0
      %p103 = por %p101, %p102
      %p104 = scmp.ne.s32.totalorder %s96, %s98
      %p105 = scmp.eq.s32.totalorder %s25, 1
      %p106 = por %p104, %p105
      %p107 = scmp.ne.s32.totalorder %s98, %s99
      %p108 = scmp.eq.s32.totalorder %s25, 0
      %p109 = por %p107, %p108
      %p110 = scmp.ne.s32.totalorder %s98, %s99
      %p111 = scmp.eq.s32.totalorder %s26, 1
      %p112 = por %p110, %p111
      %p114 = scmp.ne.s32.totalorder %s99, %s113
      %p115 = scmp.eq.s32.totalorder %s26, 0
      %p116 = por %p114, %p115
      %s118 = sadd.s32 %s117, 1
      %p121 = scmp.eq.s32.totalorder %s20, 1
      %p122 = scmp.ne.s32.totalorder %s117, %s119
      %p123 = scmp.eq.s32.totalorder %s20, 0
      %p124 = por %p122, %p123
      %p125 = scmp.ne.s32.totalorder %s117, %s119
      %p126 = scmp.eq.s32.totalorder %s25, 1
      %p127 = por %p125, %p126
      %p128 = scmp.ne.s32.totalorder %s119, %s120
      %p129 = scmp.eq.s32.totalorder %s25, 0
      %p130 = por %p128, %p129
      %p131 = scmp.ne.s32.totalorder %s119, %s120
      %p132 = scmp.eq.s32.totalorder %s26, 1
      %p133 = por %p131, %p132
      %p135 = scmp.ne.s32.totalorder %s120, %s134
      %p136 = scmp.eq.s32.totalorder %s26, 0
      %p137 = por %p135, %p136
      %s139 = sadd.s32 %s138, 1
      %p142 = scmp.eq.s32.totalorder %s20, 1
      %p143 = scmp.ne.s32.totalorder %s138, %s140
      %p144 = scmp.eq.s32.totalorder %s20, 0
      %p145 = por %p143, %p144
      %p146 = scmp.ne.s32.totalorder %s138, %s140
      %p147 = scmp.eq.s32.totalorder %s25, 1
      %p148 = por %p146, %p147
      %p149 = scmp.ne.s32.totalorder %s140, %s141
      %p150 = scmp.eq.s32.totalorder %s25, 0
      %p151 = por %p149, %p150
      %p152 = scmp.ne.s32.totalorder %s140, %s141
      %p153 = scmp.eq.s32.totalorder %s26, 1
      %p154 = por %p152, %p153
      %p156 = scmp.ne.s32.totalorder %s141, %s155
      %p157 = scmp.eq.s32.totalorder %s26, 0
      %p158 = por %p156, %p157
      %s160 = sadd.s32 %s159, 1
      %p163 = scmp.eq.s32.totalorder %s20, 1
      %p164 = scmp.ne.s32.totalorder %s159, %s161
      %p165 = scmp.eq.s32.totalorder %s20, 0
      %p166 = por %p164, %p165
      %p167 = scmp.ne.s32.totalorder %s159, %s161
      %p168 = scmp.eq.s32.totalorder %s25, 1
      %p169 = por %p167, %p168
      %p170 = scmp.ne.s32.totalorder %s161, %s162
      %p171 = scmp.eq.s32.totalorder %s25, 0
      %p172 = por %p170, %p171
      %p173 = scmp.ne.s32.totalorder %s161, %s162
      %p174 = scmp.eq.s32.totalorder %s26, 1
      %p175 = por %p173, %p174
      %p177 = scmp.ne.s32.totalorder %s162, %s176
      %p178 = scmp.eq.s32.totalorder %s26, 0
      %p179 = por %p177, %p178
      %s181 = sadd.s32 %s180, 1
      %p184 = scmp.eq.s32.totalorder %s20, 1
      %p185 = scmp.ne.s32.totalorder %s180, %s182
      %p186 = scmp.eq.s32.totalorder %s20, 0
      %p187 = por %p185, %p186
      %p188 = scmp.ne.s32.totalorder %s180, %s182
      %p189 = scmp.eq.s32.totalorder %s25, 1
      %p190 = por %p188, %p189
      %p191 = scmp.ne.s32.totalorder %s182, %s183
      %p192 = scmp.eq.s32.totalorder %s25, 0
      %p193 = por %p191, %p192
      %p194 = scmp.ne.s32.totalorder %s182, %s183
      %p195 = scmp.eq.s32.totalorder %s26, 1
      %p196 = por %p194, %p195
      %p198 = scmp.ne.s32.totalorder %s183, %s197
      %p199 = scmp.eq.s32.totalorder %s26, 0
      %p200 = por %p198, %p199
      %s202 = sadd.s32 %s201, 1
      %p205 = scmp.eq.s32.totalorder %s20, 1
      %p206 = scmp.ne.s32.totalorder %s201, %s203
      %p207 = scmp.eq.s32.totalorder %s20, 0
      %p208 = por %p206, %p207
      %p209 = scmp.ne.s32.totalorder %s201, %s203
      %p210 = scmp.eq.s32.totalorder %s25, 1
      %p211 = por %p209, %p210
      %p212 = scmp.ne.s32.totalorder %s203, %s204
      %p213 = scmp.eq.s32.totalorder %s25, 0
      %p214 = por %p212, %p213
      %p215 = scmp.ne.s32.totalorder %s203, %s204
      %p216 = scmp.eq.s32.totalorder %s26, 1
      %p217 = por %p215, %p216
      %p219 = scmp.ne.s32.totalorder %s204, %s218
      %p220 = scmp.eq.s32.totalorder %s26, 0
      %p221 = por %p219, %p220
      %s222 = ssub.s32 %s20, %s27
      %p223 = scmp.eq.s32.totalorder %s222, 0
      %s225 = sadd.s32 %s224, 1
      %s226 = scalar_select %p223, %s224, %s225
      %p229 = pneg %p223
      %p230 = scmp.eq.s32.totalorder %s20, 1
      %p231 = por %p229, %p230
      %p232 = scmp.ne.s32.totalorder %s224, %s227
      %p233 = scmp.eq.s32.totalorder %s20, 0
      %p234 = por %p232, %p233
      %p235 = scmp.ne.s32.totalorder %s224, %s227
      %p236 = scmp.eq.s32.totalorder %s25, 1
      %p237 = por %p235, %p236
      %p238 = scmp.ne.s32.totalorder %s227, %s228
      %p239 = scmp.eq.s32.totalorder %s25, 0
      %p240 = por %p238, %p239
      %p241 = scmp.ne.s32.totalorder %s227, %s228
      %p242 = scmp.eq.s32.totalorder %s26, 1
      %p243 = por %p241, %p242
      %p245 = scmp.ne.s32.totalorder %s228, %s244
      %p246 = scmp.eq.s32.totalorder %s26, 0
      %p247 = por %p245, %p246
      %p248 = scmp.le.s32.totalorder 1, %s20
      %p249 = scmp.lt.s32.totalorder %s20, 3
      %p250 = pnand %p248, %p249
      %p251 = pneg %p250
      // Predicated region
      $region9: #{forward.1} parent=5 // pred_check
        _
      $region10: #{forward.1} parent=5 // pred_check_branch
        %253 = sbr.rel (%p250) target = $region12
      $region11: #{forward.1} parent=5 // pred_region
        %s254 = ssub.s32 %s20, 1
        // Predicated region
        $region13: #{forward.1} parent=11 // pred_check
          %p255 = pneg %p67
        $region14: #{forward.1} parent=11 // pred_check_branch
          %257 = sbr.rel (%p255) target = $region16
        $region15: #{forward.1} parent=11 // pred_region
          %259 = vsyncadd [#allocation5], 0
          %s260 = sshll.u32 %s1, 4
          %s261 = int_to_ptr.hbm [resolvable:$true] %s260
          %s262 = sshll.u32 [#allocation4], 4
          %s263 = int_to_ptr.vmem [resolvable:$true] %s262
          %268 = dma.hbm_to_vmem [thread:$0]  %s261, 2304, %s263, [#allocation5], 64, 64, 4
        $region16: #{forward.1} parent=11 // pred_fallthru
          _
        // Predicated region
        $region17: #{forward.1} parent=11 // pred_check
          %p269 = pneg %p88
        $region18: #{forward.1} parent=11 // pred_check_branch
          %271 = sbr.rel (%p269) target = $region20
        $region19: #{forward.1} parent=11 // pred_region
          %273 = vsyncadd [#allocation7], 0
          %s275 = sshll.u32 %s2, 4
          %s276 = int_to_ptr.hbm [resolvable:$true] %s275
          %s277 = sshll.u32 [#allocation6], 4
          %s278 = int_to_ptr.vmem [resolvable:$true] %s277
          %280 = dma.hbm_to_vmem [thread:$0]  %s276, 16, %s278, [#allocation7]
        $region20: #{forward.1} parent=11 // pred_fallthru
          _
        // Predicated region
        $region21: #{forward.1} parent=11 // pred_check
          %p281 = pneg %p109
        $region22: #{forward.1} parent=11 // pred_check_branch
          %283 = sbr.rel (%p281) target = $region24
        $region23: #{forward.1} parent=11 // pred_region
          %285 = vsyncadd [#allocation7], 0
          %s286 = sshll.u32 %s3, 4
          %s287 = int_to_ptr.hbm [resolvable:$true] %s286
          %s288 = sshll.u32 [#allocation8], 4
          %s289 = int_to_ptr.vmem [resolvable:$true] %s288
          %294 = dma.hbm_to_vmem [thread:$0]  %s287, 18432, %s289, [#allocation7], 128, 128, 8
        $region24: #{forward.1} parent=11 // pred_fallthru
          _
        // Predicated region
        $region25: #{forward.1} parent=11 // pred_check
          %p295 = pneg %p130
        $region26: #{forward.1} parent=11 // pred_check_branch
          %297 = sbr.rel (%p295) target = $region28
        $region27: #{forward.1} parent=11 // pred_region
          %299 = vsyncadd [#allocation10], 0
          %s301 = sshll.u32 %s4, 4
          %s302 = int_to_ptr.hbm [resolvable:$true] %s301
          %s303 = sshll.u32 [#allocation9], 4
          %s304 = int_to_ptr.vmem [resolvable:$true] %s303
          %306 = dma.hbm_to_vmem [thread:$0]  %s302, 32, %s304, [#allocation10]
        $region28: #{forward.1} parent=11 // pred_fallthru
          _
        // Predicated region
        $region29: #{forward.1} parent=11 // pred_check
          %p307 = pneg %p151
        $region30: #{forward.1} parent=11 // pred_check_branch
          %309 = sbr.rel (%p307) target = $region32
        $region31: #{forward.1} parent=11 // pred_region
          %311 = vsyncadd [#allocation10], 0
          %s312 = sshll.u32 %s5, 4
          %s313 = int_to_ptr.hbm [resolvable:$true] %s312
          %s314 = sshll.u32 [#allocation11], 4
          %s315 = int_to_ptr.vmem [resolvable:$true] %s314
          %320 = dma.hbm_to_vmem [thread:$0]  %s313, 36864, %s315, [#allocation10], 128, 128, 8
        $region32: #{forward.1} parent=11 // pred_fallthru
          _
        // Predicated region
        $region33: #{forward.1} parent=11 // pred_check
          %p321 = pneg %p172
        $region34: #{forward.1} parent=11 // pred_check_branch
          %323 = sbr.rel (%p321) target = $region36
        $region35: #{forward.1} parent=11 // pred_region
          %325 = vsyncadd [#allocation13], 0
          %s327 = sshll.u32 %s6, 4
          %s328 = int_to_ptr.hbm [resolvable:$true] %s327
          %s329 = sshll.u32 [#allocation12], 4
          %s330 = int_to_ptr.vmem [resolvable:$true] %s329
          %332 = dma.hbm_to_vmem [thread:$0]  %s328, 32, %s330, [#allocation13]
        $region36: #{forward.1} parent=11 // pred_fallthru
          _
        // Predicated region
        $region37: #{forward.1} parent=11 // pred_check
          %p333 = pneg %p193
        $region38: #{forward.1} parent=11 // pred_check_branch
          %335 = sbr.rel (%p333) target = $region40
        $region39: #{forward.1} parent=11 // pred_region
          %337 = vsyncadd [#allocation13], 0
          %s338 = sshll.u32 %s7, 4
          %s339 = int_to_ptr.hbm [resolvable:$true] %s338
          %s340 = sshll.u32 [#allocation14], 4
          %s341 = int_to_ptr.vmem [resolvable:$true] %s340
          %346 = dma.hbm_to_vmem [thread:$0]  %s339, 16384, %s341, [#allocation13], 64, 64, 4
        $region40: #{forward.1} parent=11 // pred_fallthru
          _
        // Predicated region
        $region41: #{forward.1} parent=11 // pred_check
          %p347 = pneg %p214
        $region42: #{forward.1} parent=11 // pred_check_branch
          %349 = sbr.rel (%p347) target = $region44
        $region43: #{forward.1} parent=11 // pred_region
          %351 = vsyncadd [#allocation16], 0
          %s353 = sshll.u32 %s8, 4
          %s354 = int_to_ptr.hbm [resolvable:$true] %s353
          %s355 = sshll.u32 [#allocation15], 4
          %s356 = int_to_ptr.vmem [resolvable:$true] %s355
          %358 = dma.hbm_to_vmem [thread:$0]  %s354, 16, %s356, [#allocation16]
        $region44: #{forward.1} parent=11 // pred_fallthru
          _
      $region12: #{forward.1} parent=5 // pred_fallthru
        _
      %p359 = scmp.lt.s32.totalorder %s20, 2
      // Predicated region
      $region45: #{forward.1} parent=5 // pred_check
        %p360 = pneg %p359
      $region46: #{forward.1} parent=5 // pred_check_branch
        %362 = sbr.rel (%p360) target = $region48
      $region47: #{forward.1} parent=5 // pred_region
        // Predicated region
        $region49: #{forward.1} parent=47 // pred_check
          %p363 = pneg %p40
        $region50: #{forward.1} parent=47 // pred_check_branch
          %365 = sbr.rel (%p363) target = $region52
        $region51: #{forward.1} parent=47 // pred_region
          %p366 = scmp.lt.s32.totalorder %s20, 1
          %s367 = scalar_select %p366, %s20, 1
          %s368 = smul.addr %s367, 3
          %s369 = smul.addr %s368, 4
          %s370 = scalar_lea.vmem %s0, %s369
        $region52: #{forward.1} parent=47 // pred_fallthru
          _
      $region48: #{forward.1} parent=5 // pred_fallthru
        _
      %p371 = scmp.le.s32.totalorder 1, %s20
      %p372 = scmp.lt.s32.totalorder %s20, 3
      %p373 = pnand %p371, %p372
      %p374 = pneg %p373
      // Predicated region
      $region53: #{forward.1} parent=5 // pred_check
        _
      $region54: #{forward.1} parent=5 // pred_check_branch
        %376 = sbr.rel (%p373) target = $region56
      $region55: #{forward.1} parent=5 // pred_region
        %s377 = ssub.s32 %s20, 1
        // Predicated region
        $region57: #{forward.1} parent=55 // pred_check
          %p378 = pneg %p67
        $region58: #{forward.1} parent=55 // pred_check_branch
          %380 = sbr.rel (%p378) target = $region60
        $region59: #{forward.1} parent=55 // pred_region
          %382 = dma.done [#allocation5], 2304
        $region60: #{forward.1} parent=55 // pred_fallthru
          _
        // Predicated region
        $region61: #{forward.1} parent=55 // pred_check
          %p383 = pneg %p88
        $region62: #{forward.1} parent=55 // pred_check_branch
          %385 = sbr.rel (%p383) target = $region64
        $region63: #{forward.1} parent=55 // pred_region
          %387 = dma.done [#allocation7], 16
        $region64: #{forward.1} parent=55 // pred_fallthru
          _
        // Predicated region
        $region65: #{forward.1} parent=55 // pred_check
          %p388 = pneg %p109
        $region66: #{forward.1} parent=55 // pred_check_branch
          %390 = sbr.rel (%p388) target = $region68
        $region67: #{forward.1} parent=55 // pred_region
          %392 = dma.done [#allocation7], 18432
        $region68: #{forward.1} parent=55 // pred_fallthru
          _
        // Predicated region
        $region69: #{forward.1} parent=55 // pred_check
          %p393 = pneg %p130
        $region70: #{forward.1} parent=55 // pred_check_branch
          %395 = sbr.rel (%p393) target = $region72
        $region71: #{forward.1} parent=55 // pred_region
          %397 = dma.done [#allocation10], 32
        $region72: #{forward.1} parent=55 // pred_fallthru
          _
        // Predicated region
        $region73: #{forward.1} parent=55 // pred_check
          %p398 = pneg %p151
        $region74: #{forward.1} parent=55 // pred_check_branch
          %400 = sbr.rel (%p398) target = $region76
        $region75: #{forward.1} parent=55 // pred_region
          %402 = dma.done [#allocation10], 36864
        $region76: #{forward.1} parent=55 // pred_fallthru
          _
        // Predicated region
        $region77: #{forward.1} parent=55 // pred_check
          %p403 = pneg %p172
        $region78: #{forward.1} parent=55 // pred_check_branch
          %405 = sbr.rel (%p403) target = $region80
        $region79: #{forward.1} parent=55 // pred_region
          %407 = dma.done [#allocation13], 32
        $region80: #{forward.1} parent=55 // pred_fallthru
          _
        // Predicated region
        $region81: #{forward.1} parent=55 // pred_check
          %p408 = pneg %p193
        $region82: #{forward.1} parent=55 // pred_check_branch
          %410 = sbr.rel (%p408) target = $region84
        $region83: #{forward.1} parent=55 // pred_region
          %412 = dma.done [#allocation13], 16384
        $region84: #{forward.1} parent=55 // pred_fallthru
          _
        // Predicated region
        $region85: #{forward.1} parent=55 // pred_check
          %p413 = pneg %p214
        $region86: #{forward.1} parent=55 // pred_check_branch
          %415 = sbr.rel (%p413) target = $region88
        $region87: #{forward.1} parent=55 // pred_region
          %417 = dma.done [#allocation16], 16
        $region88: #{forward.1} parent=55 // pred_fallthru
          _
        %p418 = scmp.lt.s32.totalorder %s25, 1
        %s419 = scalar_select %p418, %s25, 1
        %s420 = smul.addr %s419, 3
        %s421 = smul.addr %s420, 4
        %s422 = scalar_lea.vmem %s0, %s421
        %p423 = pneg %p46
        %p424 = pneg %p43
        %p425 = pneg %p67
        %p426 = pneg %p64
        %p427 = pneg %p88
        %p428 = pneg %p85
        %p429 = pneg %p109
        %p430 = pneg %p106
        %p431 = pneg %p130
        %p432 = pneg %p127
        %p433 = pneg %p151
        %p434 = pneg %p148
        %p435 = pneg %p172
        %p436 = pneg %p169
        %p437 = pneg %p193
        %p438 = pneg %p190
        %p439 = pneg %p214
        %p440 = pneg %p211
        %p441 = pneg %p240
        %p442 = pneg %p237
        %p443 = scmp.lt.s32.totalorder %s25, 1
        %s444 = scalar_select %p443, %s25, 1
        %s445 = smul.addr %s444, 8
        %s446 = scalar_lea.vmem %s9, %s445
        %p447 = scmp.lt.s32.totalorder %s25, 1
        %s448 = scalar_select %p447, %s25, 1
        %s449 = smul.addr %s448, 3
        %s450 = smul.addr %s449, 4
        %s451 = scalar_lea.vmem %s0, %s450
        %p452 = scmp.lt.s32.totalorder %s25, 1
        %s453 = scalar_select %p452, %s25, 1
        %s454 = smul.addr %s453, 8
        %s455 = scalar_lea.vmem %s9, %s454
        %v457 = vld [vmem:[%s451] sm:$0xff]
        %v458 = vld [vmem:[%s451 + $0x8] sm:$0xf]
        %v459 = vld [vmem:[#allocation4] sm:$0xf]
        %v460 = vld [vmem:[#allocation4 + $0x4] sm:$0xf]
        %v461 = vld [vmem:[#allocation4 + $0x8] sm:$0xf]
        %v462 = vld [vmem:[#allocation4 + $0xc] sm:$0xf]
        %v463 = vld [vmem:[#allocation4 + $0x10] sm:$0xf]
        %v464 = vld [vmem:[#allocation4 + $0x14] sm:$0xf]
        %v465 = vld [vmem:[#allocation4 + $0x18] sm:$0xf]
        %v466 = vld [vmem:[#allocation4 + $0x1c] sm:$0xf]
        %v467 = vld [vmem:[#allocation4 + $0x20] sm:$0xf]
        %v468 = vld [vmem:[#allocation4 + $0x24] sm:$0xf]
        %v469 = vld [vmem:[#allocation4 + $0x28] sm:$0xf]
        %v470 = vld [vmem:[#allocation4 + $0x2c] sm:$0xf]
        %v471 = vld [vmem:[#allocation4 + $0x30] sm:$0xf]
        %v472 = vld [vmem:[#allocation4 + $0x34] sm:$0xf]
        %v473 = vld [vmem:[#allocation4 + $0x38] sm:$0xf]
        %v474 = vld [vmem:[#allocation4 + $0x3c] sm:$0xf]
        %v475 = vld [vmem:[#allocation4 + $0x40] sm:$0xf]
        %v476 = vld [vmem:[#allocation4 + $0x44] sm:$0xf]
        %v477 = vld [vmem:[#allocation4 + $0x48] sm:$0xf]
        %v478 = vld [vmem:[#allocation4 + $0x4c] sm:$0xf]
        %v479 = vld [vmem:[#allocation4 + $0x50] sm:$0xf]
        %v480 = vld [vmem:[#allocation4 + $0x54] sm:$0xf]
        %v481 = vld [vmem:[#allocation4 + $0x58] sm:$0xf]
        %v482 = vld [vmem:[#allocation4 + $0x5c] sm:$0xf]
        %v483 = vld [vmem:[#allocation4 + $0x60] sm:$0xf]
        %v484 = vld [vmem:[#allocation4 + $0x64] sm:$0xf]
        %v485 = vld [vmem:[#allocation4 + $0x68] sm:$0xf]
        %v486 = vld [vmem:[#allocation4 + $0x6c] sm:$0xf]
        %v487 = vld [vmem:[#allocation4 + $0x70] sm:$0xf]
        %v488 = vld [vmem:[#allocation4 + $0x74] sm:$0xf]
        %v489 = vld [vmem:[#allocation4 + $0x78] sm:$0xf]
        %v490 = vld [vmem:[#allocation4 + $0x7c] sm:$0xf]
        %v491 = vld [vmem:[#allocation4 + $0x80] sm:$0xf]
        %v492 = vld [vmem:[#allocation4 + $0x84] sm:$0xf]
        %v493 = vld [vmem:[#allocation4 + $0x88] sm:$0xf]
        %v494 = vld [vmem:[#allocation4 + $0x8c] sm:$0xf]
        %v495 = vld [vmem:[#allocation6] sm:$0x1]
        %v497 = vperm.slane %v495, 0
        %v501 = vunpack.c.l.b16 %v457
        %v502 = vunpack.c.h.b16 %v457
        %v503 = vunpack.c.l.b16 %v458
        %v504 = vpack.c.b16 %v501, %v501
        %v505 = vpack.c.b16 %v502, %v502
        %v506 = vpack.c.b16 %v503, %v503
        %v545 = vunpack.c.l.b16 %v459
        %v546 = vunpack.c.l.b16 %v460
        %v547 = vunpack.c.l.b16 %v461
        %v548 = vunpack.c.l.b16 %v462
        %v549 = vunpack.c.l.b16 %v463
        %v550 = vunpack.c.l.b16 %v464
        %v551 = vunpack.c.l.b16 %v465
        %v552 = vunpack.c.l.b16 %v466
        %v553 = vunpack.c.l.b16 %v467
        %v554 = vunpack.c.l.b16 %v468
        %v555 = vunpack.c.l.b16 %v469
        %v556 = vunpack.c.l.b16 %v470
        %v557 = vunpack.c.l.b16 %v471
        %v558 = vunpack.c.l.b16 %v472
        %v559 = vunpack.c.l.b16 %v473
        %v560 = vunpack.c.l.b16 %v474
        %v561 = vunpack.c.l.b16 %v475
        %v562 = vunpack.c.l.b16 %v476
        %v563 = vunpack.c.l.b16 %v477
        %v564 = vunpack.c.l.b16 %v478
        %v565 = vunpack.c.l.b16 %v479
        %v566 = vunpack.c.l.b16 %v480
        %v567 = vunpack.c.l.b16 %v481
        %v568 = vunpack.c.l.b16 %v482
        %v569 = vunpack.c.l.b16 %v483
        %v570 = vunpack.c.l.b16 %v484
        %v571 = vunpack.c.l.b16 %v485
        %v572 = vunpack.c.l.b16 %v486
        %v573 = vunpack.c.l.b16 %v487
        %v574 = vunpack.c.l.b16 %v488
        %v575 = vunpack.c.l.b16 %v489
        %v576 = vunpack.c.l.b16 %v490
        %v577 = vunpack.c.l.b16 %v491
        %v578 = vunpack.c.l.b16 %v492
        %v579 = vunpack.c.l.b16 %v493
        %v580 = vunpack.c.l.b16 %v494
        %v581 = vpack.c.b16 %v546, %v545
        %v582 = vpack.c.b16 %v548, %v547
        %v583 = vpack.c.b16 %v550, %v549
        %v584 = vpack.c.b16 %v552, %v551
        %v585 = vpack.c.b16 %v554, %v553
        %v586 = vpack.c.b16 %v556, %v555
        %v587 = vpack.c.b16 %v558, %v557
        %v588 = vpack.c.b16 %v560, %v559
        %v589 = vpack.c.b16 %v562, %v561
        %v590 = vpack.c.b16 %v564, %v563
        %v591 = vpack.c.b16 %v566, %v565
        %v592 = vpack.c.b16 %v568, %v567
        %v593 = vpack.c.b16 %v570, %v569
        %v594 = vpack.c.b16 %v572, %v571
        %v595 = vpack.c.b16 %v574, %v573
        %v596 = vpack.c.b16 %v576, %v575
        %v597 = vpack.c.b16 %v578, %v577
        %v598 = vpack.c.b16 %v580, %v579
        %vm617 = vcmask 261120
        %v619 = vsel %vm617, %v506, 0
        %621 = vmatpush.bf16.msra.mxu0 %v588
        %622 = vmatpush.bf16.msra.mxu0 %v587
        %623 = vmatpush.bf16.msra.mxu0 %v586
        %624 = vmatpush.bf16.msra.mxu0 %v585
        %625 = vmatpush.bf16.msra.mxu0 %v584
        %626 = vmatpush.bf16.msra.mxu0 %v583
        %627 = vmatpush.bf16.msra.mxu0 %v582
        %628 = vmatpush.bf16.msra.mxu0 %v581
        %629 = vmatmul.bf16.gmra.mxu0 %v504
        %v630 = vpop.f32.mrf.mxu0
        %v631 = vadd.f32 %v497, %v630
        %v632 = vpop.f32.mrf.mxu0
        %633 = vdwg.mxu0
        %634 = vmatpush.bf16.msra.mxu0 %v596
        %635 = vmatpush.bf16.msra.mxu0 %v595
        %636 = vmatpush.bf16.msra.mxu0 %v594
        %637 = vmatpush.bf16.msra.mxu0 %v593
        %638 = vmatpush.bf16.msra.mxu0 %v592
        %639 = vmatpush.bf16.msra.mxu0 %v591
        %640 = vmatpush.bf16.msra.mxu0 %v590
        %641 = vmatpush.bf16.msra.mxu0 %v589
        %642 = vmatmul.bf16.gmra.mxu0 %v505
        %v643 = vpop.f32.mrf.mxu0
        %v644 = vadd.f32 %v631, %v643
        %v645 = vpop.f32.mrf.mxu0
        %646 = vdwg.mxu0
        %647 = vmatpush.bf16.msra.mxu0 0
        %648 = vmatpush.bf16.msra.mxu0 0
        %649 = vmatpush.bf16.msra.mxu0 0
        %650 = vmatpush.bf16.msra.mxu0 0
        %651 = vmatpush.bf16.msra.mxu0 0
        %652 = vmatpush.bf16.msra.mxu0 0
        %653 = vmatpush.bf16.msra.mxu0 %v598
        %654 = vmatpush.bf16.msra.mxu0 %v597
        %655 = vmatmul.bf16.gmra.mxu0 %v619
        %v656 = vpop.f32.mrf.mxu0
        %v657 = vadd.f32 %v644, %v656
        %v658 = vpop.f32.mrf.mxu0
        %659 = vdwg.mxu0
        %v660 = vmax.f32 %v657, 0.0
        %v661 = vpack.c.bf16 %v660, %v660
        %vm662 = vcmask 1043456
        %vm663 = vcmask 261124
        %vm664 = vmor %vm663, %vm662
        %665 = vst.msk [vmem:[#allocation2] sm:$0xff] %vm664, 0
        %vm666 = vcmask 1040384
        %vm667 = vcmask 258052
        %vm668 = vmor %vm667, %vm666
        %669 = vst.msk [vmem:[#allocation2 + $0x8] sm:$0x11] %vm668, 0
        %v671 = vshrl.u32 %v661, 16
        %v673 = vrot.slane %v671, 7
        %v674 = vshll.u32 %v661, 16
        %v676 = vor.u32 %v673, %v674
        %v677 = vrot.slane %v673, 4
        %678 = vrot.lane.b32.xlu0 %v676, 16
        %v679 = vpop.permute.xlu0 %678
        %680 = vrot.lane.b32.xlu0 %v677, 16
        %v681 = vpop.permute.xlu0 %680
        %v682 = vrot.slane %v679, 4
        %v683 = vrot.slane %v681, 4
        %vm684 = vcmask 130048
        %v685 = vsel %vm684, %v682, %v679
        %v686 = vsel %vm684, %v683, %v681
        %vm689 = vcmask 1043584
        %vm690 = vsmask.f32 7938
        %vm691 = vmand %vm689, %vm690
        %vm692 = vcmask 130052
        %vm693 = vsmask.f32 7954
        %vm694 = vmand %vm692, %vm693
        %vm695 = vmor %vm694, %vm691
        %v696 = vld [vmem:[#allocation2] sm:$0xff]
        %v697 = vsel %vm695, %v685, %v696
        %698 = vst [vmem:[#allocation2] sm:$0xff] %v697
        %vm699 = vcmask 1040512
        %vm700 = vsmask.f32 256
        %vm701 = vmand %vm699, %vm700
        %vm702 = vcmask 126980
        %vm703 = vsmask.f32 4352
        %vm704 = vmand %vm702, %vm703
        %vm705 = vmor %vm704, %vm701
        %v706 = vld [vmem:[#allocation2 + $0x8] sm:$0x11]
        %v707 = vsel %vm705, %v686, %v706
        %708 = vst [vmem:[#allocation2 + $0x8] sm:$0x11] %v707
        %v709 = vld [vmem:[#allocation2] sm:$0xf]
        %v710 = vld [vmem:[#allocation8] sm:$0xff]
        %v711 = vld [vmem:[#allocation8 + $0x8] sm:$0xff]
        %v712 = vld [vmem:[#allocation8 + $0x10] sm:$0xff]
        %v713 = vld [vmem:[#allocation8 + $0x18] sm:$0xff]
        %v714 = vld [vmem:[#allocation8 + $0x20] sm:$0xff]
        %v715 = vld [vmem:[#allocation8 + $0x28] sm:$0xff]
        %v716 = vld [vmem:[#allocation8 + $0x30] sm:$0xff]
        %v717 = vld [vmem:[#allocation8 + $0x38] sm:$0xff]
        %v718 = vld [vmem:[#allocation8 + $0x40] sm:$0xff]
        %v719 = vld [vmem:[#allocation8 + $0x48] sm:$0xff]
        %v720 = vld [vmem:[#allocation8 + $0x50] sm:$0xff]
        %v721 = vld [vmem:[#allocation8 + $0x58] sm:$0xff]
        %v722 = vld [vmem:[#allocation8 + $0x60] sm:$0xff]
        %v723 = vld [vmem:[#allocation8 + $0x68] sm:$0xff]
        %v724 = vld [vmem:[#allocation8 + $0x70] sm:$0xff]
        %v725 = vld [vmem:[#allocation8 + $0x78] sm:$0xff]
        %v726 = vld [vmem:[#allocation2] sm:$0xff]
        %s727 = scalar_lea.vmem [#allocation8], 128
        %v728 = vld [vmem:[%s727] sm:$0xff]
        %v729 = vld [vmem:[%s727 + $0x8] sm:$0xff]
        %v730 = vld [vmem:[%s727 + $0x10] sm:$0xff]
        %v731 = vld [vmem:[%s727 + $0x18] sm:$0xff]
        %v732 = vld [vmem:[%s727 + $0x20] sm:$0xff]
        %v733 = vld [vmem:[%s727 + $0x28] sm:$0xff]
        %v734 = vld [vmem:[%s727 + $0x30] sm:$0xff]
        %v735 = vld [vmem:[%s727 + $0x38] sm:$0xff]
        %v736 = vld [vmem:[%s727 + $0x40] sm:$0xff]
        %v737 = vld [vmem:[%s727 + $0x48] sm:$0xff]
        %v738 = vld [vmem:[%s727 + $0x50] sm:$0xff]
        %v739 = vld [vmem:[%s727 + $0x58] sm:$0xff]
        %v740 = vld [vmem:[%s727 + $0x60] sm:$0xff]
        %v741 = vld [vmem:[%s727 + $0x68] sm:$0xff]
        %v742 = vld [vmem:[%s727 + $0x70] sm:$0xff]
        %v743 = vld [vmem:[%s727 + $0x78] sm:$0xff]
        %v745 = vunpack.c.l.b16 %v726
        %v746 = vunpack.c.h.b16 %v726
        %v747 = vpack.c.b16 %v745, %v745
        %v748 = vpack.c.b16 %v746, %v746
        %749 = vrot.lane.b32.xlu0 %v747, 112
        %v750 = vpop.permute.xlu0 %749
        %751 = vrot.lane.b32.xlu0 %v748, 112
        %v752 = vpop.permute.xlu0 %751
        %vm753 = vcmask 916480
        %v754 = vsel %vm753, %v750, %v752
        %v772 = vunpack.c.l.b16 %v728
        %v773 = vunpack.c.h.b16 %v728
        %v774 = vunpack.c.l.b16 %v729
        %v775 = vunpack.c.h.b16 %v729
        %v776 = vunpack.c.l.b16 %v730
        %v777 = vunpack.c.h.b16 %v730
        %v778 = vunpack.c.l.b16 %v731
        %v779 = vunpack.c.h.b16 %v731
        %v780 = vunpack.c.l.b16 %v732
        %v781 = vunpack.c.h.b16 %v732
        %v782 = vunpack.c.l.b16 %v733
        %v783 = vunpack.c.h.b16 %v733
        %v784 = vunpack.c.l.b16 %v734
        %v785 = vunpack.c.h.b16 %v734
        %v786 = vunpack.c.l.b16 %v735
        %v787 = vunpack.c.h.b16 %v735
        %v788 = vunpack.c.l.b16 %v736
        %v789 = vunpack.c.h.b16 %v736
        %v790 = vunpack.c.l.b16 %v737
        %v791 = vunpack.c.h.b16 %v737
        %v792 = vunpack.c.l.b16 %v738
        %v793 = vunpack.c.h.b16 %v738
        %v794 = vunpack.c.l.b16 %v739
        %v795 = vunpack.c.h.b16 %v739
        %v796 = vunpack.c.l.b16 %v740
        %v797 = vunpack.c.h.b16 %v740
        %v798 = vunpack.c.l.b16 %v741
        %v799 = vunpack.c.h.b16 %v741
        %v800 = vunpack.c.l.b16 %v742
        %v801 = vunpack.c.h.b16 %v742
        %v802 = vunpack.c.l.b16 %v743
        %v803 = vunpack.c.h.b16 %v743
        %v804 = vpack.c.b16 %v774, %v772
        %v805 = vpack.c.b16 %v775, %v773
        %v806 = vpack.c.b16 %v778, %v776
        %v807 = vpack.c.b16 %v779, %v777
        %v808 = vpack.c.b16 %v782, %v780
        %v809 = vpack.c.b16 %v783, %v781
        %v810 = vpack.c.b16 %v786, %v784
        %v811 = vpack.c.b16 %v787, %v785
        %v812 = vpack.c.b16 %v790, %v788
        %v813 = vpack.c.b16 %v791, %v789
        %v814 = vpack.c.b16 %v794, %v792
        %v815 = vpack.c.b16 %v795, %v793
        %v816 = vpack.c.b16 %v798, %v796
        %v817 = vpack.c.b16 %v799, %v797
        %v818 = vpack.c.b16 %v802, %v800
        %v819 = vpack.c.b16 %v803, %v801
        %836 = vmatpush.bf16.msra.mxu0 %v818
        %837 = vmatpush.bf16.msra.mxu0 %v816
        %838 = vmatpush.bf16.msra.mxu0 %v814
        %839 = vmatpush.bf16.msra.mxu0 %v812
        %840 = vmatpush.bf16.msra.mxu0 %v810
        %841 = vmatpush.bf16.msra.mxu0 %v808
        %842 = vmatpush.bf16.msra.mxu0 %v806
        %843 = vmatpush.bf16.msra.mxu0 %v804
        %844 = vmatmul.bf16.gmra.mxu0 %v754
        %v845 = vpop.f32.mrf.mxu0
        %v846 = vadd.f32 0.0, %v845
        %v847 = vpop.f32.mrf.mxu0
        %848 = vdwg.mxu0
        %849 = vmatpush.bf16.msra.mxu0 %v819
        %850 = vmatpush.bf16.msra.mxu0 %v817
        %851 = vmatpush.bf16.msra.mxu0 %v815
        %852 = vmatpush.bf16.msra.mxu0 %v813
        %853 = vmatpush.bf16.msra.mxu0 %v811
        %854 = vmatpush.bf16.msra.mxu0 %v809
        %855 = vmatpush.bf16.msra.mxu0 %v807
        %856 = vmatpush.bf16.msra.mxu0 %v805
        %857 = vmatmul.bf16.gmra.mxu0 %v754
        %v858 = vpop.f32.mrf.mxu0
        %v859 = vadd.f32 0.0, %v858
        %v860 = vpop.f32.mrf.mxu0
        %861 = vdwg.mxu0
        %v878 = vunpack.c.l.b16 %v710
        %v879 = vunpack.c.h.b16 %v710
        %v880 = vunpack.c.l.b16 %v711
        %v881 = vunpack.c.h.b16 %v711
        %v882 = vunpack.c.l.b16 %v712
        %v883 = vunpack.c.h.b16 %v712
        %v884 = vunpack.c.l.b16 %v713
        %v885 = vunpack.c.h.b16 %v713
        %v886 = vunpack.c.l.b16 %v714
        %v887 = vunpack.c.h.b16 %v714
        %v888 = vunpack.c.l.b16 %v715
        %v889 = vunpack.c.h.b16 %v715
        %v890 = vunpack.c.l.b16 %v716
        %v891 = vunpack.c.h.b16 %v716
        %v892 = vunpack.c.l.b16 %v717
        %v893 = vunpack.c.h.b16 %v717
        %v894 = vunpack.c.l.b16 %v718
        %v895 = vunpack.c.h.b16 %v718
        %v896 = vunpack.c.l.b16 %v719
        %v897 = vunpack.c.h.b16 %v719
        %v898 = vunpack.c.l.b16 %v720
        %v899 = vunpack.c.h.b16 %v720
        %v900 = vunpack.c.l.b16 %v721
        %v901 = vunpack.c.h.b16 %v721
        %v902 = vunpack.c.l.b16 %v722
        %v903 = vunpack.c.h.b16 %v722
        %v904 = vunpack.c.l.b16 %v723
        %v905 = vunpack.c.h.b16 %v723
        %v906 = vunpack.c.l.b16 %v724
        %v907 = vunpack.c.h.b16 %v724
        %v908 = vunpack.c.l.b16 %v725
        %v909 = vunpack.c.h.b16 %v725
        %v910 = vpack.c.b16 %v880, %v878
        %v911 = vpack.c.b16 %v881, %v879
        %v912 = vpack.c.b16 %v884, %v882
        %v913 = vpack.c.b16 %v885, %v883
        %v914 = vpack.c.b16 %v888, %v886
        %v915 = vpack.c.b16 %v889, %v887
        %v916 = vpack.c.b16 %v892, %v890
        %v917 = vpack.c.b16 %v893, %v891
        %v918 = vpack.c.b16 %v896, %v894
        %v919 = vpack.c.b16 %v897, %v895
        %v920 = vpack.c.b16 %v900, %v898
        %v921 = vpack.c.b16 %v901, %v899
        %v922 = vpack.c.b16 %v904, %v902
        %v923 = vpack.c.b16 %v905, %v903
        %v924 = vpack.c.b16 %v908, %v906
        %v925 = vpack.c.b16 %v909, %v907
        %942 = vmatpush.bf16.msra.mxu0 %v924
        %943 = vmatpush.bf16.msra.mxu0 %v922
        %944 = vmatpush.bf16.msra.mxu0 %v920
        %945 = vmatpush.bf16.msra.mxu0 %v918
        %946 = vmatpush.bf16.msra.mxu0 %v916
        %947 = vmatpush.bf16.msra.mxu0 %v914
        %948 = vmatpush.bf16.msra.mxu0 %v912
        %949 = vmatpush.bf16.msra.mxu0 %v910
        %950 = vmatmul.bf16.gmra.mxu0 %v709
        %v951 = vpop.f32.mrf.mxu0
        %v952 = vadd.f32 %v846, %v951
        %v953 = vpop.f32.mrf.mxu0
        %954 = vdwg.mxu0
        %955 = vmatpush.bf16.msra.mxu0 %v925
        %956 = vmatpush.bf16.msra.mxu0 %v923
        %957 = vmatpush.bf16.msra.mxu0 %v921
        %958 = vmatpush.bf16.msra.mxu0 %v919
        %959 = vmatpush.bf16.msra.mxu0 %v917
        %960 = vmatpush.bf16.msra.mxu0 %v915
        %961 = vmatpush.bf16.msra.mxu0 %v913
        %962 = vmatpush.bf16.msra.mxu0 %v911
        %963 = vmatmul.bf16.gmra.mxu0 %v709
        %v964 = vpop.f32.mrf.mxu0
        %v965 = vadd.f32 %v859, %v964
        %v966 = vpop.f32.mrf.mxu0
        %967 = vdwg.mxu0
        %s968 = scalar_lea.vmem [#allocation8], 256
        %v969 = vld [vmem:[%s968] sm:$0xff]
        %v970 = vld [vmem:[%s968 + $0x8] sm:$0xff]
        %v971 = vld [vmem:[%s968 + $0x10] sm:$0xff]
        %v972 = vld [vmem:[%s968 + $0x18] sm:$0xff]
        %v973 = vld [vmem:[%s968 + $0x20] sm:$0xff]
        %v974 = vld [vmem:[%s968 + $0x28] sm:$0xff]
        %v975 = vld [vmem:[%s968 + $0x30] sm:$0xff]
        %v976 = vld [vmem:[%s968 + $0x38] sm:$0xff]
        %v977 = vld [vmem:[%s968 + $0x40] sm:$0xff]
        %v978 = vld [vmem:[%s968 + $0x48] sm:$0xff]
        %v979 = vld [vmem:[%s968 + $0x50] sm:$0xff]
        %v980 = vld [vmem:[%s968 + $0x58] sm:$0xff]
        %v981 = vld [vmem:[%s968 + $0x60] sm:$0xff]
        %v982 = vld [vmem:[%s968 + $0x68] sm:$0xff]
        %v983 = vld [vmem:[%s968 + $0x70] sm:$0xff]
        %v984 = vld [vmem:[%s968 + $0x78] sm:$0xff]
        %985 = vrot.lane.b32.xlu0 %v747, 96
        %v986 = vpop.permute.xlu0 %985
        %987 = vrot.lane.b32.xlu0 %v748, 96
        %v988 = vpop.permute.xlu0 %987
        %vm989 = vcmask 785408
        %v990 = vsel %vm989, %v986, %v988
        %v1008 = vunpack.c.l.b16 %v969
        %v1009 = vunpack.c.h.b16 %v969
        %v1010 = vunpack.c.l.b16 %v970
        %v1011 = vunpack.c.h.b16 %v970
        %v1012 = vunpack.c.l.b16 %v971
        %v1013 = vunpack.c.h.b16 %v971
        %v1014 = vunpack.c.l.b16 %v972
        %v1015 = vunpack.c.h.b16 %v972
        %v1016 = vunpack.c.l.b16 %v973
        %v1017 = vunpack.c.h.b16 %v973
        %v1018 = vunpack.c.l.b16 %v974
        %v1019 = vunpack.c.h.b16 %v974
        %v1020 = vunpack.c.l.b16 %v975
        %v1021 = vunpack.c.h.b16 %v975
        %v1022 = vunpack.c.l.b16 %v976
        %v1023 = vunpack.c.h.b16 %v976
        %v1024 = vunpack.c.l.b16 %v977
        %v1025 = vunpack.c.h.b16 %v977
        %v1026 = vunpack.c.l.b16 %v978
        %v1027 = vunpack.c.h.b16 %v978
        %v1028 = vunpack.c.l.b16 %v979
        %v1029 = vunpack.c.h.b16 %v979
        %v1030 = vunpack.c.l.b16 %v980
        %v1031 = vunpack.c.h.b16 %v980
        %v1032 = vunpack.c.l.b16 %v981
        %v1033 = vunpack.c.h.b16 %v981
        %v1034 = vunpack.c.l.b16 %v982
        %v1035 = vunpack.c.h.b16 %v982
        %v1036 = vunpack.c.l.b16 %v983
        %v1037 = vunpack.c.h.b16 %v983
        %v1038 = vunpack.c.l.b16 %v984
        %v1039 = vunpack.c.h.b16 %v984
        %v1040 = vpack.c.b16 %v1010, %v1008
        %v1041 = vpack.c.b16 %v1011, %v1009
        %v1042 = vpack.c.b16 %v1014, %v1012
        %v1043 = vpack.c.b16 %v1015, %v1013
        %v1044 = vpack.c.b16 %v1018, %v1016
        %v1045 = vpack.c.b16 %v1019, %v1017
        %v1046 = vpack.c.b16 %v1022, %v1020
        %v1047 = vpack.c.b16 %v1023, %v1021
        %v1048 = vpack.c.b16 %v1026, %v1024
        %v1049 = vpack.c.b16 %v1027, %v1025
        %v1050 = vpack.c.b16 %v1030, %v1028
        %v1051 = vpack.c.b16 %v1031, %v1029
        %v1052 = vpack.c.b16 %v1034, %v1032
        %v1053 = vpack.c.b16 %v1035, %v1033
        %v1054 = vpack.c.b16 %v1038, %v1036
        %v1055 = vpack.c.b16 %v1039, %v1037
        %1072 = vmatpush.bf16.msra.mxu0 %v1054
        %1073 = vmatpush.bf16.msra.mxu0 %v1052
        %1074 = vmatpush.bf16.msra.mxu0 %v1050
        %1075 = vmatpush.bf16.msra.mxu0 %v1048
        %1076 = vmatpush.bf16.msra.mxu0 %v1046
        %1077 = vmatpush.bf16.msra.mxu0 %v1044
        %1078 = vmatpush.bf16.msra.mxu0 %v1042
        %1079 = vmatpush.bf16.msra.mxu0 %v1040
        %1080 = vmatmul.bf16.gmra.mxu0 %v990
        %v1081 = vpop.f32.mrf.mxu0
        %v1082 = vadd.f32 0.0, %v1081
        %v1083 = vpop.f32.mrf.mxu0
        %1084 = vdwg.mxu0
        %1085 = vmatpush.bf16.msra.mxu0 %v1055
        %1086 = vmatpush.bf16.msra.mxu0 %v1053
        %1087 = vmatpush.bf16.msra.mxu0 %v1051
        %1088 = vmatpush.bf16.msra.mxu0 %v1049
        %1089 = vmatpush.bf16.msra.mxu0 %v1047
        %1090 = vmatpush.bf16.msra.mxu0 %v1045
        %1091 = vmatpush.bf16.msra.mxu0 %v1043
        %1092 = vmatpush.bf16.msra.mxu0 %v1041
        %1093 = vmatmul.bf16.gmra.mxu0 %v990
        %v1094 = vpop.f32.mrf.mxu0
        %v1095 = vadd.f32 0.0, %v1094
        %v1096 = vpop.f32.mrf.mxu0
        %1097 = vdwg.mxu0
        %v1098 = vadd.f32 %v952, %v1082
        %v1099 = vadd.f32 %v965, %v1095
        %v1100 = vld [vmem:[#allocation2] sm:$0xf]
        %v1101 = vld [vmem:[#allocation2 + $0x8] sm:$0x1]
        %s1102 = scalar_lea.vmem [#allocation8], 384
        %v1103 = vld [vmem:[%s1102] sm:$0xff]
        %v1104 = vld [vmem:[%s1102 + $0x8] sm:$0xff]
        %v1105 = vld [vmem:[%s1102 + $0x10] sm:$0xff]
        %v1106 = vld [vmem:[%s1102 + $0x18] sm:$0xff]
        %v1107 = vld [vmem:[%s1102 + $0x20] sm:$0xff]
        %v1108 = vld [vmem:[%s1102 + $0x28] sm:$0xff]
        %v1109 = vld [vmem:[%s1102 + $0x30] sm:$0xff]
        %v1110 = vld [vmem:[%s1102 + $0x38] sm:$0xff]
        %v1111 = vld [vmem:[%s1102 + $0x40] sm:$0xff]
        %v1112 = vld [vmem:[%s1102 + $0x48] sm:$0xff]
        %v1113 = vld [vmem:[%s1102 + $0x50] sm:$0xff]
        %v1114 = vld [vmem:[%s1102 + $0x58] sm:$0xff]
        %v1115 = vld [vmem:[%s1102 + $0x60] sm:$0xff]
        %v1116 = vld [vmem:[%s1102 + $0x68] sm:$0xff]
        %v1117 = vld [vmem:[%s1102 + $0x70] sm:$0xff]
        %v1118 = vld [vmem:[%s1102 + $0x78] sm:$0xff]
        %v1121 = vunpack.c.l.b16 %v1100
        %v1122 = vunpack.c.l.b16 %v1101
        %v1123 = vpack.c.b16 %v1122, %v1121
        %v1125 = vshrl.u32 %v1123, 16
        %v1127 = vshll.u32 %v1123, 16
        %v1129 = vrot.slane %v1127, 1
        %v1130 = vor.u32 %v1125, %v1129
        %v1148 = vunpack.c.l.b16 %v1103
        %v1149 = vunpack.c.h.b16 %v1103
        %v1150 = vunpack.c.l.b16 %v1104
        %v1151 = vunpack.c.h.b16 %v1104
        %v1152 = vunpack.c.l.b16 %v1105
        %v1153 = vunpack.c.h.b16 %v1105
        %v1154 = vunpack.c.l.b16 %v1106
        %v1155 = vunpack.c.h.b16 %v1106
        %v1156 = vunpack.c.l.b16 %v1107
        %v1157 = vunpack.c.h.b16 %v1107
        %v1158 = vunpack.c.l.b16 %v1108
        %v1159 = vunpack.c.h.b16 %v1108
        %v1160 = vunpack.c.l.b16 %v1109
        %v1161 = vunpack.c.h.b16 %v1109
        %v1162 = vunpack.c.l.b16 %v1110
        %v1163 = vunpack.c.h.b16 %v1110
        %v1164 = vunpack.c.l.b16 %v1111
        %v1165 = vunpack.c.h.b16 %v1111
        %v1166 = vunpack.c.l.b16 %v1112
        %v1167 = vunpack.c.h.b16 %v1112
        %v1168 = vunpack.c.l.b16 %v1113
        %v1169 = vunpack.c.h.b16 %v1113
        %v1170 = vunpack.c.l.b16 %v1114
        %v1171 = vunpack.c.h.b16 %v1114
        %v1172 = vunpack.c.l.b16 %v1115
        %v1173 = vunpack.c.h.b16 %v1115
        %v1174 = vunpack.c.l.b16 %v1116
        %v1175 = vunpack.c.h.b16 %v1116
        %v1176 = vunpack.c.l.b16 %v1117
        %v1177 = vunpack.c.h.b16 %v1117
        %v1178 = vunpack.c.l.b16 %v1118
        %v1179 = vunpack.c.h.b16 %v1118
        %v1180 = vpack.c.b16 %v1150, %v1148
        %v1181 = vpack.c.b16 %v1151, %v1149
        %v1182 = vpack.c.b16 %v1154, %v1152
        %v1183 = vpack.c.b16 %v1155, %v1153
        %v1184 = vpack.c.b16 %v1158, %v1156
        %v1185 = vpack.c.b16 %v1159, %v1157
        %v1186 = vpack.c.b16 %v1162, %v1160
        %v1187 = vpack.c.b16 %v1163, %v1161
        %v1188 = vpack.c.b16 %v1166, %v1164
        %v1189 = vpack.c.b16 %v1167, %v1165
        %v1190 = vpack.c.b16 %v1170, %v1168
        %v1191 = vpack.c.b16 %v1171, %v1169
        %v1192 = vpack.c.b16 %v1174, %v1172
        %v1193 = vpack.c.b16 %v1175, %v1173
        %v1194 = vpack.c.b16 %v1178, %v1176
        %v1195 = vpack.c.b16 %v1179, %v1177
        %1212 = vmatpush.bf16.msra.mxu0 %v1194
        %1213 = vmatpush.bf16.msra.mxu0 %v1192
        %1214 = vmatpush.bf16.msra.mxu0 %v1190
        %1215 = vmatpush.bf16.msra.mxu0 %v1188
        %1216 = vmatpush.bf16.msra.mxu0 %v1186
        %1217 = vmatpush.bf16.msra.mxu0 %v1184
        %1218 = vmatpush.bf16.msra.mxu0 %v1182
        %1219 = vmatpush.bf16.msra.mxu0 %v1180
        %1220 = vmatmul.bf16.gmra.mxu0 %v1130
        %v1221 = vpop.f32.mrf.mxu0
        %v1222 = vadd.f32 0.0, %v1221
        %v1223 = vpop.f32.mrf.mxu0
        %1224 = vdwg.mxu0
        %1225 = vmatpush.bf16.msra.mxu0 %v1195
        %1226 = vmatpush.bf16.msra.mxu0 %v1193
        %1227 = vmatpush.bf16.msra.mxu0 %v1191
        %1228 = vmatpush.bf16.msra.mxu0 %v1189
        %1229 = vmatpush.bf16.msra.mxu0 %v1187
        %1230 = vmatpush.bf16.msra.mxu0 %v1185
        %1231 = vmatpush.bf16.msra.mxu0 %v1183
        %1232 = vmatpush.bf16.msra.mxu0 %v1181
        %1233 = vmatmul.bf16.gmra.mxu0 %v1130
        %v1234 = vpop.f32.mrf.mxu0
        %v1235 = vadd.f32 0.0, %v1234
        %v1236 = vpop.f32.mrf.mxu0
        %1237 = vdwg.mxu0
        %v1238 = vadd.f32 %v1098, %v1222
        %v1239 = vadd.f32 %v1099, %v1235
        %v1240 = vld [vmem:[#allocation2] sm:$0xff]
        %v1241 = vld [vmem:[#allocation2 + $0x8] sm:$0x11]
        %s1242 = scalar_lea.vmem [#allocation8], 512
        %v1243 = vld [vmem:[%s1242] sm:$0xff]
        %v1244 = vld [vmem:[%s1242 + $0x8] sm:$0xff]
        %v1245 = vld [vmem:[%s1242 + $0x10] sm:$0xff]
        %v1246 = vld [vmem:[%s1242 + $0x18] sm:$0xff]
        %v1247 = vld [vmem:[%s1242 + $0x20] sm:$0xff]
        %v1248 = vld [vmem:[%s1242 + $0x28] sm:$0xff]
        %v1249 = vld [vmem:[%s1242 + $0x30] sm:$0xff]
        %v1250 = vld [vmem:[%s1242 + $0x38] sm:$0xff]
        %v1251 = vld [vmem:[%s1242 + $0x40] sm:$0xff]
        %v1252 = vld [vmem:[%s1242 + $0x48] sm:$0xff]
        %v1253 = vld [vmem:[%s1242 + $0x50] sm:$0xff]
        %v1254 = vld [vmem:[%s1242 + $0x58] sm:$0xff]
        %v1255 = vld [vmem:[%s1242 + $0x60] sm:$0xff]
        %v1256 = vld [vmem:[%s1242 + $0x68] sm:$0xff]
        %v1257 = vld [vmem:[%s1242 + $0x70] sm:$0xff]
        %v1258 = vld [vmem:[%s1242 + $0x78] sm:$0xff]
        %v1261 = vunpack.c.l.b16 %v1240
        %v1262 = vunpack.c.h.b16 %v1240
        %v1263 = vunpack.c.l.b16 %v1241
        %v1264 = vunpack.c.h.b16 %v1241
        %v1265 = vpack.c.b16 %v1263, %v1261
        %v1266 = vpack.c.b16 %v1264, %v1262
        %v1268 = vshrl.u32 %v1265, 16
        %v1270 = vshll.u32 %v1265, 16
        %v1272 = vrot.slane %v1270, 1
        %v1273 = vor.u32 %v1268, %v1272
        %v1275 = vshrl.u32 %v1266, 16
        %v1277 = vshll.u32 %v1266, 16
        %v1279 = vrot.slane %v1277, 1
        %v1280 = vor.u32 %v1275, %v1279
        %1281 = vrot.lane.b32.xlu0 %v1273, 112
        %v1282 = vpop.permute.xlu0 %1281
        %1283 = vrot.lane.b32.xlu0 %v1280, 112
        %v1284 = vpop.permute.xlu0 %1283
        %v1285 = vsel %vm753, %v1282, %v1284
        %v1303 = vunpack.c.l.b16 %v1243
        %v1304 = vunpack.c.h.b16 %v1243
        %v1305 = vunpack.c.l.b16 %v1244
        %v1306 = vunpack.c.h.b16 %v1244
        %v1307 = vunpack.c.l.b16 %v1245
        %v1308 = vunpack.c.h.b16 %v1245
        %v1309 = vunpack.c.l.b16 %v1246
        %v1310 = vunpack.c.h.b16 %v1246
        %v1311 = vunpack.c.l.b16 %v1247
        %v1312 = vunpack.c.h.b16 %v1247
        %v1313 = vunpack.c.l.b16 %v1248
        %v1314 = vunpack.c.h.b16 %v1248
        %v1315 = vunpack.c.l.b16 %v1249
        %v1316 = vunpack.c.h.b16 %v1249
        %v1317 = vunpack.c.l.b16 %v1250
        %v1318 = vunpack.c.h.b16 %v1250
        %v1319 = vunpack.c.l.b16 %v1251
        %v1320 = vunpack.c.h.b16 %v1251
        %v1321 = vunpack.c.l.b16 %v1252
        %v1322 = vunpack.c.h.b16 %v1252
        %v1323 = vunpack.c.l.b16 %v1253
        %v1324 = vunpack.c.h.b16 %v1253
        %v1325 = vunpack.c.l.b16 %v1254
        %v1326 = vunpack.c.h.b16 %v1254
        %v1327 = vunpack.c.l.b16 %v1255
        %v1328 = vunpack.c.h.b16 %v1255
        %v1329 = vunpack.c.l.b16 %v1256
        %v1330 = vunpack.c.h.b16 %v1256
        %v1331 = vunpack.c.l.b16 %v1257
        %v1332 = vunpack.c.h.b16 %v1257
        %v1333 = vunpack.c.l.b16 %v1258
        %v1334 = vunpack.c.h.b16 %v1258
        %v1335 = vpack.c.b16 %v1305, %v1303
        %v1336 = vpack.c.b16 %v1306, %v1304
        %v1337 = vpack.c.b16 %v1309, %v1307
        %v1338 = vpack.c.b16 %v1310, %v1308
        %v1339 = vpack.c.b16 %v1313, %v1311
        %v1340 = vpack.c.b16 %v1314, %v1312
        %v1341 = vpack.c.b16 %v1317, %v1315
        %v1342 = vpack.c.b16 %v1318, %v1316
        %v1343 = vpack.c.b16 %v1321, %v1319
        %v1344 = vpack.c.b16 %v1322, %v1320
        %v1345 = vpack.c.b16 %v1325, %v1323
        %v1346 = vpack.c.b16 %v1326, %v1324
        %v1347 = vpack.c.b16 %v1329, %v1327
        %v1348 = vpack.c.b16 %v1330, %v1328
        %v1349 = vpack.c.b16 %v1333, %v1331
        %v1350 = vpack.c.b16 %v1334, %v1332
        %1367 = vmatpush.bf16.msra.mxu0 %v1349
        %1368 = vmatpush.bf16.msra.mxu0 %v1347
        %1369 = vmatpush.bf16.msra.mxu0 %v1345
        %1370 = vmatpush.bf16.msra.mxu0 %v1343
        %1371 = vmatpush.bf16.msra.mxu0 %v1341
        %1372 = vmatpush.bf16.msra.mxu0 %v1339
        %1373 = vmatpush.bf16.msra.mxu0 %v1337
        %1374 = vmatpush.bf16.msra.mxu0 %v1335
        %1375 = vmatmul.bf16.gmra.mxu0 %v1285
        %v1376 = vpop.f32.mrf.mxu0
        %v1377 = vadd.f32 0.0, %v1376
        %v1378 = vpop.f32.mrf.mxu0
        %1379 = vdwg.mxu0
        %1380 = vmatpush.bf16.msra.mxu0 %v1350
        %1381 = vmatpush.bf16.msra.mxu0 %v1348
        %1382 = vmatpush.bf16.msra.mxu0 %v1346
        %1383 = vmatpush.bf16.msra.mxu0 %v1344
        %1384 = vmatpush.bf16.msra.mxu0 %v1342
        %1385 = vmatpush.bf16.msra.mxu0 %v1340
        %1386 = vmatpush.bf16.msra.mxu0 %v1338
        %1387 = vmatpush.bf16.msra.mxu0 %v1336
        %1388 = vmatmul.bf16.gmra.mxu0 %v1285
        %v1389 = vpop.f32.mrf.mxu0
        %v1390 = vadd.f32 0.0, %v1389
        %v1391 = vpop.f32.mrf.mxu0
        %1392 = vdwg.mxu0
        %v1393 = vadd.f32 %v1238, %v1377
        %v1394 = vadd.f32 %v1239, %v1390
        %s1395 = scalar_lea.vmem [#allocation8], 640
        %v1396 = vld [vmem:[%s1395] sm:$0xff]
        %v1397 = vld [vmem:[%s1395 + $0x8] sm:$0xff]
        %v1398 = vld [vmem:[%s1395 + $0x10] sm:$0xff]
        %v1399 = vld [vmem:[%s1395 + $0x18] sm:$0xff]
        %v1400 = vld [vmem:[%s1395 + $0x20] sm:$0xff]
        %v1401 = vld [vmem:[%s1395 + $0x28] sm:$0xff]
        %v1402 = vld [vmem:[%s1395 + $0x30] sm:$0xff]
        %v1403 = vld [vmem:[%s1395 + $0x38] sm:$0xff]
        %v1404 = vld [vmem:[%s1395 + $0x40] sm:$0xff]
        %v1405 = vld [vmem:[%s1395 + $0x48] sm:$0xff]
        %v1406 = vld [vmem:[%s1395 + $0x50] sm:$0xff]
        %v1407 = vld [vmem:[%s1395 + $0x58] sm:$0xff]
        %v1408 = vld [vmem:[%s1395 + $0x60] sm:$0xff]
        %v1409 = vld [vmem:[%s1395 + $0x68] sm:$0xff]
        %v1410 = vld [vmem:[%s1395 + $0x70] sm:$0xff]
        %v1411 = vld [vmem:[%s1395 + $0x78] sm:$0xff]
        %1412 = vrot.lane.b32.xlu0 %v1273, 96
        %v1413 = vpop.permute.xlu0 %1412
        %1414 = vrot.lane.b32.xlu0 %v1280, 96
        %v1415 = vpop.permute.xlu0 %1414
        %v1416 = vsel %vm989, %v1413, %v1415
        %v1434 = vunpack.c.l.b16 %v1396
        %v1435 = vunpack.c.h.b16 %v1396
        %v1436 = vunpack.c.l.b16 %v1397
        %v1437 = vunpack.c.h.b16 %v1397
        %v1438 = vunpack.c.l.b16 %v1398
        %v1439 = vunpack.c.h.b16 %v1398
        %v1440 = vunpack.c.l.b16 %v1399
        %v1441 = vunpack.c.h.b16 %v1399
        %v1442 = vunpack.c.l.b16 %v1400
        %v1443 = vunpack.c.h.b16 %v1400
        %v1444 = vunpack.c.l.b16 %v1401
        %v1445 = vunpack.c.h.b16 %v1401
        %v1446 = vunpack.c.l.b16 %v1402
        %v1447 = vunpack.c.h.b16 %v1402
        %v1448 = vunpack.c.l.b16 %v1403
        %v1449 = vunpack.c.h.b16 %v1403
        %v1450 = vunpack.c.l.b16 %v1404
        %v1451 = vunpack.c.h.b16 %v1404
        %v1452 = vunpack.c.l.b16 %v1405
        %v1453 = vunpack.c.h.b16 %v1405
        %v1454 = vunpack.c.l.b16 %v1406
        %v1455 = vunpack.c.h.b16 %v1406
        %v1456 = vunpack.c.l.b16 %v1407
        %v1457 = vunpack.c.h.b16 %v1407
        %v1458 = vunpack.c.l.b16 %v1408
        %v1459 = vunpack.c.h.b16 %v1408
        %v1460 = vunpack.c.l.b16 %v1409
        %v1461 = vunpack.c.h.b16 %v1409
        %v1462 = vunpack.c.l.b16 %v1410
        %v1463 = vunpack.c.h.b16 %v1410
        %v1464 = vunpack.c.l.b16 %v1411
        %v1465 = vunpack.c.h.b16 %v1411
        %v1466 = vpack.c.b16 %v1436, %v1434
        %v1467 = vpack.c.b16 %v1437, %v1435
        %v1468 = vpack.c.b16 %v1440, %v1438
        %v1469 = vpack.c.b16 %v1441, %v1439
        %v1470 = vpack.c.b16 %v1444, %v1442
        %v1471 = vpack.c.b16 %v1445, %v1443
        %v1472 = vpack.c.b16 %v1448, %v1446
        %v1473 = vpack.c.b16 %v1449, %v1447
        %v1474 = vpack.c.b16 %v1452, %v1450
        %v1475 = vpack.c.b16 %v1453, %v1451
        %v1476 = vpack.c.b16 %v1456, %v1454
        %v1477 = vpack.c.b16 %v1457, %v1455
        %v1478 = vpack.c.b16 %v1460, %v1458
        %v1479 = vpack.c.b16 %v1461, %v1459
        %v1480 = vpack.c.b16 %v1464, %v1462
        %v1481 = vpack.c.b16 %v1465, %v1463
        %1498 = vmatpush.bf16.msra.mxu0 %v1480
        %1499 = vmatpush.bf16.msra.mxu0 %v1478
        %1500 = vmatpush.bf16.msra.mxu0 %v1476
        %1501 = vmatpush.bf16.msra.mxu0 %v1474
        %1502 = vmatpush.bf16.msra.mxu0 %v1472
        %1503 = vmatpush.bf16.msra.mxu0 %v1470
        %1504 = vmatpush.bf16.msra.mxu0 %v1468
        %1505 = vmatpush.bf16.msra.mxu0 %v1466
        %1506 = vmatmul.bf16.gmra.mxu0 %v1416
        %v1507 = vpop.f32.mrf.mxu0
        %v1508 = vadd.f32 0.0, %v1507
        %v1509 = vpop.f32.mrf.mxu0
        %1510 = vdwg.mxu0
        %1511 = vmatpush.bf16.msra.mxu0 %v1481
        %1512 = vmatpush.bf16.msra.mxu0 %v1479
        %1513 = vmatpush.bf16.msra.mxu0 %v1477
        %1514 = vmatpush.bf16.msra.mxu0 %v1475
        %1515 = vmatpush.bf16.msra.mxu0 %v1473
        %1516 = vmatpush.bf16.msra.mxu0 %v1471
        %1517 = vmatpush.bf16.msra.mxu0 %v1469
        %1518 = vmatpush.bf16.msra.mxu0 %v1467
        %1519 = vmatmul.bf16.gmra.mxu0 %v1416
        %v1520 = vpop.f32.mrf.mxu0
        %v1521 = vadd.f32 0.0, %v1520
        %v1522 = vpop.f32.mrf.mxu0
        %1523 = vdwg.mxu0
        %v1524 = vadd.f32 %v1393, %v1508
        %v1525 = vadd.f32 %v1394, %v1521
        %v1526 = vld [vmem:[#allocation2] sm:$0xe]
        %s1527 = scalar_lea.vmem [#allocation8], 768
        %v1528 = vld [vmem:[%s1527] sm:$0xff]
        %v1529 = vld [vmem:[%s1527 + $0x8] sm:$0xff]
        %v1530 = vld [vmem:[%s1527 + $0x10] sm:$0xff]
        %v1531 = vld [vmem:[%s1527 + $0x18] sm:$0xff]
        %v1532 = vld [vmem:[%s1527 + $0x20] sm:$0xff]
        %v1533 = vld [vmem:[%s1527 + $0x28] sm:$0xff]
        %v1534 = vld [vmem:[%s1527 + $0x30] sm:$0xff]
        %v1535 = vld [vmem:[%s1527 + $0x38] sm:$0xff]
        %v1536 = vld [vmem:[%s1527 + $0x40] sm:$0xff]
        %v1537 = vld [vmem:[%s1527 + $0x48] sm:$0xff]
        %v1538 = vld [vmem:[%s1527 + $0x50] sm:$0xff]
        %v1539 = vld [vmem:[%s1527 + $0x58] sm:$0xff]
        %v1540 = vld [vmem:[%s1527 + $0x60] sm:$0xff]
        %v1541 = vld [vmem:[%s1527 + $0x68] sm:$0xff]
        %v1542 = vld [vmem:[%s1527 + $0x70] sm:$0xff]
        %v1543 = vld [vmem:[%s1527 + $0x78] sm:$0xff]
        %v1545 = vunpack.c.l.b16 %v1526
        %v1546 = vpack.c.b16 %v1122, %v1545
        %v1547 = vrot.slane %v1546, 1
        %v1565 = vunpack.c.l.b16 %v1528
        %v1566 = vunpack.c.h.b16 %v1528
        %v1567 = vunpack.c.l.b16 %v1529
        %v1568 = vunpack.c.h.b16 %v1529
        %v1569 = vunpack.c.l.b16 %v1530
        %v1570 = vunpack.c.h.b16 %v1530
        %v1571 = vunpack.c.l.b16 %v1531
        %v1572 = vunpack.c.h.b16 %v1531
        %v1573 = vunpack.c.l.b16 %v1532
        %v1574 = vunpack.c.h.b16 %v1532
        %v1575 = vunpack.c.l.b16 %v1533
        %v1576 = vunpack.c.h.b16 %v1533
        %v1577 = vunpack.c.l.b16 %v1534
        %v1578 = vunpack.c.h.b16 %v1534
        %v1579 = vunpack.c.l.b16 %v1535
        %v1580 = vunpack.c.h.b16 %v1535
        %v1581 = vunpack.c.l.b16 %v1536
        %v1582 = vunpack.c.h.b16 %v1536
        %v1583 = vunpack.c.l.b16 %v1537
        %v1584 = vunpack.c.h.b16 %v1537
        %v1585 = vunpack.c.l.b16 %v1538
        %v1586 = vunpack.c.h.b16 %v1538
        %v1587 = vunpack.c.l.b16 %v1539
        %v1588 = vunpack.c.h.b16 %v1539
        %v1589 = vunpack.c.l.b16 %v1540
        %v1590 = vunpack.c.h.b16 %v1540
        %v1591 = vunpack.c.l.b16 %v1541
        %v1592 = vunpack.c.h.b16 %v1541
        %v1593 = vunpack.c.l.b16 %v1542
        %v1594 = vunpack.c.h.b16 %v1542
        %v1595 = vunpack.c.l.b16 %v1543
        %v1596 = vunpack.c.h.b16 %v1543
        %v1597 = vpack.c.b16 %v1567, %v1565
        %v1598 = vpack.c.b16 %v1568, %v1566
        %v1599 = vpack.c.b16 %v1571, %v1569
        %v1600 = vpack.c.b16 %v1572, %v1570
        %v1601 = vpack.c.b16 %v1575, %v1573
        %v1602 = vpack.c.b16 %v1576, %v1574
        %v1603 = vpack.c.b16 %v1579, %v1577
        %v1604 = vpack.c.b16 %v1580, %v1578
        %v1605 = vpack.c.b16 %v1583, %v1581
        %v1606 = vpack.c.b16 %v1584, %v1582
        %v1607 = vpack.c.b16 %v1587, %v1585
        %v1608 = vpack.c.b16 %v1588, %v1586
        %v1609 = vpack.c.b16 %v1591, %v1589
        %v1610 = vpack.c.b16 %v1592, %v1590
        %v1611 = vpack.c.b16 %v1595, %v1593
        %v1612 = vpack.c.b16 %v1596, %v1594
        %1629 = vmatpush.bf16.msra.mxu0 %v1611
        %1630 = vmatpush.bf16.msra.mxu0 %v1609
        %1631 = vmatpush.bf16.msra.mxu0 %v1607
        %1632 = vmatpush.bf16.msra.mxu0 %v1605
        %1633 = vmatpush.bf16.msra.mxu0 %v1603
        %1634 = vmatpush.bf16.msra.mxu0 %v1601
        %1635 = vmatpush.bf16.msra.mxu0 %v1599
        %1636 = vmatpush.bf16.msra.mxu0 %v1597
        %1637 = vmatmul.bf16.gmra.mxu0 %v1547
        %v1638 = vpop.f32.mrf.mxu0
        %v1639 = vadd.f32 0.0, %v1638
        %v1640 = vpop.f32.mrf.mxu0
        %1641 = vdwg.mxu0
        %1642 = vmatpush.bf16.msra.mxu0 %v1612
        %1643 = vmatpush.bf16.msra.mxu0 %v1610
        %1644 = vmatpush.bf16.msra.mxu0 %v1608
        %1645 = vmatpush.bf16.msra.mxu0 %v1606
        %1646 = vmatpush.bf16.msra.mxu0 %v1604
        %1647 = vmatpush.bf16.msra.mxu0 %v1602
        %1648 = vmatpush.bf16.msra.mxu0 %v1600
        %1649 = vmatpush.bf16.msra.mxu0 %v1598
        %1650 = vmatmul.bf16.gmra.mxu0 %v1547
        %v1651 = vpop.f32.mrf.mxu0
        %v1652 = vadd.f32 0.0, %v1651
        %v1653 = vpop.f32.mrf.mxu0
        %1654 = vdwg.mxu0
        %v1655 = vadd.f32 %v1524, %v1639
        %v1656 = vadd.f32 %v1525, %v1652
        %v1657 = vld [vmem:[#allocation2] sm:$0xee]
        %s1658 = scalar_lea.vmem [#allocation8], 896
        %v1659 = vld [vmem:[%s1658] sm:$0xff]
        %v1660 = vld [vmem:[%s1658 + $0x8] sm:$0xff]
        %v1661 = vld [vmem:[%s1658 + $0x10] sm:$0xff]
        %v1662 = vld [vmem:[%s1658 + $0x18] sm:$0xff]
        %v1663 = vld [vmem:[%s1658 + $0x20] sm:$0xff]
        %v1664 = vld [vmem:[%s1658 + $0x28] sm:$0xff]
        %v1665 = vld [vmem:[%s1658 + $0x30] sm:$0xff]
        %v1666 = vld [vmem:[%s1658 + $0x38] sm:$0xff]
        %v1667 = vld [vmem:[%s1658 + $0x40] sm:$0xff]
        %v1668 = vld [vmem:[%s1658 + $0x48] sm:$0xff]
        %v1669 = vld [vmem:[%s1658 + $0x50] sm:$0xff]
        %v1670 = vld [vmem:[%s1658 + $0x58] sm:$0xff]
        %v1671 = vld [vmem:[%s1658 + $0x60] sm:$0xff]
        %v1672 = vld [vmem:[%s1658 + $0x68] sm:$0xff]
        %v1673 = vld [vmem:[%s1658 + $0x70] sm:$0xff]
        %v1674 = vld [vmem:[%s1658 + $0x78] sm:$0xff]
        %v1676 = vunpack.c.l.b16 %v1657
        %v1677 = vunpack.c.h.b16 %v1657
        %v1678 = vpack.c.b16 %v1263, %v1676
        %v1679 = vpack.c.b16 %v1264, %v1677
        %v1680 = vrot.slane %v1678, 1
        %v1681 = vrot.slane %v1679, 1
        %1682 = vrot.lane.b32.xlu0 %v1680, 112
        %v1683 = vpop.permute.xlu0 %1682
        %1684 = vrot.lane.b32.xlu0 %v1681, 112
        %v1685 = vpop.permute.xlu0 %1684
        %v1686 = vsel %vm753, %v1683, %v1685
        %v1704 = vunpack.c.l.b16 %v1659
        %v1705 = vunpack.c.h.b16 %v1659
        %v1706 = vunpack.c.l.b16 %v1660
        %v1707 = vunpack.c.h.b16 %v1660
        %v1708 = vunpack.c.l.b16 %v1661
        %v1709 = vunpack.c.h.b16 %v1661
        %v1710 = vunpack.c.l.b16 %v1662
        %v1711 = vunpack.c.h.b16 %v1662
        %v1712 = vunpack.c.l.b16 %v1663
        %v1713 = vunpack.c.h.b16 %v1663
        %v1714 = vunpack.c.l.b16 %v1664
        %v1715 = vunpack.c.h.b16 %v1664
        %v1716 = vunpack.c.l.b16 %v1665
        %v1717 = vunpack.c.h.b16 %v1665
        %v1718 = vunpack.c.l.b16 %v1666
        %v1719 = vunpack.c.h.b16 %v1666
        %v1720 = vunpack.c.l.b16 %v1667
        %v1721 = vunpack.c.h.b16 %v1667
        %v1722 = vunpack.c.l.b16 %v1668
        %v1723 = vunpack.c.h.b16 %v1668
        %v1724 = vunpack.c.l.b16 %v1669
        %v1725 = vunpack.c.h.b16 %v1669
        %v1726 = vunpack.c.l.b16 %v1670
        %v1727 = vunpack.c.h.b16 %v1670
        %v1728 = vunpack.c.l.b16 %v1671
        %v1729 = vunpack.c.h.b16 %v1671
        %v1730 = vunpack.c.l.b16 %v1672
        %v1731 = vunpack.c.h.b16 %v1672
        %v1732 = vunpack.c.l.b16 %v1673
        %v1733 = vunpack.c.h.b16 %v1673
        %v1734 = vunpack.c.l.b16 %v1674
        %v1735 = vunpack.c.h.b16 %v1674
        %v1736 = vpack.c.b16 %v1706, %v1704
        %v1737 = vpack.c.b16 %v1707, %v1705
        %v1738 = vpack.c.b16 %v1710, %v1708
        %v1739 = vpack.c.b16 %v1711, %v1709
        %v1740 = vpack.c.b16 %v1714, %v1712
        %v1741 = vpack.c.b16 %v1715, %v1713
        %v1742 = vpack.c.b16 %v1718, %v1716
        %v1743 = vpack.c.b16 %v1719, %v1717
        %v1744 = vpack.c.b16 %v1722, %v1720
        %v1745 = vpack.c.b16 %v1723, %v1721
        %v1746 = vpack.c.b16 %v1726, %v1724
        %v1747 = vpack.c.b16 %v1727, %v1725
        %v1748 = vpack.c.b16 %v1730, %v1728
        %v1749 = vpack.c.b16 %v1731, %v1729
        %v1750 = vpack.c.b16 %v1734, %v1732
        %v1751 = vpack.c.b16 %v1735, %v1733
        %1768 = vmatpush.bf16.msra.mxu0 %v1750
        %1769 = vmatpush.bf16.msra.mxu0 %v1748
        %1770 = vmatpush.bf16.msra.mxu0 %v1746
        %1771 = vmatpush.bf16.msra.mxu0 %v1744
        %1772 = vmatpush.bf16.msra.mxu0 %v1742
        %1773 = vmatpush.bf16.msra.mxu0 %v1740
        %1774 = vmatpush.bf16.msra.mxu0 %v1738
        %1775 = vmatpush.bf16.msra.mxu0 %v1736
        %1776 = vmatmul.bf16.gmra.mxu0 %v1686
        %v1777 = vpop.f32.mrf.mxu0
        %v1778 = vadd.f32 0.0, %v1777
        %v1779 = vpop.f32.mrf.mxu0
        %1780 = vdwg.mxu0
        %1781 = vmatpush.bf16.msra.mxu0 %v1751
        %1782 = vmatpush.bf16.msra.mxu0 %v1749
        %1783 = vmatpush.bf16.msra.mxu0 %v1747
        %1784 = vmatpush.bf16.msra.mxu0 %v1745
        %1785 = vmatpush.bf16.msra.mxu0 %v1743
        %1786 = vmatpush.bf16.msra.mxu0 %v1741
        %1787 = vmatpush.bf16.msra.mxu0 %v1739
        %1788 = vmatpush.bf16.msra.mxu0 %v1737
        %1789 = vmatmul.bf16.gmra.mxu0 %v1686
        %v1790 = vpop.f32.mrf.mxu0
        %v1791 = vadd.f32 0.0, %v1790
        %v1792 = vpop.f32.mrf.mxu0
        %1793 = vdwg.mxu0
        %v1794 = vadd.f32 %v1655, %v1778
        %v1795 = vadd.f32 %v1656, %v1791
        %s1796 = scalar_lea.vmem [#allocation8], 1024
        %v1797 = vld [vmem:[%s1796] sm:$0xff]
        %v1798 = vld [vmem:[%s1796 + $0x8] sm:$0xff]
        %v1799 = vld [vmem:[%s1796 + $0x10] sm:$0xff]
        %v1800 = vld [vmem:[%s1796 + $0x18] sm:$0xff]
        %v1801 = vld [vmem:[%s1796 + $0x20] sm:$0xff]
        %v1802 = vld [vmem:[%s1796 + $0x28] sm:$0xff]
        %v1803 = vld [vmem:[%s1796 + $0x30] sm:$0xff]
        %v1804 = vld [vmem:[%s1796 + $0x38] sm:$0xff]
        %v1805 = vld [vmem:[%s1796 + $0x40] sm:$0xff]
        %v1806 = vld [vmem:[%s1796 + $0x48] sm:$0xff]
        %v1807 = vld [vmem:[%s1796 + $0x50] sm:$0xff]
        %v1808 = vld [vmem:[%s1796 + $0x58] sm:$0xff]
        %v1809 = vld [vmem:[%s1796 + $0x60] sm:$0xff]
        %v1810 = vld [vmem:[%s1796 + $0x68] sm:$0xff]
        %v1811 = vld [vmem:[%s1796 + $0x70] sm:$0xff]
        %v1812 = vld [vmem:[%s1796 + $0x78] sm:$0xff]
        %1813 = vrot.lane.b32.xlu0 %v1680, 96
        %v1814 = vpop.permute.xlu0 %1813
        %1815 = vrot.lane.b32.xlu0 %v1681, 96
        %v1816 = vpop.permute.xlu0 %1815
        %v1817 = vsel %vm989, %v1814, %v1816
        %v1835 = vunpack.c.l.b16 %v1797
        %v1836 = vunpack.c.h.b16 %v1797
        %v1837 = vunpack.c.l.b16 %v1798
        %v1838 = vunpack.c.h.b16 %v1798
        %v1839 = vunpack.c.l.b16 %v1799
        %v1840 = vunpack.c.h.b16 %v1799
        %v1841 = vunpack.c.l.b16 %v1800
        %v1842 = vunpack.c.h.b16 %v1800
        %v1843 = vunpack.c.l.b16 %v1801
        %v1844 = vunpack.c.h.b16 %v1801
        %v1845 = vunpack.c.l.b16 %v1802
        %v1846 = vunpack.c.h.b16 %v1802
        %v1847 = vunpack.c.l.b16 %v1803
        %v1848 = vunpack.c.h.b16 %v1803
        %v1849 = vunpack.c.l.b16 %v1804
        %v1850 = vunpack.c.h.b16 %v1804
        %v1851 = vunpack.c.l.b16 %v1805
        %v1852 = vunpack.c.h.b16 %v1805
        %v1853 = vunpack.c.l.b16 %v1806
        %v1854 = vunpack.c.h.b16 %v1806
        %v1855 = vunpack.c.l.b16 %v1807
        %v1856 = vunpack.c.h.b16 %v1807
        %v1857 = vunpack.c.l.b16 %v1808
        %v1858 = vunpack.c.h.b16 %v1808
        %v1859 = vunpack.c.l.b16 %v1809
        %v1860 = vunpack.c.h.b16 %v1809
        %v1861 = vunpack.c.l.b16 %v1810
        %v1862 = vunpack.c.h.b16 %v1810
        %v1863 = vunpack.c.l.b16 %v1811
        %v1864 = vunpack.c.h.b16 %v1811
        %v1865 = vunpack.c.l.b16 %v1812
        %v1866 = vunpack.c.h.b16 %v1812
        %v1867 = vpack.c.b16 %v1837, %v1835
        %v1868 = vpack.c.b16 %v1838, %v1836
        %v1869 = vpack.c.b16 %v1841, %v1839
        %v1870 = vpack.c.b16 %v1842, %v1840
        %v1871 = vpack.c.b16 %v1845, %v1843
        %v1872 = vpack.c.b16 %v1846, %v1844
        %v1873 = vpack.c.b16 %v1849, %v1847
        %v1874 = vpack.c.b16 %v1850, %v1848
        %v1875 = vpack.c.b16 %v1853, %v1851
        %v1876 = vpack.c.b16 %v1854, %v1852
        %v1877 = vpack.c.b16 %v1857, %v1855
        %v1878 = vpack.c.b16 %v1858, %v1856
        %v1879 = vpack.c.b16 %v1861, %v1859
        %v1880 = vpack.c.b16 %v1862, %v1860
        %v1881 = vpack.c.b16 %v1865, %v1863
        %v1882 = vpack.c.b16 %v1866, %v1864
        %1899 = vmatpush.bf16.msra.mxu0 %v1881
        %1900 = vmatpush.bf16.msra.mxu0 %v1879
        %1901 = vmatpush.bf16.msra.mxu0 %v1877
        %1902 = vmatpush.bf16.msra.mxu0 %v1875
        %1903 = vmatpush.bf16.msra.mxu0 %v1873
        %1904 = vmatpush.bf16.msra.mxu0 %v1871
        %1905 = vmatpush.bf16.msra.mxu0 %v1869
        %1906 = vmatpush.bf16.msra.mxu0 %v1867
        %1907 = vmatmul.bf16.gmra.mxu0 %v1817
        %v1908 = vpop.f32.mrf.mxu0
        %v1909 = vadd.f32 0.0, %v1908
        %v1910 = vpop.f32.mrf.mxu0
        %1911 = vdwg.mxu0
        %1912 = vmatpush.bf16.msra.mxu0 %v1882
        %1913 = vmatpush.bf16.msra.mxu0 %v1880
        %1914 = vmatpush.bf16.msra.mxu0 %v1878
        %1915 = vmatpush.bf16.msra.mxu0 %v1876
        %1916 = vmatpush.bf16.msra.mxu0 %v1874
        %1917 = vmatpush.bf16.msra.mxu0 %v1872
        %1918 = vmatpush.bf16.msra.mxu0 %v1870
        %1919 = vmatpush.bf16.msra.mxu0 %v1868
        %1920 = vmatmul.bf16.gmra.mxu0 %v1817
        %v1921 = vpop.f32.mrf.mxu0
        %v1922 = vadd.f32 0.0, %v1921
        %v1923 = vpop.f32.mrf.mxu0
        %1924 = vdwg.mxu0
        %v1925 = vadd.f32 %v1794, %v1909
        %v1926 = vadd.f32 %v1795, %v1922
        %v1927 = vld [vmem:[#allocation9] sm:$0x3]
        %v1929 = vperm.slane %v1927, 0
        %v1930 = vperm.slane %v1927, 1
        %v1933 = vadd.f32 %v1925, %v1929
        %v1934 = vadd.f32 %v1926, %v1930
        %v1935 = vmax.f32 %v1933, 0.0
        %v1936 = vmax.f32 %v1934, 0.0
        %v1937 = vpack.c.bf16 %v1936, %v1935
        %1938 = vst [vmem:[#allocation3] sm:$0xff] 0
        %vm1939 = vcmask 519168
        %1940 = vst.msk [vmem:[#allocation3 + $0x8] sm:$0xf] %vm1939, 0
        %1941 = vst [vmem:[#allocation3 + $0xc] sm:$0x11] 0
        %vm1942 = vcmask 516096
        %1943 = vst.msk [vmem:[#allocation3 + $0x14] sm:$0x1] %vm1942, 0
        %v1945 = vshrl.u32 %v1937, 16
        %v1947 = vrot.slane %v1945, 7
        %v1948 = vshll.u32 %v1937, 16
        %v1950 = vor.u32 %v1947, %v1948
        %v1951 = vrot.slane %v1947, 4
        %1952 = vrot.lane.b32.xlu0 %v1950, 32
        %v1953 = vpop.permute.xlu0 %1952
        %1954 = vrot.lane.b32.xlu0 %v1951, 32
        %v1955 = vpop.permute.xlu0 %1954
        %v1956 = vrot.slane %v1953, 4
        %v1957 = vrot.slane %v1955, 4
        %vm1958 = vcmask 261120
        %v1959 = vsel %vm1958, %v1956, %v1953
        %v1960 = vsel %vm1958, %v1957, %v1955
        %vm1965 = vcmask 1043712
        %vm1966 = vmand %vm1965, %vm690
        %vm1967 = vcmask 1047556
        %vm1968 = vmand %vm1967, %vm693
        %vm1969 = vmor %vm1968, %vm1966
        %v1970 = vld [vmem:[#allocation3] sm:$0xff]
        %v1971 = vsel %vm1969, %v1959, %v1970
        %1972 = vst [vmem:[#allocation3] sm:$0xff] %v1971
        %vm1973 = vcmask 257024
        %vm1974 = vmand %vm1973, %vm690
        %v1975 = vld [vmem:[#allocation3 + $0x8] sm:$0xf]
        %v1976 = vsel %vm1974, %v1956, %v1975
        %1977 = vst [vmem:[#allocation3 + $0x8] sm:$0xf] %v1976
        %vm1978 = vcmask 1040640
        %vm1979 = vmand %vm1978, %vm700
        %vm1980 = vcmask 1044484
        %vm1981 = vmand %vm1980, %vm703
        %vm1982 = vmor %vm1981, %vm1979
        %v1983 = vld [vmem:[#allocation3 + $0xc] sm:$0x11]
        %v1984 = vsel %vm1982, %v1960, %v1983
        %1985 = vst [vmem:[#allocation3 + $0xc] sm:$0x11] %v1984
        %vm1986 = vcmask 253952
        %vm1987 = vmand %vm1986, %vm700
        %v1988 = vld [vmem:[#allocation3 + $0x14] sm:$0x1]
        %v1989 = vsel %vm1987, %v1957, %v1988
        %1990 = vst [vmem:[#allocation3 + $0x14] sm:$0x1] %v1989
        %v1991 = vld [vmem:[#allocation3] sm:$0xff]
        %v1992 = vld [vmem:[#allocation11] sm:$0xff]
        %v1993 = vld [vmem:[#allocation11 + $0x8] sm:$0xff]
        %v1994 = vld [vmem:[#allocation11 + $0x10] sm:$0xff]
        %v1995 = vld [vmem:[#allocation11 + $0x18] sm:$0xff]
        %v1996 = vld [vmem:[#allocation11 + $0x20] sm:$0xff]
        %v1997 = vld [vmem:[#allocation11 + $0x28] sm:$0xff]
        %v1998 = vld [vmem:[#allocation11 + $0x30] sm:$0xff]
        %v1999 = vld [vmem:[#allocation11 + $0x38] sm:$0xff]
        %v2000 = vld [vmem:[#allocation11 + $0x40] sm:$0xff]
        %v2001 = vld [vmem:[#allocation11 + $0x48] sm:$0xff]
        %v2002 = vld [vmem:[#allocation11 + $0x50] sm:$0xff]
        %v2003 = vld [vmem:[#allocation11 + $0x58] sm:$0xff]
        %v2004 = vld [vmem:[#allocation11 + $0x60] sm:$0xff]
        %v2005 = vld [vmem:[#allocation11 + $0x68] sm:$0xff]
        %v2006 = vld [vmem:[#allocation11 + $0x70] sm:$0xff]
        %v2007 = vld [vmem:[#allocation11 + $0x78] sm:$0xff]
        %v2008 = vld [vmem:[#allocation11 + $0x80] sm:$0xff]
        %v2009 = vld [vmem:[#allocation11 + $0x88] sm:$0xff]
        %v2010 = vld [vmem:[#allocation11 + $0x90] sm:$0xff]
        %v2011 = vld [vmem:[#allocation11 + $0x98] sm:$0xff]
        %v2012 = vld [vmem:[#allocation11 + $0xa0] sm:$0xff]
        %v2013 = vld [vmem:[#allocation11 + $0xa8] sm:$0xff]
        %v2014 = vld [vmem:[#allocation11 + $0xb0] sm:$0xff]
        %v2015 = vld [vmem:[#allocation11 + $0xb8] sm:$0xff]
        %v2016 = vld [vmem:[#allocation11 + $0xc0] sm:$0xff]
        %v2017 = vld [vmem:[#allocation11 + $0xc8] sm:$0xff]
        %v2018 = vld [vmem:[#allocation11 + $0xd0] sm:$0xff]
        %v2019 = vld [vmem:[#allocation11 + $0xd8] sm:$0xff]
        %v2020 = vld [vmem:[#allocation11 + $0xe0] sm:$0xff]
        %v2021 = vld [vmem:[#allocation11 + $0xe8] sm:$0xff]
        %v2022 = vld [vmem:[#allocation11 + $0xf0] sm:$0xff]
        %v2023 = vld [vmem:[#allocation11 + $0xf8] sm:$0xff]
        %v2024 = vld [vmem:[#allocation3 + $0x8] sm:$0xf]
        %s2025 = scalar_lea.vmem [#allocation11], 256
        %v2026 = vld [vmem:[%s2025] sm:$0xff]
        %v2027 = vld [vmem:[%s2025 + $0x8] sm:$0xff]
        %v2028 = vld [vmem:[%s2025 + $0x10] sm:$0xff]
        %v2029 = vld [vmem:[%s2025 + $0x18] sm:$0xff]
        %v2030 = vld [vmem:[%s2025 + $0x20] sm:$0xff]
        %v2031 = vld [vmem:[%s2025 + $0x28] sm:$0xff]
        %v2032 = vld [vmem:[%s2025 + $0x30] sm:$0xff]
        %v2033 = vld [vmem:[%s2025 + $0x38] sm:$0xff]
        %v2034 = vld [vmem:[%s2025 + $0x40] sm:$0xff]
        %v2035 = vld [vmem:[%s2025 + $0x48] sm:$0xff]
        %v2036 = vld [vmem:[%s2025 + $0x50] sm:$0xff]
        %v2037 = vld [vmem:[%s2025 + $0x58] sm:$0xff]
        %v2038 = vld [vmem:[%s2025 + $0x60] sm:$0xff]
        %v2039 = vld [vmem:[%s2025 + $0x68] sm:$0xff]
        %v2040 = vld [vmem:[%s2025 + $0x70] sm:$0xff]
        %v2041 = vld [vmem:[%s2025 + $0x78] sm:$0xff]
        %v2042 = vld [vmem:[%s2025 + $0x80] sm:$0xff]
        %v2043 = vld [vmem:[%s2025 + $0x88] sm:$0xff]
        %v2044 = vld [vmem:[%s2025 + $0x90] sm:$0xff]
        %v2045 = vld [vmem:[%s2025 + $0x98] sm:$0xff]
        %v2046 = vld [vmem:[%s2025 + $0xa0] sm:$0xff]
        %v2047 = vld [vmem:[%s2025 + $0xa8] sm:$0xff]
        %v2048 = vld [vmem:[%s2025 + $0xb0] sm:$0xff]
        %v2049 = vld [vmem:[%s2025 + $0xb8] sm:$0xff]
        %v2050 = vld [vmem:[%s2025 + $0xc0] sm:$0xff]
        %v2051 = vld [vmem:[%s2025 + $0xc8] sm:$0xff]
        %v2052 = vld [vmem:[%s2025 + $0xd0] sm:$0xff]
        %v2053 = vld [vmem:[%s2025 + $0xd8] sm:$0xff]
        %v2054 = vld [vmem:[%s2025 + $0xe0] sm:$0xff]
        %v2055 = vld [vmem:[%s2025 + $0xe8] sm:$0xff]
        %v2056 = vld [vmem:[%s2025 + $0xf0] sm:$0xff]
        %v2057 = vld [vmem:[%s2025 + $0xf8] sm:$0xff]
        %v2060 = vunpack.c.l.b16 %v1991
        %v2061 = vunpack.c.h.b16 %v1991
        %v2062 = vunpack.c.l.b16 %v2024
        %v2063 = vpack.c.b16 %v2060, %v2060
        %v2064 = vpack.c.b16 %v2061, %v2061
        %v2065 = vpack.c.b16 %v2062, %v2062
        %2066 = vrot.lane.b32.xlu0 %v2063, 96
        %v2067 = vpop.permute.xlu0 %2066
        %2068 = vrot.lane.b32.xlu0 %v2064, 96
        %v2069 = vpop.permute.xlu0 %2068
        %2070 = vrot.lane.b32.xlu0 %v2065, 96
        %v2071 = vpop.permute.xlu0 %2070
        %v2072 = vsel %vm989, %v2067, %v2069
        %v2073 = vsel %vm989, %v2069, %v2071
        %v2108 = vunpack.c.l.b16 %v2026
        %v2109 = vunpack.c.h.b16 %v2026
        %v2110 = vunpack.c.l.b16 %v2027
        %v2111 = vunpack.c.h.b16 %v2027
        %v2112 = vunpack.c.l.b16 %v2028
        %v2113 = vunpack.c.h.b16 %v2028
        %v2114 = vunpack.c.l.b16 %v2029
        %v2115 = vunpack.c.h.b16 %v2029
        %v2116 = vunpack.c.l.b16 %v2030
        %v2117 = vunpack.c.h.b16 %v2030
        %v2118 = vunpack.c.l.b16 %v2031
        %v2119 = vunpack.c.h.b16 %v2031
        %v2120 = vunpack.c.l.b16 %v2032
        %v2121 = vunpack.c.h.b16 %v2032
        %v2122 = vunpack.c.l.b16 %v2033
        %v2123 = vunpack.c.h.b16 %v2033
        %v2124 = vunpack.c.l.b16 %v2034
        %v2125 = vunpack.c.h.b16 %v2034
        %v2126 = vunpack.c.l.b16 %v2035
        %v2127 = vunpack.c.h.b16 %v2035
        %v2128 = vunpack.c.l.b16 %v2036
        %v2129 = vunpack.c.h.b16 %v2036
        %v2130 = vunpack.c.l.b16 %v2037
        %v2131 = vunpack.c.h.b16 %v2037
        %v2132 = vunpack.c.l.b16 %v2038
        %v2133 = vunpack.c.h.b16 %v2038
        %v2134 = vunpack.c.l.b16 %v2039
        %v2135 = vunpack.c.h.b16 %v2039
        %v2136 = vunpack.c.l.b16 %v2040
        %v2137 = vunpack.c.h.b16 %v2040
        %v2138 = vunpack.c.l.b16 %v2041
        %v2139 = vunpack.c.h.b16 %v2041
        %v2140 = vunpack.c.l.b16 %v2042
        %v2141 = vunpack.c.h.b16 %v2042
        %v2142 = vunpack.c.l.b16 %v2043
        %v2143 = vunpack.c.h.b16 %v2043
        %v2144 = vunpack.c.l.b16 %v2044
        %v2145 = vunpack.c.h.b16 %v2044
        %v2146 = vunpack.c.l.b16 %v2045
        %v2147 = vunpack.c.h.b16 %v2045
        %v2148 = vunpack.c.l.b16 %v2046
        %v2149 = vunpack.c.h.b16 %v2046
        %v2150 = vunpack.c.l.b16 %v2047
        %v2151 = vunpack.c.h.b16 %v2047
        %v2152 = vunpack.c.l.b16 %v2048
        %v2153 = vunpack.c.h.b16 %v2048
        %v2154 = vunpack.c.l.b16 %v2049
        %v2155 = vunpack.c.h.b16 %v2049
        %v2156 = vunpack.c.l.b16 %v2050
        %v2157 = vunpack.c.h.b16 %v2050
        %v2158 = vunpack.c.l.b16 %v2051
        %v2159 = vunpack.c.h.b16 %v2051
        %v2160 = vunpack.c.l.b16 %v2052
        %v2161 = vunpack.c.h.b16 %v2052
        %v2162 = vunpack.c.l.b16 %v2053
        %v2163 = vunpack.c.h.b16 %v2053
        %v2164 = vunpack.c.l.b16 %v2054
        %v2165 = vunpack.c.h.b16 %v2054
        %v2166 = vunpack.c.l.b16 %v2055
        %v2167 = vunpack.c.h.b16 %v2055
        %v2168 = vunpack.c.l.b16 %v2056
        %v2169 = vunpack.c.h.b16 %v2056
        %v2170 = vunpack.c.l.b16 %v2057
        %v2171 = vunpack.c.h.b16 %v2057
        %v2172 = vpack.c.b16 %v2110, %v2108
        %v2173 = vpack.c.b16 %v2111, %v2109
        %v2174 = vpack.c.b16 %v2114, %v2112
        %v2175 = vpack.c.b16 %v2115, %v2113
        %v2176 = vpack.c.b16 %v2118, %v2116
        %v2177 = vpack.c.b16 %v2119, %v2117
        %v2178 = vpack.c.b16 %v2122, %v2120
        %v2179 = vpack.c.b16 %v2123, %v2121
        %v2180 = vpack.c.b16 %v2126, %v2124
        %v2181 = vpack.c.b16 %v2127, %v2125
        %v2182 = vpack.c.b16 %v2130, %v2128
        %v2183 = vpack.c.b16 %v2131, %v2129
        %v2184 = vpack.c.b16 %v2134, %v2132
        %v2185 = vpack.c.b16 %v2135, %v2133
        %v2186 = vpack.c.b16 %v2138, %v2136
        %v2187 = vpack.c.b16 %v2139, %v2137
        %v2188 = vpack.c.b16 %v2142, %v2140
        %v2189 = vpack.c.b16 %v2143, %v2141
        %v2190 = vpack.c.b16 %v2146, %v2144
        %v2191 = vpack.c.b16 %v2147, %v2145
        %v2192 = vpack.c.b16 %v2150, %v2148
        %v2193 = vpack.c.b16 %v2151, %v2149
        %v2194 = vpack.c.b16 %v2154, %v2152
        %v2195 = vpack.c.b16 %v2155, %v2153
        %v2196 = vpack.c.b16 %v2158, %v2156
        %v2197 = vpack.c.b16 %v2159, %v2157
        %v2198 = vpack.c.b16 %v2162, %v2160
        %v2199 = vpack.c.b16 %v2163, %v2161
        %v2200 = vpack.c.b16 %v2166, %v2164
        %v2201 = vpack.c.b16 %v2167, %v2165
        %v2202 = vpack.c.b16 %v2170, %v2168
        %v2203 = vpack.c.b16 %v2171, %v2169
        %2236 = vmatpush.bf16.msra.mxu0 %v2186
        %2237 = vmatpush.bf16.msra.mxu0 %v2184
        %2238 = vmatpush.bf16.msra.mxu0 %v2182
        %2239 = vmatpush.bf16.msra.mxu0 %v2180
        %2240 = vmatpush.bf16.msra.mxu0 %v2178
        %2241 = vmatpush.bf16.msra.mxu0 %v2176
        %2242 = vmatpush.bf16.msra.mxu0 %v2174
        %2243 = vmatpush.bf16.msra.mxu0 %v2172
        %2244 = vmatmul.bf16.gmra.mxu0 %v2072
        %v2245 = vpop.f32.mrf.mxu0
        %v2246 = vadd.f32 0.0, %v2245
        %v2247 = vpop.f32.mrf.mxu0
        %2248 = vdwg.mxu0
        %2249 = vmatpush.bf16.msra.mxu0 %v2202
        %2250 = vmatpush.bf16.msra.mxu0 %v2200
        %2251 = vmatpush.bf16.msra.mxu0 %v2198
        %2252 = vmatpush.bf16.msra.mxu0 %v2196
        %2253 = vmatpush.bf16.msra.mxu0 %v2194
        %2254 = vmatpush.bf16.msra.mxu0 %v2192
        %2255 = vmatpush.bf16.msra.mxu0 %v2190
        %2256 = vmatpush.bf16.msra.mxu0 %v2188
        %2257 = vmatmul.bf16.gmra.mxu0 %v2073
        %v2258 = vpop.f32.mrf.mxu0
        %v2259 = vadd.f32 %v2246, %v2258
        %v2260 = vpop.f32.mrf.mxu0
        %2261 = vdwg.mxu0
        %2262 = vmatpush.bf16.msra.mxu0 %v2187
        %2263 = vmatpush.bf16.msra.mxu0 %v2185
        %2264 = vmatpush.bf16.msra.mxu0 %v2183
        %2265 = vmatpush.bf16.msra.mxu0 %v2181
        %2266 = vmatpush.bf16.msra.mxu0 %v2179
        %2267 = vmatpush.bf16.msra.mxu0 %v2177
        %2268 = vmatpush.bf16.msra.mxu0 %v2175
        %2269 = vmatpush.bf16.msra.mxu0 %v2173
        %2270 = vmatmul.bf16.gmra.mxu0 %v2072
        %v2271 = vpop.f32.mrf.mxu0
        %v2272 = vadd.f32 0.0, %v2271
        %v2273 = vpop.f32.mrf.mxu0
        %2274 = vdwg.mxu0
        %2275 = vmatpush.bf16.msra.mxu0 %v2203
        %2276 = vmatpush.bf16.msra.mxu0 %v2201
        %2277 = vmatpush.bf16.msra.mxu0 %v2199
        %2278 = vmatpush.bf16.msra.mxu0 %v2197
        %2279 = vmatpush.bf16.msra.mxu0 %v2195
        %2280 = vmatpush.bf16.msra.mxu0 %v2193
        %2281 = vmatpush.bf16.msra.mxu0 %v2191
        %2282 = vmatpush.bf16.msra.mxu0 %v2189
        %2283 = vmatmul.bf16.gmra.mxu0 %v2073
        %v2284 = vpop.f32.mrf.mxu0
        %v2285 = vadd.f32 %v2272, %v2284
        %v2286 = vpop.f32.mrf.mxu0
        %2287 = vdwg.mxu0
        %v2322 = vunpack.c.l.b16 %v1992
        %v2323 = vunpack.c.h.b16 %v1992
        %v2324 = vunpack.c.l.b16 %v1993
        %v2325 = vunpack.c.h.b16 %v1993
        %v2326 = vunpack.c.l.b16 %v1994
        %v2327 = vunpack.c.h.b16 %v1994
        %v2328 = vunpack.c.l.b16 %v1995
        %v2329 = vunpack.c.h.b16 %v1995
        %v2330 = vunpack.c.l.b16 %v1996
        %v2331 = vunpack.c.h.b16 %v1996
        %v2332 = vunpack.c.l.b16 %v1997
        %v2333 = vunpack.c.h.b16 %v1997
        %v2334 = vunpack.c.l.b16 %v1998
        %v2335 = vunpack.c.h.b16 %v1998
        %v2336 = vunpack.c.l.b16 %v1999
        %v2337 = vunpack.c.h.b16 %v1999
        %v2338 = vunpack.c.l.b16 %v2000
        %v2339 = vunpack.c.h.b16 %v2000
        %v2340 = vunpack.c.l.b16 %v2001
        %v2341 = vunpack.c.h.b16 %v2001
        %v2342 = vunpack.c.l.b16 %v2002
        %v2343 = vunpack.c.h.b16 %v2002
        %v2344 = vunpack.c.l.b16 %v2003
        %v2345 = vunpack.c.h.b16 %v2003
        %v2346 = vunpack.c.l.b16 %v2004
        %v2347 = vunpack.c.h.b16 %v2004
        %v2348 = vunpack.c.l.b16 %v2005
        %v2349 = vunpack.c.h.b16 %v2005
        %v2350 = vunpack.c.l.b16 %v2006
        %v2351 = vunpack.c.h.b16 %v2006
        %v2352 = vunpack.c.l.b16 %v2007
        %v2353 = vunpack.c.h.b16 %v2007
        %v2354 = vunpack.c.l.b16 %v2008
        %v2355 = vunpack.c.h.b16 %v2008
        %v2356 = vunpack.c.l.b16 %v2009
        %v2357 = vunpack.c.h.b16 %v2009
        %v2358 = vunpack.c.l.b16 %v2010
        %v2359 = vunpack.c.h.b16 %v2010
        %v2360 = vunpack.c.l.b16 %v2011
        %v2361 = vunpack.c.h.b16 %v2011
        %v2362 = vunpack.c.l.b16 %v2012
        %v2363 = vunpack.c.h.b16 %v2012
        %v2364 = vunpack.c.l.b16 %v2013
        %v2365 = vunpack.c.h.b16 %v2013
        %v2366 = vunpack.c.l.b16 %v2014
        %v2367 = vunpack.c.h.b16 %v2014
        %v2368 = vunpack.c.l.b16 %v2015
        %v2369 = vunpack.c.h.b16 %v2015
        %v2370 = vunpack.c.l.b16 %v2016
        %v2371 = vunpack.c.h.b16 %v2016
        %v2372 = vunpack.c.l.b16 %v2017
        %v2373 = vunpack.c.h.b16 %v2017
        %v2374 = vunpack.c.l.b16 %v2018
        %v2375 = vunpack.c.h.b16 %v2018
        %v2376 = vunpack.c.l.b16 %v2019
        %v2377 = vunpack.c.h.b16 %v2019
        %v2378 = vunpack.c.l.b16 %v2020
        %v2379 = vunpack.c.h.b16 %v2020
        %v2380 = vunpack.c.l.b16 %v2021
        %v2381 = vunpack.c.h.b16 %v2021
        %v2382 = vunpack.c.l.b16 %v2022
        %v2383 = vunpack.c.h.b16 %v2022
        %v2384 = vunpack.c.l.b16 %v2023
        %v2385 = vunpack.c.h.b16 %v2023
        %v2386 = vpack.c.b16 %v2324, %v2322
        %v2387 = vpack.c.b16 %v2325, %v2323
        %v2388 = vpack.c.b16 %v2328, %v2326
        %v2389 = vpack.c.b16 %v2329, %v2327
        %v2390 = vpack.c.b16 %v2332, %v2330
        %v2391 = vpack.c.b16 %v2333, %v2331
        %v2392 = vpack.c.b16 %v2336, %v2334
        %v2393 = vpack.c.b16 %v2337, %v2335
        %v2394 = vpack.c.b16 %v2340, %v2338
        %v2395 = vpack.c.b16 %v2341, %v2339
        %v2396 = vpack.c.b16 %v2344, %v2342
        %v2397 = vpack.c.b16 %v2345, %v2343
        %v2398 = vpack.c.b16 %v2348, %v2346
        %v2399 = vpack.c.b16 %v2349, %v2347
        %v2400 = vpack.c.b16 %v2352, %v2350
        %v2401 = vpack.c.b16 %v2353, %v2351
        %v2402 = vpack.c.b16 %v2356, %v2354
        %v2403 = vpack.c.b16 %v2357, %v2355
        %v2404 = vpack.c.b16 %v2360, %v2358
        %v2405 = vpack.c.b16 %v2361, %v2359
        %v2406 = vpack.c.b16 %v2364, %v2362
        %v2407 = vpack.c.b16 %v2365, %v2363
        %v2408 = vpack.c.b16 %v2368, %v2366
        %v2409 = vpack.c.b16 %v2369, %v2367
        %v2410 = vpack.c.b16 %v2372, %v2370
        %v2411 = vpack.c.b16 %v2373, %v2371
        %v2412 = vpack.c.b16 %v2376, %v2374
        %v2413 = vpack.c.b16 %v2377, %v2375
        %v2414 = vpack.c.b16 %v2380, %v2378
        %v2415 = vpack.c.b16 %v2381, %v2379
        %v2416 = vpack.c.b16 %v2384, %v2382
        %v2417 = vpack.c.b16 %v2385, %v2383
        %2450 = vmatpush.bf16.msra.mxu0 %v2400
        %2451 = vmatpush.bf16.msra.mxu0 %v2398
        %2452 = vmatpush.bf16.msra.mxu0 %v2396
        %2453 = vmatpush.bf16.msra.mxu0 %v2394
        %2454 = vmatpush.bf16.msra.mxu0 %v2392
        %2455 = vmatpush.bf16.msra.mxu0 %v2390
        %2456 = vmatpush.bf16.msra.mxu0 %v2388
        %2457 = vmatpush.bf16.msra.mxu0 %v2386
        %2458 = vmatmul.bf16.gmra.mxu0 %v2063
        %v2459 = vpop.f32.mrf.mxu0
        %v2460 = vadd.f32 %v2259, %v2459
        %v2461 = vpop.f32.mrf.mxu0
        %2462 = vdwg.mxu0
        %2463 = vmatpush.bf16.msra.mxu0 %v2416
        %2464 = vmatpush.bf16.msra.mxu0 %v2414
        %2465 = vmatpush.bf16.msra.mxu0 %v2412
        %2466 = vmatpush.bf16.msra.mxu0 %v2410
        %2467 = vmatpush.bf16.msra.mxu0 %v2408
        %2468 = vmatpush.bf16.msra.mxu0 %v2406
        %2469 = vmatpush.bf16.msra.mxu0 %v2404
        %2470 = vmatpush.bf16.msra.mxu0 %v2402
        %2471 = vmatmul.bf16.gmra.mxu0 %v2064
        %v2472 = vpop.f32.mrf.mxu0
        %v2473 = vadd.f32 %v2460, %v2472
        %v2474 = vpop.f32.mrf.mxu0
        %2475 = vdwg.mxu0
        %2476 = vmatpush.bf16.msra.mxu0 %v2401
        %2477 = vmatpush.bf16.msra.mxu0 %v2399
        %2478 = vmatpush.bf16.msra.mxu0 %v2397
        %2479 = vmatpush.bf16.msra.mxu0 %v2395
        %2480 = vmatpush.bf16.msra.mxu0 %v2393
        %2481 = vmatpush.bf16.msra.mxu0 %v2391
        %2482 = vmatpush.bf16.msra.mxu0 %v2389
        %2483 = vmatpush.bf16.msra.mxu0 %v2387
        %2484 = vmatmul.bf16.gmra.mxu0 %v2063
        %v2485 = vpop.f32.mrf.mxu0
        %v2486 = vadd.f32 %v2285, %v2485
        %v2487 = vpop.f32.mrf.mxu0
        %2488 = vdwg.mxu0
        %2489 = vmatpush.bf16.msra.mxu0 %v2417
        %2490 = vmatpush.bf16.msra.mxu0 %v2415
        %2491 = vmatpush.bf16.msra.mxu0 %v2413
        %2492 = vmatpush.bf16.msra.mxu0 %v2411
        %2493 = vmatpush.bf16.msra.mxu0 %v2409
        %2494 = vmatpush.bf16.msra.mxu0 %v2407
        %2495 = vmatpush.bf16.msra.mxu0 %v2405
        %2496 = vmatpush.bf16.msra.mxu0 %v2403
        %2497 = vmatmul.bf16.gmra.mxu0 %v2064
        %v2498 = vpop.f32.mrf.mxu0
        %v2499 = vadd.f32 %v2486, %v2498
        %v2500 = vpop.f32.mrf.mxu0
        %2501 = vdwg.mxu0
        %s2502 = scalar_lea.vmem [#allocation11], 512
        %v2503 = vld [vmem:[%s2502] sm:$0xff]
        %v2504 = vld [vmem:[%s2502 + $0x8] sm:$0xff]
        %v2505 = vld [vmem:[%s2502 + $0x10] sm:$0xff]
        %v2506 = vld [vmem:[%s2502 + $0x18] sm:$0xff]
        %v2507 = vld [vmem:[%s2502 + $0x20] sm:$0xff]
        %v2508 = vld [vmem:[%s2502 + $0x28] sm:$0xff]
        %v2509 = vld [vmem:[%s2502 + $0x30] sm:$0xff]
        %v2510 = vld [vmem:[%s2502 + $0x38] sm:$0xff]
        %v2511 = vld [vmem:[%s2502 + $0x40] sm:$0xff]
        %v2512 = vld [vmem:[%s2502 + $0x48] sm:$0xff]
        %v2513 = vld [vmem:[%s2502 + $0x50] sm:$0xff]
        %v2514 = vld [vmem:[%s2502 + $0x58] sm:$0xff]
        %v2515 = vld [vmem:[%s2502 + $0x60] sm:$0xff]
        %v2516 = vld [vmem:[%s2502 + $0x68] sm:$0xff]
        %v2517 = vld [vmem:[%s2502 + $0x70] sm:$0xff]
        %v2518 = vld [vmem:[%s2502 + $0x78] sm:$0xff]
        %v2519 = vld [vmem:[%s2502 + $0x80] sm:$0xff]
        %v2520 = vld [vmem:[%s2502 + $0x88] sm:$0xff]
        %v2521 = vld [vmem:[%s2502 + $0x90] sm:$0xff]
        %v2522 = vld [vmem:[%s2502 + $0x98] sm:$0xff]
        %v2523 = vld [vmem:[%s2502 + $0xa0] sm:$0xff]
        %v2524 = vld [vmem:[%s2502 + $0xa8] sm:$0xff]
        %v2525 = vld [vmem:[%s2502 + $0xb0] sm:$0xff]
        %v2526 = vld [vmem:[%s2502 + $0xb8] sm:$0xff]
        %v2527 = vld [vmem:[%s2502 + $0xc0] sm:$0xff]
        %v2528 = vld [vmem:[%s2502 + $0xc8] sm:$0xff]
        %v2529 = vld [vmem:[%s2502 + $0xd0] sm:$0xff]
        %v2530 = vld [vmem:[%s2502 + $0xd8] sm:$0xff]
        %v2531 = vld [vmem:[%s2502 + $0xe0] sm:$0xff]
        %v2532 = vld [vmem:[%s2502 + $0xe8] sm:$0xff]
        %v2533 = vld [vmem:[%s2502 + $0xf0] sm:$0xff]
        %v2534 = vld [vmem:[%s2502 + $0xf8] sm:$0xff]
        %2535 = vrot.lane.b32.xlu0 %v2063, 64
        %v2536 = vpop.permute.xlu0 %2535
        %2537 = vrot.lane.b32.xlu0 %v2064, 64
        %v2538 = vpop.permute.xlu0 %2537
        %2539 = vrot.lane.b32.xlu0 %v2065, 64
        %v2540 = vpop.permute.xlu0 %2539
        %vm2541 = vcmask 523264
        %v2542 = vsel %vm2541, %v2536, %v2538
        %v2543 = vsel %vm2541, %v2538, %v2540
        %v2578 = vunpack.c.l.b16 %v2503
        %v2579 = vunpack.c.h.b16 %v2503
        %v2580 = vunpack.c.l.b16 %v2504
        %v2581 = vunpack.c.h.b16 %v2504
        %v2582 = vunpack.c.l.b16 %v2505
        %v2583 = vunpack.c.h.b16 %v2505
        %v2584 = vunpack.c.l.b16 %v2506
        %v2585 = vunpack.c.h.b16 %v2506
        %v2586 = vunpack.c.l.b16 %v2507
        %v2587 = vunpack.c.h.b16 %v2507
        %v2588 = vunpack.c.l.b16 %v2508
        %v2589 = vunpack.c.h.b16 %v2508
        %v2590 = vunpack.c.l.b16 %v2509
        %v2591 = vunpack.c.h.b16 %v2509
        %v2592 = vunpack.c.l.b16 %v2510
        %v2593 = vunpack.c.h.b16 %v2510
        %v2594 = vunpack.c.l.b16 %v2511
        %v2595 = vunpack.c.h.b16 %v2511
        %v2596 = vunpack.c.l.b16 %v2512
        %v2597 = vunpack.c.h.b16 %v2512
        %v2598 = vunpack.c.l.b16 %v2513
        %v2599 = vunpack.c.h.b16 %v2513
        %v2600 = vunpack.c.l.b16 %v2514
        %v2601 = vunpack.c.h.b16 %v2514
        %v2602 = vunpack.c.l.b16 %v2515
        %v2603 = vunpack.c.h.b16 %v2515
        %v2604 = vunpack.c.l.b16 %v2516
        %v2605 = vunpack.c.h.b16 %v2516
        %v2606 = vunpack.c.l.b16 %v2517
        %v2607 = vunpack.c.h.b16 %v2517
        %v2608 = vunpack.c.l.b16 %v2518
        %v2609 = vunpack.c.h.b16 %v2518
        %v2610 = vunpack.c.l.b16 %v2519
        %v2611 = vunpack.c.h.b16 %v2519
        %v2612 = vunpack.c.l.b16 %v2520
        %v2613 = vunpack.c.h.b16 %v2520
        %v2614 = vunpack.c.l.b16 %v2521
        %v2615 = vunpack.c.h.b16 %v2521
        %v2616 = vunpack.c.l.b16 %v2522
        %v2617 = vunpack.c.h.b16 %v2522
        %v2618 = vunpack.c.l.b16 %v2523
        %v2619 = vunpack.c.h.b16 %v2523
        %v2620 = vunpack.c.l.b16 %v2524
        %v2621 = vunpack.c.h.b16 %v2524
        %v2622 = vunpack.c.l.b16 %v2525
        %v2623 = vunpack.c.h.b16 %v2525
        %v2624 = vunpack.c.l.b16 %v2526
        %v2625 = vunpack.c.h.b16 %v2526
        %v2626 = vunpack.c.l.b16 %v2527
        %v2627 = vunpack.c.h.b16 %v2527
        %v2628 = vunpack.c.l.b16 %v2528
        %v2629 = vunpack.c.h.b16 %v2528
        %v2630 = vunpack.c.l.b16 %v2529
        %v2631 = vunpack.c.h.b16 %v2529
        %v2632 = vunpack.c.l.b16 %v2530
        %v2633 = vunpack.c.h.b16 %v2530
        %v2634 = vunpack.c.l.b16 %v2531
        %v2635 = vunpack.c.h.b16 %v2531
        %v2636 = vunpack.c.l.b16 %v2532
        %v2637 = vunpack.c.h.b16 %v2532
        %v2638 = vunpack.c.l.b16 %v2533
        %v2639 = vunpack.c.h.b16 %v2533
        %v2640 = vunpack.c.l.b16 %v2534
        %v2641 = vunpack.c.h.b16 %v2534
        %v2642 = vpack.c.b16 %v2580, %v2578
        %v2643 = vpack.c.b16 %v2581, %v2579
        %v2644 = vpack.c.b16 %v2584, %v2582
        %v2645 = vpack.c.b16 %v2585, %v2583
        %v2646 = vpack.c.b16 %v2588, %v2586
        %v2647 = vpack.c.b16 %v2589, %v2587
        %v2648 = vpack.c.b16 %v2592, %v2590
        %v2649 = vpack.c.b16 %v2593, %v2591
        %v2650 = vpack.c.b16 %v2596, %v2594
        %v2651 = vpack.c.b16 %v2597, %v2595
        %v2652 = vpack.c.b16 %v2600, %v2598
        %v2653 = vpack.c.b16 %v2601, %v2599
        %v2654 = vpack.c.b16 %v2604, %v2602
        %v2655 = vpack.c.b16 %v2605, %v2603
        %v2656 = vpack.c.b16 %v2608, %v2606
        %v2657 = vpack.c.b16 %v2609, %v2607
        %v2658 = vpack.c.b16 %v2612, %v2610
        %v2659 = vpack.c.b16 %v2613, %v2611
        %v2660 = vpack.c.b16 %v2616, %v2614
        %v2661 = vpack.c.b16 %v2617, %v2615
        %v2662 = vpack.c.b16 %v2620, %v2618
        %v2663 = vpack.c.b16 %v2621, %v2619
        %v2664 = vpack.c.b16 %v2624, %v2622
        %v2665 = vpack.c.b16 %v2625, %v2623
        %v2666 = vpack.c.b16 %v2628, %v2626
        %v2667 = vpack.c.b16 %v2629, %v2627
        %v2668 = vpack.c.b16 %v2632, %v2630
        %v2669 = vpack.c.b16 %v2633, %v2631
        %v2670 = vpack.c.b16 %v2636, %v2634
        %v2671 = vpack.c.b16 %v2637, %v2635
        %v2672 = vpack.c.b16 %v2640, %v2638
        %v2673 = vpack.c.b16 %v2641, %v2639
        %2706 = vmatpush.bf16.msra.mxu0 %v2656
        %2707 = vmatpush.bf16.msra.mxu0 %v2654
        %2708 = vmatpush.bf16.msra.mxu0 %v2652
        %2709 = vmatpush.bf16.msra.mxu0 %v2650
        %2710 = vmatpush.bf16.msra.mxu0 %v2648
        %2711 = vmatpush.bf16.msra.mxu0 %v2646
        %2712 = vmatpush.bf16.msra.mxu0 %v2644
        %2713 = vmatpush.bf16.msra.mxu0 %v2642
        %2714 = vmatmul.bf16.gmra.mxu0 %v2542
        %v2715 = vpop.f32.mrf.mxu0
        %v2716 = vadd.f32 0.0, %v2715
        %v2717 = vpop.f32.mrf.mxu0
        %2718 = vdwg.mxu0
        %2719 = vmatpush.bf16.msra.mxu0 %v2672
        %2720 = vmatpush.bf16.msra.mxu0 %v2670
        %2721 = vmatpush.bf16.msra.mxu0 %v2668
        %2722 = vmatpush.bf16.msra.mxu0 %v2666
        %2723 = vmatpush.bf16.msra.mxu0 %v2664
        %2724 = vmatpush.bf16.msra.mxu0 %v2662
        %2725 = vmatpush.bf16.msra.mxu0 %v2660
        %2726 = vmatpush.bf16.msra.mxu0 %v2658
        %2727 = vmatmul.bf16.gmra.mxu0 %v2543
        %v2728 = vpop.f32.mrf.mxu0
        %v2729 = vadd.f32 %v2716, %v2728
        %v2730 = vpop.f32.mrf.mxu0
        %2731 = vdwg.mxu0
        %2732 = vmatpush.bf16.msra.mxu0 %v2657
        %2733 = vmatpush.bf16.msra.mxu0 %v2655
        %2734 = vmatpush.bf16.msra.mxu0 %v2653
        %2735 = vmatpush.bf16.msra.mxu0 %v2651
        %2736 = vmatpush.bf16.msra.mxu0 %v2649
        %2737 = vmatpush.bf16.msra.mxu0 %v2647
        %2738 = vmatpush.bf16.msra.mxu0 %v2645
        %2739 = vmatpush.bf16.msra.mxu0 %v2643
        %2740 = vmatmul.bf16.gmra.mxu0 %v2542
        %v2741 = vpop.f32.mrf.mxu0
        %v2742 = vadd.f32 0.0, %v2741
        %v2743 = vpop.f32.mrf.mxu0
        %2744 = vdwg.mxu0
        %2745 = vmatpush.bf16.msra.mxu0 %v2673
        %2746 = vmatpush.bf16.msra.mxu0 %v2671
        %2747 = vmatpush.bf16.msra.mxu0 %v2669
        %2748 = vmatpush.bf16.msra.mxu0 %v2667
        %2749 = vmatpush.bf16.msra.mxu0 %v2665
        %2750 = vmatpush.bf16.msra.mxu0 %v2663
        %2751 = vmatpush.bf16.msra.mxu0 %v2661
        %2752 = vmatpush.bf16.msra.mxu0 %v2659
        %2753 = vmatmul.bf16.gmra.mxu0 %v2543
        %v2754 = vpop.f32.mrf.mxu0
        %v2755 = vadd.f32 %v2742, %v2754
        %v2756 = vpop.f32.mrf.mxu0
        %2757 = vdwg.mxu0
        %v2758 = vadd.f32 %v2473, %v2729
        %v2759 = vadd.f32 %v2499, %v2755
        %v2760 = vld [vmem:[#allocation3] sm:$0xff]
        %v2761 = vld [vmem:[#allocation3 + $0xc] sm:$0x11]
        %s2762 = scalar_lea.vmem [#allocation11], 768
        %v2763 = vld [vmem:[%s2762] sm:$0xff]
        %v2764 = vld [vmem:[%s2762 + $0x8] sm:$0xff]
        %v2765 = vld [vmem:[%s2762 + $0x10] sm:$0xff]
        %v2766 = vld [vmem:[%s2762 + $0x18] sm:$0xff]
        %v2767 = vld [vmem:[%s2762 + $0x20] sm:$0xff]
        %v2768 = vld [vmem:[%s2762 + $0x28] sm:$0xff]
        %v2769 = vld [vmem:[%s2762 + $0x30] sm:$0xff]
        %v2770 = vld [vmem:[%s2762 + $0x38] sm:$0xff]
        %v2771 = vld [vmem:[%s2762 + $0x40] sm:$0xff]
        %v2772 = vld [vmem:[%s2762 + $0x48] sm:$0xff]
        %v2773 = vld [vmem:[%s2762 + $0x50] sm:$0xff]
        %v2774 = vld [vmem:[%s2762 + $0x58] sm:$0xff]
        %v2775 = vld [vmem:[%s2762 + $0x60] sm:$0xff]
        %v2776 = vld [vmem:[%s2762 + $0x68] sm:$0xff]
        %v2777 = vld [vmem:[%s2762 + $0x70] sm:$0xff]
        %v2778 = vld [vmem:[%s2762 + $0x78] sm:$0xff]
        %v2779 = vld [vmem:[%s2762 + $0x80] sm:$0xff]
        %v2780 = vld [vmem:[%s2762 + $0x88] sm:$0xff]
        %v2781 = vld [vmem:[%s2762 + $0x90] sm:$0xff]
        %v2782 = vld [vmem:[%s2762 + $0x98] sm:$0xff]
        %v2783 = vld [vmem:[%s2762 + $0xa0] sm:$0xff]
        %v2784 = vld [vmem:[%s2762 + $0xa8] sm:$0xff]
        %v2785 = vld [vmem:[%s2762 + $0xb0] sm:$0xff]
        %v2786 = vld [vmem:[%s2762 + $0xb8] sm:$0xff]
        %v2787 = vld [vmem:[%s2762 + $0xc0] sm:$0xff]
        %v2788 = vld [vmem:[%s2762 + $0xc8] sm:$0xff]
        %v2789 = vld [vmem:[%s2762 + $0xd0] sm:$0xff]
        %v2790 = vld [vmem:[%s2762 + $0xd8] sm:$0xff]
        %v2791 = vld [vmem:[%s2762 + $0xe0] sm:$0xff]
        %v2792 = vld [vmem:[%s2762 + $0xe8] sm:$0xff]
        %v2793 = vld [vmem:[%s2762 + $0xf0] sm:$0xff]
        %v2794 = vld [vmem:[%s2762 + $0xf8] sm:$0xff]
        %v2797 = vunpack.c.l.b16 %v2760
        %v2798 = vunpack.c.h.b16 %v2760
        %v2799 = vunpack.c.l.b16 %v2761
        %v2800 = vunpack.c.h.b16 %v2761
        %v2801 = vpack.c.b16 %v2799, %v2797
        %v2802 = vpack.c.b16 %v2800, %v2798
        %v2804 = vshrl.u32 %v2801, 16
        %v2806 = vshll.u32 %v2801, 16
        %v2808 = vrot.slane %v2806, 1
        %v2809 = vor.u32 %v2804, %v2808
        %v2811 = vshrl.u32 %v2802, 16
        %v2813 = vshll.u32 %v2802, 16
        %v2815 = vrot.slane %v2813, 1
        %v2816 = vor.u32 %v2811, %v2815
        %v2851 = vunpack.c.l.b16 %v2763
        %v2852 = vunpack.c.h.b16 %v2763
        %v2853 = vunpack.c.l.b16 %v2764
        %v2854 = vunpack.c.h.b16 %v2764
        %v2855 = vunpack.c.l.b16 %v2765
        %v2856 = vunpack.c.h.b16 %v2765
        %v2857 = vunpack.c.l.b16 %v2766
        %v2858 = vunpack.c.h.b16 %v2766
        %v2859 = vunpack.c.l.b16 %v2767
        %v2860 = vunpack.c.h.b16 %v2767
        %v2861 = vunpack.c.l.b16 %v2768
        %v2862 = vunpack.c.h.b16 %v2768
        %v2863 = vunpack.c.l.b16 %v2769
        %v2864 = vunpack.c.h.b16 %v2769
        %v2865 = vunpack.c.l.b16 %v2770
        %v2866 = vunpack.c.h.b16 %v2770
        %v2867 = vunpack.c.l.b16 %v2771
        %v2868 = vunpack.c.h.b16 %v2771
        %v2869 = vunpack.c.l.b16 %v2772
        %v2870 = vunpack.c.h.b16 %v2772
        %v2871 = vunpack.c.l.b16 %v2773
        %v2872 = vunpack.c.h.b16 %v2773
        %v2873 = vunpack.c.l.b16 %v2774
        %v2874 = vunpack.c.h.b16 %v2774
        %v2875 = vunpack.c.l.b16 %v2775
        %v2876 = vunpack.c.h.b16 %v2775
        %v2877 = vunpack.c.l.b16 %v2776
        %v2878 = vunpack.c.h.b16 %v2776
        %v2879 = vunpack.c.l.b16 %v2777
        %v2880 = vunpack.c.h.b16 %v2777
        %v2881 = vunpack.c.l.b16 %v2778
        %v2882 = vunpack.c.h.b16 %v2778
        %v2883 = vunpack.c.l.b16 %v2779
        %v2884 = vunpack.c.h.b16 %v2779
        %v2885 = vunpack.c.l.b16 %v2780
        %v2886 = vunpack.c.h.b16 %v2780
        %v2887 = vunpack.c.l.b16 %v2781
        %v2888 = vunpack.c.h.b16 %v2781
        %v2889 = vunpack.c.l.b16 %v2782
        %v2890 = vunpack.c.h.b16 %v2782
        %v2891 = vunpack.c.l.b16 %v2783
        %v2892 = vunpack.c.h.b16 %v2783
        %v2893 = vunpack.c.l.b16 %v2784
        %v2894 = vunpack.c.h.b16 %v2784
        %v2895 = vunpack.c.l.b16 %v2785
        %v2896 = vunpack.c.h.b16 %v2785
        %v2897 = vunpack.c.l.b16 %v2786
        %v2898 = vunpack.c.h.b16 %v2786
        %v2899 = vunpack.c.l.b16 %v2787
        %v2900 = vunpack.c.h.b16 %v2787
        %v2901 = vunpack.c.l.b16 %v2788
        %v2902 = vunpack.c.h.b16 %v2788
        %v2903 = vunpack.c.l.b16 %v2789
        %v2904 = vunpack.c.h.b16 %v2789
        %v2905 = vunpack.c.l.b16 %v2790
        %v2906 = vunpack.c.h.b16 %v2790
        %v2907 = vunpack.c.l.b16 %v2791
        %v2908 = vunpack.c.h.b16 %v2791
        %v2909 = vunpack.c.l.b16 %v2792
        %v2910 = vunpack.c.h.b16 %v2792
        %v2911 = vunpack.c.l.b16 %v2793
        %v2912 = vunpack.c.h.b16 %v2793
        %v2913 = vunpack.c.l.b16 %v2794
        %v2914 = vunpack.c.h.b16 %v2794
        %v2915 = vpack.c.b16 %v2853, %v2851
        %v2916 = vpack.c.b16 %v2854, %v2852
        %v2917 = vpack.c.b16 %v2857, %v2855
        %v2918 = vpack.c.b16 %v2858, %v2856
        %v2919 = vpack.c.b16 %v2861, %v2859
        %v2920 = vpack.c.b16 %v2862, %v2860
        %v2921 = vpack.c.b16 %v2865, %v2863
        %v2922 = vpack.c.b16 %v2866, %v2864
        %v2923 = vpack.c.b16 %v2869, %v2867
        %v2924 = vpack.c.b16 %v2870, %v2868
        %v2925 = vpack.c.b16 %v2873, %v2871
        %v2926 = vpack.c.b16 %v2874, %v2872
        %v2927 = vpack.c.b16 %v2877, %v2875
        %v2928 = vpack.c.b16 %v2878, %v2876
        %v2929 = vpack.c.b16 %v2881, %v2879
        %v2930 = vpack.c.b16 %v2882, %v2880
        %v2931 = vpack.c.b16 %v2885, %v2883
        %v2932 = vpack.c.b16 %v2886, %v2884
        %v2933 = vpack.c.b16 %v2889, %v2887
        %v2934 = vpack.c.b16 %v2890, %v2888
        %v2935 = vpack.c.b16 %v2893, %v2891
        %v2936 = vpack.c.b16 %v2894, %v2892
        %v2937 = vpack.c.b16 %v2897, %v2895
        %v2938 = vpack.c.b16 %v2898, %v2896
        %v2939 = vpack.c.b16 %v2901, %v2899
        %v2940 = vpack.c.b16 %v2902, %v2900
        %v2941 = vpack.c.b16 %v2905, %v2903
        %v2942 = vpack.c.b16 %v2906, %v2904
        %v2943 = vpack.c.b16 %v2909, %v2907
        %v2944 = vpack.c.b16 %v2910, %v2908
        %v2945 = vpack.c.b16 %v2913, %v2911
        %v2946 = vpack.c.b16 %v2914, %v2912
        %2979 = vmatpush.bf16.msra.mxu0 %v2929
        %2980 = vmatpush.bf16.msra.mxu0 %v2927
        %2981 = vmatpush.bf16.msra.mxu0 %v2925
        %2982 = vmatpush.bf16.msra.mxu0 %v2923
        %2983 = vmatpush.bf16.msra.mxu0 %v2921
        %2984 = vmatpush.bf16.msra.mxu0 %v2919
        %2985 = vmatpush.bf16.msra.mxu0 %v2917
        %2986 = vmatpush.bf16.msra.mxu0 %v2915
        %2987 = vmatmul.bf16.gmra.mxu0 %v2809
        %v2988 = vpop.f32.mrf.mxu0
        %v2989 = vadd.f32 0.0, %v2988
        %v2990 = vpop.f32.mrf.mxu0
        %2991 = vdwg.mxu0
        %2992 = vmatpush.bf16.msra.mxu0 %v2945
        %2993 = vmatpush.bf16.msra.mxu0 %v2943
        %2994 = vmatpush.bf16.msra.mxu0 %v2941
        %2995 = vmatpush.bf16.msra.mxu0 %v2939
        %2996 = vmatpush.bf16.msra.mxu0 %v2937
        %2997 = vmatpush.bf16.msra.mxu0 %v2935
        %2998 = vmatpush.bf16.msra.mxu0 %v2933
        %2999 = vmatpush.bf16.msra.mxu0 %v2931
        %3000 = vmatmul.bf16.gmra.mxu0 %v2816
        %v3001 = vpop.f32.mrf.mxu0
        %v3002 = vadd.f32 %v2989, %v3001
        %v3003 = vpop.f32.mrf.mxu0
        %3004 = vdwg.mxu0
        %3005 = vmatpush.bf16.msra.mxu0 %v2930
        %3006 = vmatpush.bf16.msra.mxu0 %v2928
        %3007 = vmatpush.bf16.msra.mxu0 %v2926
        %3008 = vmatpush.bf16.msra.mxu0 %v2924
        %3009 = vmatpush.bf16.msra.mxu0 %v2922
        %3010 = vmatpush.bf16.msra.mxu0 %v2920
        %3011 = vmatpush.bf16.msra.mxu0 %v2918
        %3012 = vmatpush.bf16.msra.mxu0 %v2916
        %3013 = vmatmul.bf16.gmra.mxu0 %v2809
        %v3014 = vpop.f32.mrf.mxu0
        %v3015 = vadd.f32 0.0, %v3014
        %v3016 = vpop.f32.mrf.mxu0
        %3017 = vdwg.mxu0
        %3018 = vmatpush.bf16.msra.mxu0 %v2946
        %3019 = vmatpush.bf16.msra.mxu0 %v2944
        %3020 = vmatpush.bf16.msra.mxu0 %v2942
        %3021 = vmatpush.bf16.msra.mxu0 %v2940
        %3022 = vmatpush.bf16.msra.mxu0 %v2938
        %3023 = vmatpush.bf16.msra.mxu0 %v2936
        %3024 = vmatpush.bf16.msra.mxu0 %v2934
        %3025 = vmatpush.bf16.msra.mxu0 %v2932
        %3026 = vmatmul.bf16.gmra.mxu0 %v2816
        %v3027 = vpop.f32.mrf.mxu0
        %v3028 = vadd.f32 %v3015, %v3027
        %v3029 = vpop.f32.mrf.mxu0
        %3030 = vdwg.mxu0
        %v3031 = vadd.f32 %v2758, %v3002
        %v3032 = vadd.f32 %v2759, %v3028
        %v3033 = vld [vmem:[#allocation3] sm:$0xff]
        %v3034 = vld [vmem:[#allocation3 + $0x8] sm:$0xf]
        %v3035 = vld [vmem:[#allocation3 + $0xc] sm:$0x11]
        %v3036 = vld [vmem:[#allocation3 + $0x14] sm:$0x1]
        %s3037 = scalar_lea.vmem [#allocation11], 1024
        %v3038 = vld [vmem:[%s3037] sm:$0xff]
        %v3039 = vld [vmem:[%s3037 + $0x8] sm:$0xff]
        %v3040 = vld [vmem:[%s3037 + $0x10] sm:$0xff]
        %v3041 = vld [vmem:[%s3037 + $0x18] sm:$0xff]
        %v3042 = vld [vmem:[%s3037 + $0x20] sm:$0xff]
        %v3043 = vld [vmem:[%s3037 + $0x28] sm:$0xff]
        %v3044 = vld [vmem:[%s3037 + $0x30] sm:$0xff]
        %v3045 = vld [vmem:[%s3037 + $0x38] sm:$0xff]
        %v3046 = vld [vmem:[%s3037 + $0x40] sm:$0xff]
        %v3047 = vld [vmem:[%s3037 + $0x48] sm:$0xff]
        %v3048 = vld [vmem:[%s3037 + $0x50] sm:$0xff]
        %v3049 = vld [vmem:[%s3037 + $0x58] sm:$0xff]
        %v3050 = vld [vmem:[%s3037 + $0x60] sm:$0xff]
        %v3051 = vld [vmem:[%s3037 + $0x68] sm:$0xff]
        %v3052 = vld [vmem:[%s3037 + $0x70] sm:$0xff]
        %v3053 = vld [vmem:[%s3037 + $0x78] sm:$0xff]
        %v3054 = vld [vmem:[%s3037 + $0x80] sm:$0xff]
        %v3055 = vld [vmem:[%s3037 + $0x88] sm:$0xff]
        %v3056 = vld [vmem:[%s3037 + $0x90] sm:$0xff]
        %v3057 = vld [vmem:[%s3037 + $0x98] sm:$0xff]
        %v3058 = vld [vmem:[%s3037 + $0xa0] sm:$0xff]
        %v3059 = vld [vmem:[%s3037 + $0xa8] sm:$0xff]
        %v3060 = vld [vmem:[%s3037 + $0xb0] sm:$0xff]
        %v3061 = vld [vmem:[%s3037 + $0xb8] sm:$0xff]
        %v3062 = vld [vmem:[%s3037 + $0xc0] sm:$0xff]
        %v3063 = vld [vmem:[%s3037 + $0xc8] sm:$0xff]
        %v3064 = vld [vmem:[%s3037 + $0xd0] sm:$0xff]
        %v3065 = vld [vmem:[%s3037 + $0xd8] sm:$0xff]
        %v3066 = vld [vmem:[%s3037 + $0xe0] sm:$0xff]
        %v3067 = vld [vmem:[%s3037 + $0xe8] sm:$0xff]
        %v3068 = vld [vmem:[%s3037 + $0xf0] sm:$0xff]
        %v3069 = vld [vmem:[%s3037 + $0xf8] sm:$0xff]
        %v3074 = vunpack.c.l.b16 %v3033
        %v3075 = vunpack.c.h.b16 %v3033
        %v3076 = vunpack.c.l.b16 %v3034
        %v3077 = vunpack.c.l.b16 %v3035
        %v3078 = vunpack.c.h.b16 %v3035
        %v3079 = vunpack.c.l.b16 %v3036
        %v3080 = vpack.c.b16 %v3077, %v3074
        %v3081 = vpack.c.b16 %v3078, %v3075
        %v3082 = vpack.c.b16 %v3079, %v3076
        %v3084 = vshrl.u32 %v3080, 16
        %v3086 = vshll.u32 %v3080, 16
        %v3088 = vrot.slane %v3086, 1
        %v3089 = vor.u32 %v3084, %v3088
        %v3091 = vshrl.u32 %v3081, 16
        %v3093 = vshll.u32 %v3081, 16
        %v3095 = vrot.slane %v3093, 1
        %v3096 = vor.u32 %v3091, %v3095
        %v3098 = vshrl.u32 %v3082, 16
        %v3100 = vshll.u32 %v3082, 16
        %v3102 = vrot.slane %v3100, 1
        %v3103 = vor.u32 %v3098, %v3102
        %3104 = vrot.lane.b32.xlu0 %v3089, 96
        %v3105 = vpop.permute.xlu0 %3104
        %3106 = vrot.lane.b32.xlu0 %v3096, 96
        %v3107 = vpop.permute.xlu0 %3106
        %3108 = vrot.lane.b32.xlu0 %v3103, 96
        %v3109 = vpop.permute.xlu0 %3108
        %v3110 = vsel %vm989, %v3105, %v3107
        %v3111 = vsel %vm989, %v3107, %v3109
        %v3146 = vunpack.c.l.b16 %v3038
        %v3147 = vunpack.c.h.b16 %v3038
        %v3148 = vunpack.c.l.b16 %v3039
        %v3149 = vunpack.c.h.b16 %v3039
        %v3150 = vunpack.c.l.b16 %v3040
        %v3151 = vunpack.c.h.b16 %v3040
        %v3152 = vunpack.c.l.b16 %v3041
        %v3153 = vunpack.c.h.b16 %v3041
        %v3154 = vunpack.c.l.b16 %v3042
        %v3155 = vunpack.c.h.b16 %v3042
        %v3156 = vunpack.c.l.b16 %v3043
        %v3157 = vunpack.c.h.b16 %v3043
        %v3158 = vunpack.c.l.b16 %v3044
        %v3159 = vunpack.c.h.b16 %v3044
        %v3160 = vunpack.c.l.b16 %v3045
        %v3161 = vunpack.c.h.b16 %v3045
        %v3162 = vunpack.c.l.b16 %v3046
        %v3163 = vunpack.c.h.b16 %v3046
        %v3164 = vunpack.c.l.b16 %v3047
        %v3165 = vunpack.c.h.b16 %v3047
        %v3166 = vunpack.c.l.b16 %v3048
        %v3167 = vunpack.c.h.b16 %v3048
        %v3168 = vunpack.c.l.b16 %v3049
        %v3169 = vunpack.c.h.b16 %v3049
        %v3170 = vunpack.c.l.b16 %v3050
        %v3171 = vunpack.c.h.b16 %v3050
        %v3172 = vunpack.c.l.b16 %v3051
        %v3173 = vunpack.c.h.b16 %v3051
        %v3174 = vunpack.c.l.b16 %v3052
        %v3175 = vunpack.c.h.b16 %v3052
        %v3176 = vunpack.c.l.b16 %v3053
        %v3177 = vunpack.c.h.b16 %v3053
        %v3178 = vunpack.c.l.b16 %v3054
        %v3179 = vunpack.c.h.b16 %v3054
        %v3180 = vunpack.c.l.b16 %v3055
        %v3181 = vunpack.c.h.b16 %v3055
        %v3182 = vunpack.c.l.b16 %v3056
        %v3183 = vunpack.c.h.b16 %v3056
        %v3184 = vunpack.c.l.b16 %v3057
        %v3185 = vunpack.c.h.b16 %v3057
        %v3186 = vunpack.c.l.b16 %v3058
        %v3187 = vunpack.c.h.b16 %v3058
        %v3188 = vunpack.c.l.b16 %v3059
        %v3189 = vunpack.c.h.b16 %v3059
        %v3190 = vunpack.c.l.b16 %v3060
        %v3191 = vunpack.c.h.b16 %v3060
        %v3192 = vunpack.c.l.b16 %v3061
        %v3193 = vunpack.c.h.b16 %v3061
        %v3194 = vunpack.c.l.b16 %v3062
        %v3195 = vunpack.c.h.b16 %v3062
        %v3196 = vunpack.c.l.b16 %v3063
        %v3197 = vunpack.c.h.b16 %v3063
        %v3198 = vunpack.c.l.b16 %v3064
        %v3199 = vunpack.c.h.b16 %v3064
        %v3200 = vunpack.c.l.b16 %v3065
        %v3201 = vunpack.c.h.b16 %v3065
        %v3202 = vunpack.c.l.b16 %v3066
        %v3203 = vunpack.c.h.b16 %v3066
        %v3204 = vunpack.c.l.b16 %v3067
        %v3205 = vunpack.c.h.b16 %v3067
        %v3206 = vunpack.c.l.b16 %v3068
        %v3207 = vunpack.c.h.b16 %v3068
        %v3208 = vunpack.c.l.b16 %v3069
        %v3209 = vunpack.c.h.b16 %v3069
        %v3210 = vpack.c.b16 %v3148, %v3146
        %v3211 = vpack.c.b16 %v3149, %v3147
        %v3212 = vpack.c.b16 %v3152, %v3150
        %v3213 = vpack.c.b16 %v3153, %v3151
        %v3214 = vpack.c.b16 %v3156, %v3154
        %v3215 = vpack.c.b16 %v3157, %v3155
        %v3216 = vpack.c.b16 %v3160, %v3158
        %v3217 = vpack.c.b16 %v3161, %v3159
        %v3218 = vpack.c.b16 %v3164, %v3162
        %v3219 = vpack.c.b16 %v3165, %v3163
        %v3220 = vpack.c.b16 %v3168, %v3166
        %v3221 = vpack.c.b16 %v3169, %v3167
        %v3222 = vpack.c.b16 %v3172, %v3170
        %v3223 = vpack.c.b16 %v3173, %v3171
        %v3224 = vpack.c.b16 %v3176, %v3174
        %v3225 = vpack.c.b16 %v3177, %v3175
        %v3226 = vpack.c.b16 %v3180, %v3178
        %v3227 = vpack.c.b16 %v3181, %v3179
        %v3228 = vpack.c.b16 %v3184, %v3182
        %v3229 = vpack.c.b16 %v3185, %v3183
        %v3230 = vpack.c.b16 %v3188, %v3186
        %v3231 = vpack.c.b16 %v3189, %v3187
        %v3232 = vpack.c.b16 %v3192, %v3190
        %v3233 = vpack.c.b16 %v3193, %v3191
        %v3234 = vpack.c.b16 %v3196, %v3194
        %v3235 = vpack.c.b16 %v3197, %v3195
        %v3236 = vpack.c.b16 %v3200, %v3198
        %v3237 = vpack.c.b16 %v3201, %v3199
        %v3238 = vpack.c.b16 %v3204, %v3202
        %v3239 = vpack.c.b16 %v3205, %v3203
        %v3240 = vpack.c.b16 %v3208, %v3206
        %v3241 = vpack.c.b16 %v3209, %v3207
        %3274 = vmatpush.bf16.msra.mxu0 %v3224
        %3275 = vmatpush.bf16.msra.mxu0 %v3222
        %3276 = vmatpush.bf16.msra.mxu0 %v3220
        %3277 = vmatpush.bf16.msra.mxu0 %v3218
        %3278 = vmatpush.bf16.msra.mxu0 %v3216
        %3279 = vmatpush.bf16.msra.mxu0 %v3214
        %3280 = vmatpush.bf16.msra.mxu0 %v3212
        %3281 = vmatpush.bf16.msra.mxu0 %v3210
        %3282 = vmatmul.bf16.gmra.mxu0 %v3110
        %v3283 = vpop.f32.mrf.mxu0
        %v3284 = vadd.f32 0.0, %v3283
        %v3285 = vpop.f32.mrf.mxu0
        %3286 = vdwg.mxu0
        %3287 = vmatpush.bf16.msra.mxu0 %v3240
        %3288 = vmatpush.bf16.msra.mxu0 %v3238
        %3289 = vmatpush.bf16.msra.mxu0 %v3236
        %3290 = vmatpush.bf16.msra.mxu0 %v3234
        %3291 = vmatpush.bf16.msra.mxu0 %v3232
        %3292 = vmatpush.bf16.msra.mxu0 %v3230
        %3293 = vmatpush.bf16.msra.mxu0 %v3228
        %3294 = vmatpush.bf16.msra.mxu0 %v3226
        %3295 = vmatmul.bf16.gmra.mxu0 %v3111
        %v3296 = vpop.f32.mrf.mxu0
        %v3297 = vadd.f32 %v3284, %v3296
        %v3298 = vpop.f32.mrf.mxu0
        %3299 = vdwg.mxu0
        %3300 = vmatpush.bf16.msra.mxu0 %v3225
        %3301 = vmatpush.bf16.msra.mxu0 %v3223
        %3302 = vmatpush.bf16.msra.mxu0 %v3221
        %3303 = vmatpush.bf16.msra.mxu0 %v3219
        %3304 = vmatpush.bf16.msra.mxu0 %v3217
        %3305 = vmatpush.bf16.msra.mxu0 %v3215
        %3306 = vmatpush.bf16.msra.mxu0 %v3213
        %3307 = vmatpush.bf16.msra.mxu0 %v3211
        %3308 = vmatmul.bf16.gmra.mxu0 %v3110
        %v3309 = vpop.f32.mrf.mxu0
        %v3310 = vadd.f32 0.0, %v3309
        %v3311 = vpop.f32.mrf.mxu0
        %3312 = vdwg.mxu0
        %3313 = vmatpush.bf16.msra.mxu0 %v3241
        %3314 = vmatpush.bf16.msra.mxu0 %v3239
        %3315 = vmatpush.bf16.msra.mxu0 %v3237
        %3316 = vmatpush.bf16.msra.mxu0 %v3235
        %3317 = vmatpush.bf16.msra.mxu0 %v3233
        %3318 = vmatpush.bf16.msra.mxu0 %v3231
        %3319 = vmatpush.bf16.msra.mxu0 %v3229
        %3320 = vmatpush.bf16.msra.mxu0 %v3227
        %3321 = vmatmul.bf16.gmra.mxu0 %v3111
        %v3322 = vpop.f32.mrf.mxu0
        %v3323 = vadd.f32 %v3310, %v3322
        %v3324 = vpop.f32.mrf.mxu0
        %3325 = vdwg.mxu0
        %v3326 = vadd.f32 %v3031, %v3297
        %v3327 = vadd.f32 %v3032, %v3323
        %s3328 = scalar_lea.vmem [#allocation11], 1280
        %v3329 = vld [vmem:[%s3328] sm:$0xff]
        %v3330 = vld [vmem:[%s3328 + $0x8] sm:$0xff]
        %v3331 = vld [vmem:[%s3328 + $0x10] sm:$0xff]
        %v3332 = vld [vmem:[%s3328 + $0x18] sm:$0xff]
        %v3333 = vld [vmem:[%s3328 + $0x20] sm:$0xff]
        %v3334 = vld [vmem:[%s3328 + $0x28] sm:$0xff]
        %v3335 = vld [vmem:[%s3328 + $0x30] sm:$0xff]
        %v3336 = vld [vmem:[%s3328 + $0x38] sm:$0xff]
        %v3337 = vld [vmem:[%s3328 + $0x40] sm:$0xff]
        %v3338 = vld [vmem:[%s3328 + $0x48] sm:$0xff]
        %v3339 = vld [vmem:[%s3328 + $0x50] sm:$0xff]
        %v3340 = vld [vmem:[%s3328 + $0x58] sm:$0xff]
        %v3341 = vld [vmem:[%s3328 + $0x60] sm:$0xff]
        %v3342 = vld [vmem:[%s3328 + $0x68] sm:$0xff]
        %v3343 = vld [vmem:[%s3328 + $0x70] sm:$0xff]
        %v3344 = vld [vmem:[%s3328 + $0x78] sm:$0xff]
        %v3345 = vld [vmem:[%s3328 + $0x80] sm:$0xff]
        %v3346 = vld [vmem:[%s3328 + $0x88] sm:$0xff]
        %v3347 = vld [vmem:[%s3328 + $0x90] sm:$0xff]
        %v3348 = vld [vmem:[%s3328 + $0x98] sm:$0xff]
        %v3349 = vld [vmem:[%s3328 + $0xa0] sm:$0xff]
        %v3350 = vld [vmem:[%s3328 + $0xa8] sm:$0xff]
        %v3351 = vld [vmem:[%s3328 + $0xb0] sm:$0xff]
        %v3352 = vld [vmem:[%s3328 + $0xb8] sm:$0xff]
        %v3353 = vld [vmem:[%s3328 + $0xc0] sm:$0xff]
        %v3354 = vld [vmem:[%s3328 + $0xc8] sm:$0xff]
        %v3355 = vld [vmem:[%s3328 + $0xd0] sm:$0xff]
        %v3356 = vld [vmem:[%s3328 + $0xd8] sm:$0xff]
        %v3357 = vld [vmem:[%s3328 + $0xe0] sm:$0xff]
        %v3358 = vld [vmem:[%s3328 + $0xe8] sm:$0xff]
        %v3359 = vld [vmem:[%s3328 + $0xf0] sm:$0xff]
        %v3360 = vld [vmem:[%s3328 + $0xf8] sm:$0xff]
        %3361 = vrot.lane.b32.xlu0 %v3089, 64
        %v3362 = vpop.permute.xlu0 %3361
        %3363 = vrot.lane.b32.xlu0 %v3096, 64
        %v3364 = vpop.permute.xlu0 %3363
        %3365 = vrot.lane.b32.xlu0 %v3103, 64
        %v3366 = vpop.permute.xlu0 %3365
        %v3367 = vsel %vm2541, %v3362, %v3364
        %v3368 = vsel %vm2541, %v3364, %v3366
        %v3403 = vunpack.c.l.b16 %v3329
        %v3404 = vunpack.c.h.b16 %v3329
        %v3405 = vunpack.c.l.b16 %v3330
        %v3406 = vunpack.c.h.b16 %v3330
        %v3407 = vunpack.c.l.b16 %v3331
        %v3408 = vunpack.c.h.b16 %v3331
        %v3409 = vunpack.c.l.b16 %v3332
        %v3410 = vunpack.c.h.b16 %v3332
        %v3411 = vunpack.c.l.b16 %v3333
        %v3412 = vunpack.c.h.b16 %v3333
        %v3413 = vunpack.c.l.b16 %v3334
        %v3414 = vunpack.c.h.b16 %v3334
        %v3415 = vunpack.c.l.b16 %v3335
        %v3416 = vunpack.c.h.b16 %v3335
        %v3417 = vunpack.c.l.b16 %v3336
        %v3418 = vunpack.c.h.b16 %v3336
        %v3419 = vunpack.c.l.b16 %v3337
        %v3420 = vunpack.c.h.b16 %v3337
        %v3421 = vunpack.c.l.b16 %v3338
        %v3422 = vunpack.c.h.b16 %v3338
        %v3423 = vunpack.c.l.b16 %v3339
        %v3424 = vunpack.c.h.b16 %v3339
        %v3425 = vunpack.c.l.b16 %v3340
        %v3426 = vunpack.c.h.b16 %v3340
        %v3427 = vunpack.c.l.b16 %v3341
        %v3428 = vunpack.c.h.b16 %v3341
        %v3429 = vunpack.c.l.b16 %v3342
        %v3430 = vunpack.c.h.b16 %v3342
        %v3431 = vunpack.c.l.b16 %v3343
        %v3432 = vunpack.c.h.b16 %v3343
        %v3433 = vunpack.c.l.b16 %v3344
        %v3434 = vunpack.c.h.b16 %v3344
        %v3435 = vunpack.c.l.b16 %v3345
        %v3436 = vunpack.c.h.b16 %v3345
        %v3437 = vunpack.c.l.b16 %v3346
        %v3438 = vunpack.c.h.b16 %v3346
        %v3439 = vunpack.c.l.b16 %v3347
        %v3440 = vunpack.c.h.b16 %v3347
        %v3441 = vunpack.c.l.b16 %v3348
        %v3442 = vunpack.c.h.b16 %v3348
        %v3443 = vunpack.c.l.b16 %v3349
        %v3444 = vunpack.c.h.b16 %v3349
        %v3445 = vunpack.c.l.b16 %v3350
        %v3446 = vunpack.c.h.b16 %v3350
        %v3447 = vunpack.c.l.b16 %v3351
        %v3448 = vunpack.c.h.b16 %v3351
        %v3449 = vunpack.c.l.b16 %v3352
        %v3450 = vunpack.c.h.b16 %v3352
        %v3451 = vunpack.c.l.b16 %v3353
        %v3452 = vunpack.c.h.b16 %v3353
        %v3453 = vunpack.c.l.b16 %v3354
        %v3454 = vunpack.c.h.b16 %v3354
        %v3455 = vunpack.c.l.b16 %v3355
        %v3456 = vunpack.c.h.b16 %v3355
        %v3457 = vunpack.c.l.b16 %v3356
        %v3458 = vunpack.c.h.b16 %v3356
        %v3459 = vunpack.c.l.b16 %v3357
        %v3460 = vunpack.c.h.b16 %v3357
        %v3461 = vunpack.c.l.b16 %v3358
        %v3462 = vunpack.c.h.b16 %v3358
        %v3463 = vunpack.c.l.b16 %v3359
        %v3464 = vunpack.c.h.b16 %v3359
        %v3465 = vunpack.c.l.b16 %v3360
        %v3466 = vunpack.c.h.b16 %v3360
        %v3467 = vpack.c.b16 %v3405, %v3403
        %v3468 = vpack.c.b16 %v3406, %v3404
        %v3469 = vpack.c.b16 %v3409, %v3407
        %v3470 = vpack.c.b16 %v3410, %v3408
        %v3471 = vpack.c.b16 %v3413, %v3411
        %v3472 = vpack.c.b16 %v3414, %v3412
        %v3473 = vpack.c.b16 %v3417, %v3415
        %v3474 = vpack.c.b16 %v3418, %v3416
        %v3475 = vpack.c.b16 %v3421, %v3419
        %v3476 = vpack.c.b16 %v3422, %v3420
        %v3477 = vpack.c.b16 %v3425, %v3423
        %v3478 = vpack.c.b16 %v3426, %v3424
        %v3479 = vpack.c.b16 %v3429, %v3427
        %v3480 = vpack.c.b16 %v3430, %v3428
        %v3481 = vpack.c.b16 %v3433, %v3431
        %v3482 = vpack.c.b16 %v3434, %v3432
        %v3483 = vpack.c.b16 %v3437, %v3435
        %v3484 = vpack.c.b16 %v3438, %v3436
        %v3485 = vpack.c.b16 %v3441, %v3439
        %v3486 = vpack.c.b16 %v3442, %v3440
        %v3487 = vpack.c.b16 %v3445, %v3443
        %v3488 = vpack.c.b16 %v3446, %v3444
        %v3489 = vpack.c.b16 %v3449, %v3447
        %v3490 = vpack.c.b16 %v3450, %v3448
        %v3491 = vpack.c.b16 %v3453, %v3451
        %v3492 = vpack.c.b16 %v3454, %v3452
        %v3493 = vpack.c.b16 %v3457, %v3455
        %v3494 = vpack.c.b16 %v3458, %v3456
        %v3495 = vpack.c.b16 %v3461, %v3459
        %v3496 = vpack.c.b16 %v3462, %v3460
        %v3497 = vpack.c.b16 %v3465, %v3463
        %v3498 = vpack.c.b16 %v3466, %v3464
        %3531 = vmatpush.bf16.msra.mxu0 %v3481
        %3532 = vmatpush.bf16.msra.mxu0 %v3479
        %3533 = vmatpush.bf16.msra.mxu0 %v3477
        %3534 = vmatpush.bf16.msra.mxu0 %v3475
        %3535 = vmatpush.bf16.msra.mxu0 %v3473
        %3536 = vmatpush.bf16.msra.mxu0 %v3471
        %3537 = vmatpush.bf16.msra.mxu0 %v3469
        %3538 = vmatpush.bf16.msra.mxu0 %v3467
        %3539 = vmatmul.bf16.gmra.mxu0 %v3367
        %v3540 = vpop.f32.mrf.mxu0
        %v3541 = vadd.f32 0.0, %v3540
        %v3542 = vpop.f32.mrf.mxu0
        %3543 = vdwg.mxu0
        %3544 = vmatpush.bf16.msra.mxu0 %v3497
        %3545 = vmatpush.bf16.msra.mxu0 %v3495
        %3546 = vmatpush.bf16.msra.mxu0 %v3493
        %3547 = vmatpush.bf16.msra.mxu0 %v3491
        %3548 = vmatpush.bf16.msra.mxu0 %v3489
        %3549 = vmatpush.bf16.msra.mxu0 %v3487
        %3550 = vmatpush.bf16.msra.mxu0 %v3485
        %3551 = vmatpush.bf16.msra.mxu0 %v3483
        %3552 = vmatmul.bf16.gmra.mxu0 %v3368
        %v3553 = vpop.f32.mrf.mxu0
        %v3554 = vadd.f32 %v3541, %v3553
        %v3555 = vpop.f32.mrf.mxu0
        %3556 = vdwg.mxu0
        %3557 = vmatpush.bf16.msra.mxu0 %v3482
        %3558 = vmatpush.bf16.msra.mxu0 %v3480
        %3559 = vmatpush.bf16.msra.mxu0 %v3478
        %3560 = vmatpush.bf16.msra.mxu0 %v3476
        %3561 = vmatpush.bf16.msra.mxu0 %v3474
        %3562 = vmatpush.bf16.msra.mxu0 %v3472
        %3563 = vmatpush.bf16.msra.mxu0 %v3470
        %3564 = vmatpush.bf16.msra.mxu0 %v3468
        %3565 = vmatmul.bf16.gmra.mxu0 %v3367
        %v3566 = vpop.f32.mrf.mxu0
        %v3567 = vadd.f32 0.0, %v3566
        %v3568 = vpop.f32.mrf.mxu0
        %3569 = vdwg.mxu0
        %3570 = vmatpush.bf16.msra.mxu0 %v3498
        %3571 = vmatpush.bf16.msra.mxu0 %v3496
        %3572 = vmatpush.bf16.msra.mxu0 %v3494
        %3573 = vmatpush.bf16.msra.mxu0 %v3492
        %3574 = vmatpush.bf16.msra.mxu0 %v3490
        %3575 = vmatpush.bf16.msra.mxu0 %v3488
        %3576 = vmatpush.bf16.msra.mxu0 %v3486
        %3577 = vmatpush.bf16.msra.mxu0 %v3484
        %3578 = vmatmul.bf16.gmra.mxu0 %v3368
        %v3579 = vpop.f32.mrf.mxu0
        %v3580 = vadd.f32 %v3567, %v3579
        %v3581 = vpop.f32.mrf.mxu0
        %3582 = vdwg.mxu0
        %v3583 = vadd.f32 %v3326, %v3554
        %v3584 = vadd.f32 %v3327, %v3580
        %v3585 = vld [vmem:[#allocation3] sm:$0xee]
        %s3586 = scalar_lea.vmem [#allocation11], 1536
        %v3587 = vld [vmem:[%s3586] sm:$0xff]
        %v3588 = vld [vmem:[%s3586 + $0x8] sm:$0xff]
        %v3589 = vld [vmem:[%s3586 + $0x10] sm:$0xff]
        %v3590 = vld [vmem:[%s3586 + $0x18] sm:$0xff]
        %v3591 = vld [vmem:[%s3586 + $0x20] sm:$0xff]
        %v3592 = vld [vmem:[%s3586 + $0x28] sm:$0xff]
        %v3593 = vld [vmem:[%s3586 + $0x30] sm:$0xff]
        %v3594 = vld [vmem:[%s3586 + $0x38] sm:$0xff]
        %v3595 = vld [vmem:[%s3586 + $0x40] sm:$0xff]
        %v3596 = vld [vmem:[%s3586 + $0x48] sm:$0xff]
        %v3597 = vld [vmem:[%s3586 + $0x50] sm:$0xff]
        %v3598 = vld [vmem:[%s3586 + $0x58] sm:$0xff]
        %v3599 = vld [vmem:[%s3586 + $0x60] sm:$0xff]
        %v3600 = vld [vmem:[%s3586 + $0x68] sm:$0xff]
        %v3601 = vld [vmem:[%s3586 + $0x70] sm:$0xff]
        %v3602 = vld [vmem:[%s3586 + $0x78] sm:$0xff]
        %v3603 = vld [vmem:[%s3586 + $0x80] sm:$0xff]
        %v3604 = vld [vmem:[%s3586 + $0x88] sm:$0xff]
        %v3605 = vld [vmem:[%s3586 + $0x90] sm:$0xff]
        %v3606 = vld [vmem:[%s3586 + $0x98] sm:$0xff]
        %v3607 = vld [vmem:[%s3586 + $0xa0] sm:$0xff]
        %v3608 = vld [vmem:[%s3586 + $0xa8] sm:$0xff]
        %v3609 = vld [vmem:[%s3586 + $0xb0] sm:$0xff]
        %v3610 = vld [vmem:[%s3586 + $0xb8] sm:$0xff]
        %v3611 = vld [vmem:[%s3586 + $0xc0] sm:$0xff]
        %v3612 = vld [vmem:[%s3586 + $0xc8] sm:$0xff]
        %v3613 = vld [vmem:[%s3586 + $0xd0] sm:$0xff]
        %v3614 = vld [vmem:[%s3586 + $0xd8] sm:$0xff]
        %v3615 = vld [vmem:[%s3586 + $0xe0] sm:$0xff]
        %v3616 = vld [vmem:[%s3586 + $0xe8] sm:$0xff]
        %v3617 = vld [vmem:[%s3586 + $0xf0] sm:$0xff]
        %v3618 = vld [vmem:[%s3586 + $0xf8] sm:$0xff]
        %v3620 = vunpack.c.l.b16 %v3585
        %v3621 = vunpack.c.h.b16 %v3585
        %v3622 = vpack.c.b16 %v2799, %v3620
        %v3623 = vpack.c.b16 %v2800, %v3621
        %v3624 = vrot.slane %v3622, 1
        %v3625 = vrot.slane %v3623, 1
        %v3660 = vunpack.c.l.b16 %v3587
        %v3661 = vunpack.c.h.b16 %v3587
        %v3662 = vunpack.c.l.b16 %v3588
        %v3663 = vunpack.c.h.b16 %v3588
        %v3664 = vunpack.c.l.b16 %v3589
        %v3665 = vunpack.c.h.b16 %v3589
        %v3666 = vunpack.c.l.b16 %v3590
        %v3667 = vunpack.c.h.b16 %v3590
        %v3668 = vunpack.c.l.b16 %v3591
        %v3669 = vunpack.c.h.b16 %v3591
        %v3670 = vunpack.c.l.b16 %v3592
        %v3671 = vunpack.c.h.b16 %v3592
        %v3672 = vunpack.c.l.b16 %v3593
        %v3673 = vunpack.c.h.b16 %v3593
        %v3674 = vunpack.c.l.b16 %v3594
        %v3675 = vunpack.c.h.b16 %v3594
        %v3676 = vunpack.c.l.b16 %v3595
        %v3677 = vunpack.c.h.b16 %v3595
        %v3678 = vunpack.c.l.b16 %v3596
        %v3679 = vunpack.c.h.b16 %v3596
        %v3680 = vunpack.c.l.b16 %v3597
        %v3681 = vunpack.c.h.b16 %v3597
        %v3682 = vunpack.c.l.b16 %v3598
        %v3683 = vunpack.c.h.b16 %v3598
        %v3684 = vunpack.c.l.b16 %v3599
        %v3685 = vunpack.c.h.b16 %v3599
        %v3686 = vunpack.c.l.b16 %v3600
        %v3687 = vunpack.c.h.b16 %v3600
        %v3688 = vunpack.c.l.b16 %v3601
        %v3689 = vunpack.c.h.b16 %v3601
        %v3690 = vunpack.c.l.b16 %v3602
        %v3691 = vunpack.c.h.b16 %v3602
        %v3692 = vunpack.c.l.b16 %v3603
        %v3693 = vunpack.c.h.b16 %v3603
        %v3694 = vunpack.c.l.b16 %v3604
        %v3695 = vunpack.c.h.b16 %v3604
        %v3696 = vunpack.c.l.b16 %v3605
        %v3697 = vunpack.c.h.b16 %v3605
        %v3698 = vunpack.c.l.b16 %v3606
        %v3699 = vunpack.c.h.b16 %v3606
        %v3700 = vunpack.c.l.b16 %v3607
        %v3701 = vunpack.c.h.b16 %v3607
        %v3702 = vunpack.c.l.b16 %v3608
        %v3703 = vunpack.c.h.b16 %v3608
        %v3704 = vunpack.c.l.b16 %v3609
        %v3705 = vunpack.c.h.b16 %v3609
        %v3706 = vunpack.c.l.b16 %v3610
        %v3707 = vunpack.c.h.b16 %v3610
        %v3708 = vunpack.c.l.b16 %v3611
        %v3709 = vunpack.c.h.b16 %v3611
        %v3710 = vunpack.c.l.b16 %v3612
        %v3711 = vunpack.c.h.b16 %v3612
        %v3712 = vunpack.c.l.b16 %v3613
        %v3713 = vunpack.c.h.b16 %v3613
        %v3714 = vunpack.c.l.b16 %v3614
        %v3715 = vunpack.c.h.b16 %v3614
        %v3716 = vunpack.c.l.b16 %v3615
        %v3717 = vunpack.c.h.b16 %v3615
        %v3718 = vunpack.c.l.b16 %v3616
        %v3719 = vunpack.c.h.b16 %v3616
        %v3720 = vunpack.c.l.b16 %v3617
        %v3721 = vunpack.c.h.b16 %v3617
        %v3722 = vunpack.c.l.b16 %v3618
        %v3723 = vunpack.c.h.b16 %v3618
        %v3724 = vpack.c.b16 %v3662, %v3660
        %v3725 = vpack.c.b16 %v3663, %v3661
        %v3726 = vpack.c.b16 %v3666, %v3664
        %v3727 = vpack.c.b16 %v3667, %v3665
        %v3728 = vpack.c.b16 %v3670, %v3668
        %v3729 = vpack.c.b16 %v3671, %v3669
        %v3730 = vpack.c.b16 %v3674, %v3672
        %v3731 = vpack.c.b16 %v3675, %v3673
        %v3732 = vpack.c.b16 %v3678, %v3676
        %v3733 = vpack.c.b16 %v3679, %v3677
        %v3734 = vpack.c.b16 %v3682, %v3680
        %v3735 = vpack.c.b16 %v3683, %v3681
        %v3736 = vpack.c.b16 %v3686, %v3684
        %v3737 = vpack.c.b16 %v3687, %v3685
        %v3738 = vpack.c.b16 %v3690, %v3688
        %v3739 = vpack.c.b16 %v3691, %v3689
        %v3740 = vpack.c.b16 %v3694, %v3692
        %v3741 = vpack.c.b16 %v3695, %v3693
        %v3742 = vpack.c.b16 %v3698, %v3696
        %v3743 = vpack.c.b16 %v3699, %v3697
        %v3744 = vpack.c.b16 %v3702, %v3700
        %v3745 = vpack.c.b16 %v3703, %v3701
        %v3746 = vpack.c.b16 %v3706, %v3704
        %v3747 = vpack.c.b16 %v3707, %v3705
        %v3748 = vpack.c.b16 %v3710, %v3708
        %v3749 = vpack.c.b16 %v3711, %v3709
        %v3750 = vpack.c.b16 %v3714, %v3712
        %v3751 = vpack.c.b16 %v3715, %v3713
        %v3752 = vpack.c.b16 %v3718, %v3716
        %v3753 = vpack.c.b16 %v3719, %v3717
        %v3754 = vpack.c.b16 %v3722, %v3720
        %v3755 = vpack.c.b16 %v3723, %v3721
        %3788 = vmatpush.bf16.msra.mxu0 %v3738
        %3789 = vmatpush.bf16.msra.mxu0 %v3736
        %3790 = vmatpush.bf16.msra.mxu0 %v3734
        %3791 = vmatpush.bf16.msra.mxu0 %v3732
        %3792 = vmatpush.bf16.msra.mxu0 %v3730
        %3793 = vmatpush.bf16.msra.mxu0 %v3728
        %3794 = vmatpush.bf16.msra.mxu0 %v3726
        %3795 = vmatpush.bf16.msra.mxu0 %v3724
        %3796 = vmatmul.bf16.gmra.mxu0 %v3624
        %v3797 = vpop.f32.mrf.mxu0
        %v3798 = vadd.f32 0.0, %v3797
        %v3799 = vpop.f32.mrf.mxu0
        %3800 = vdwg.mxu0
        %3801 = vmatpush.bf16.msra.mxu0 %v3754
        %3802 = vmatpush.bf16.msra.mxu0 %v3752
        %3803 = vmatpush.bf16.msra.mxu0 %v3750
        %3804 = vmatpush.bf16.msra.mxu0 %v3748
        %3805 = vmatpush.bf16.msra.mxu0 %v3746
        %3806 = vmatpush.bf16.msra.mxu0 %v3744
        %3807 = vmatpush.bf16.msra.mxu0 %v3742
        %3808 = vmatpush.bf16.msra.mxu0 %v3740
        %3809 = vmatmul.bf16.gmra.mxu0 %v3625
        %v3810 = vpop.f32.mrf.mxu0
        %v3811 = vadd.f32 %v3798, %v3810
        %v3812 = vpop.f32.mrf.mxu0
        %3813 = vdwg.mxu0
        %3814 = vmatpush.bf16.msra.mxu0 %v3739
        %3815 = vmatpush.bf16.msra.mxu0 %v3737
        %3816 = vmatpush.bf16.msra.mxu0 %v3735
        %3817 = vmatpush.bf16.msra.mxu0 %v3733
        %3818 = vmatpush.bf16.msra.mxu0 %v3731
        %3819 = vmatpush.bf16.msra.mxu0 %v3729
        %3820 = vmatpush.bf16.msra.mxu0 %v3727
        %3821 = vmatpush.bf16.msra.mxu0 %v3725
        %3822 = vmatmul.bf16.gmra.mxu0 %v3624
        %v3823 = vpop.f32.mrf.mxu0
        %v3824 = vadd.f32 0.0, %v3823
        %v3825 = vpop.f32.mrf.mxu0
        %3826 = vdwg.mxu0
        %3827 = vmatpush.bf16.msra.mxu0 %v3755
        %3828 = vmatpush.bf16.msra.mxu0 %v3753
        %3829 = vmatpush.bf16.msra.mxu0 %v3751
        %3830 = vmatpush.bf16.msra.mxu0 %v3749
        %3831 = vmatpush.bf16.msra.mxu0 %v3747
        %3832 = vmatpush.bf16.msra.mxu0 %v3745
        %3833 = vmatpush.bf16.msra.mxu0 %v3743
        %3834 = vmatpush.bf16.msra.mxu0 %v3741
        %3835 = vmatmul.bf16.gmra.mxu0 %v3625
        %v3836 = vpop.f32.mrf.mxu0
        %v3837 = vadd.f32 %v3824, %v3836
        %v3838 = vpop.f32.mrf.mxu0
        %3839 = vdwg.mxu0
        %v3840 = vadd.f32 %v3583, %v3811
        %v3841 = vadd.f32 %v3584, %v3837
        %v3842 = vld [vmem:[#allocation3] sm:$0xee]
        %v3843 = vld [vmem:[#allocation3 + $0x8] sm:$0xe]
        %s3844 = scalar_lea.vmem [#allocation11], 1792
        %v3845 = vld [vmem:[%s3844] sm:$0xff]
        %v3846 = vld [vmem:[%s3844 + $0x8] sm:$0xff]
        %v3847 = vld [vmem:[%s3844 + $0x10] sm:$0xff]
        %v3848 = vld [vmem:[%s3844 + $0x18] sm:$0xff]
        %v3849 = vld [vmem:[%s3844 + $0x20] sm:$0xff]
        %v3850 = vld [vmem:[%s3844 + $0x28] sm:$0xff]
        %v3851 = vld [vmem:[%s3844 + $0x30] sm:$0xff]
        %v3852 = vld [vmem:[%s3844 + $0x38] sm:$0xff]
        %v3853 = vld [vmem:[%s3844 + $0x40] sm:$0xff]
        %v3854 = vld [vmem:[%s3844 + $0x48] sm:$0xff]
        %v3855 = vld [vmem:[%s3844 + $0x50] sm:$0xff]
        %v3856 = vld [vmem:[%s3844 + $0x58] sm:$0xff]
        %v3857 = vld [vmem:[%s3844 + $0x60] sm:$0xff]
        %v3858 = vld [vmem:[%s3844 + $0x68] sm:$0xff]
        %v3859 = vld [vmem:[%s3844 + $0x70] sm:$0xff]
        %v3860 = vld [vmem:[%s3844 + $0x78] sm:$0xff]
        %v3861 = vld [vmem:[%s3844 + $0x80] sm:$0xff]
        %v3862 = vld [vmem:[%s3844 + $0x88] sm:$0xff]
        %v3863 = vld [vmem:[%s3844 + $0x90] sm:$0xff]
        %v3864 = vld [vmem:[%s3844 + $0x98] sm:$0xff]
        %v3865 = vld [vmem:[%s3844 + $0xa0] sm:$0xff]
        %v3866 = vld [vmem:[%s3844 + $0xa8] sm:$0xff]
        %v3867 = vld [vmem:[%s3844 + $0xb0] sm:$0xff]
        %v3868 = vld [vmem:[%s3844 + $0xb8] sm:$0xff]
        %v3869 = vld [vmem:[%s3844 + $0xc0] sm:$0xff]
        %v3870 = vld [vmem:[%s3844 + $0xc8] sm:$0xff]
        %v3871 = vld [vmem:[%s3844 + $0xd0] sm:$0xff]
        %v3872 = vld [vmem:[%s3844 + $0xd8] sm:$0xff]
        %v3873 = vld [vmem:[%s3844 + $0xe0] sm:$0xff]
        %v3874 = vld [vmem:[%s3844 + $0xe8] sm:$0xff]
        %v3875 = vld [vmem:[%s3844 + $0xf0] sm:$0xff]
        %v3876 = vld [vmem:[%s3844 + $0xf8] sm:$0xff]
        %v3879 = vunpack.c.l.b16 %v3842
        %v3880 = vunpack.c.h.b16 %v3842
        %v3881 = vunpack.c.l.b16 %v3843
        %v3882 = vpack.c.b16 %v3077, %v3879
        %v3883 = vpack.c.b16 %v3078, %v3880
        %v3884 = vpack.c.b16 %v3079, %v3881
        %v3885 = vrot.slane %v3882, 1
        %v3886 = vrot.slane %v3883, 1
        %v3887 = vrot.slane %v3884, 1
        %3888 = vrot.lane.b32.xlu0 %v3885, 96
        %v3889 = vpop.permute.xlu0 %3888
        %3890 = vrot.lane.b32.xlu0 %v3886, 96
        %v3891 = vpop.permute.xlu0 %3890
        %3892 = vrot.lane.b32.xlu0 %v3887, 96
        %v3893 = vpop.permute.xlu0 %3892
        %v3894 = vsel %vm989, %v3889, %v3891
        %v3895 = vsel %vm989, %v3891, %v3893
        %v3930 = vunpack.c.l.b16 %v3845
        %v3931 = vunpack.c.h.b16 %v3845
        %v3932 = vunpack.c.l.b16 %v3846
        %v3933 = vunpack.c.h.b16 %v3846
        %v3934 = vunpack.c.l.b16 %v3847
        %v3935 = vunpack.c.h.b16 %v3847
        %v3936 = vunpack.c.l.b16 %v3848
        %v3937 = vunpack.c.h.b16 %v3848
        %v3938 = vunpack.c.l.b16 %v3849
        %v3939 = vunpack.c.h.b16 %v3849
        %v3940 = vunpack.c.l.b16 %v3850
        %v3941 = vunpack.c.h.b16 %v3850
        %v3942 = vunpack.c.l.b16 %v3851
        %v3943 = vunpack.c.h.b16 %v3851
        %v3944 = vunpack.c.l.b16 %v3852
        %v3945 = vunpack.c.h.b16 %v3852
        %v3946 = vunpack.c.l.b16 %v3853
        %v3947 = vunpack.c.h.b16 %v3853
        %v3948 = vunpack.c.l.b16 %v3854
        %v3949 = vunpack.c.h.b16 %v3854
        %v3950 = vunpack.c.l.b16 %v3855
        %v3951 = vunpack.c.h.b16 %v3855
        %v3952 = vunpack.c.l.b16 %v3856
        %v3953 = vunpack.c.h.b16 %v3856
        %v3954 = vunpack.c.l.b16 %v3857
        %v3955 = vunpack.c.h.b16 %v3857
        %v3956 = vunpack.c.l.b16 %v3858
        %v3957 = vunpack.c.h.b16 %v3858
        %v3958 = vunpack.c.l.b16 %v3859
        %v3959 = vunpack.c.h.b16 %v3859
        %v3960 = vunpack.c.l.b16 %v3860
        %v3961 = vunpack.c.h.b16 %v3860
        %v3962 = vunpack.c.l.b16 %v3861
        %v3963 = vunpack.c.h.b16 %v3861
        %v3964 = vunpack.c.l.b16 %v3862
        %v3965 = vunpack.c.h.b16 %v3862
        %v3966 = vunpack.c.l.b16 %v3863
        %v3967 = vunpack.c.h.b16 %v3863
        %v3968 = vunpack.c.l.b16 %v3864
        %v3969 = vunpack.c.h.b16 %v3864
        %v3970 = vunpack.c.l.b16 %v3865
        %v3971 = vunpack.c.h.b16 %v3865
        %v3972 = vunpack.c.l.b16 %v3866
        %v3973 = vunpack.c.h.b16 %v3866
        %v3974 = vunpack.c.l.b16 %v3867
        %v3975 = vunpack.c.h.b16 %v3867
        %v3976 = vunpack.c.l.b16 %v3868
        %v3977 = vunpack.c.h.b16 %v3868
        %v3978 = vunpack.c.l.b16 %v3869
        %v3979 = vunpack.c.h.b16 %v3869
        %v3980 = vunpack.c.l.b16 %v3870
        %v3981 = vunpack.c.h.b16 %v3870
        %v3982 = vunpack.c.l.b16 %v3871
        %v3983 = vunpack.c.h.b16 %v3871
        %v3984 = vunpack.c.l.b16 %v3872
        %v3985 = vunpack.c.h.b16 %v3872
        %v3986 = vunpack.c.l.b16 %v3873
        %v3987 = vunpack.c.h.b16 %v3873
        %v3988 = vunpack.c.l.b16 %v3874
        %v3989 = vunpack.c.h.b16 %v3874
        %v3990 = vunpack.c.l.b16 %v3875
        %v3991 = vunpack.c.h.b16 %v3875
        %v3992 = vunpack.c.l.b16 %v3876
        %v3993 = vunpack.c.h.b16 %v3876
        %v3994 = vpack.c.b16 %v3932, %v3930
        %v3995 = vpack.c.b16 %v3933, %v3931
        %v3996 = vpack.c.b16 %v3936, %v3934
        %v3997 = vpack.c.b16 %v3937, %v3935
        %v3998 = vpack.c.b16 %v3940, %v3938
        %v3999 = vpack.c.b16 %v3941, %v3939
        %v4000 = vpack.c.b16 %v3944, %v3942
        %v4001 = vpack.c.b16 %v3945, %v3943
        %v4002 = vpack.c.b16 %v3948, %v3946
        %v4003 = vpack.c.b16 %v3949, %v3947
        %v4004 = vpack.c.b16 %v3952, %v3950
        %v4005 = vpack.c.b16 %v3953, %v3951
        %v4006 = vpack.c.b16 %v3956, %v3954
        %v4007 = vpack.c.b16 %v3957, %v3955
        %v4008 = vpack.c.b16 %v3960, %v3958
        %v4009 = vpack.c.b16 %v3961, %v3959
        %v4010 = vpack.c.b16 %v3964, %v3962
        %v4011 = vpack.c.b16 %v3965, %v3963
        %v4012 = vpack.c.b16 %v3968, %v3966
        %v4013 = vpack.c.b16 %v3969, %v3967
        %v4014 = vpack.c.b16 %v3972, %v3970
        %v4015 = vpack.c.b16 %v3973, %v3971
        %v4016 = vpack.c.b16 %v3976, %v3974
        %v4017 = vpack.c.b16 %v3977, %v3975
        %v4018 = vpack.c.b16 %v3980, %v3978
        %v4019 = vpack.c.b16 %v3981, %v3979
        %v4020 = vpack.c.b16 %v3984, %v3982
        %v4021 = vpack.c.b16 %v3985, %v3983
        %v4022 = vpack.c.b16 %v3988, %v3986
        %v4023 = vpack.c.b16 %v3989, %v3987
        %v4024 = vpack.c.b16 %v3992, %v3990
        %v4025 = vpack.c.b16 %v3993, %v3991
        %4058 = vmatpush.bf16.msra.mxu0 %v4008
        %4059 = vmatpush.bf16.msra.mxu0 %v4006
        %4060 = vmatpush.bf16.msra.mxu0 %v4004
        %4061 = vmatpush.bf16.msra.mxu0 %v4002
        %4062 = vmatpush.bf16.msra.mxu0 %v4000
        %4063 = vmatpush.bf16.msra.mxu0 %v3998
        %4064 = vmatpush.bf16.msra.mxu0 %v3996
        %4065 = vmatpush.bf16.msra.mxu0 %v3994
        %4066 = vmatmul.bf16.gmra.mxu0 %v3894
        %v4067 = vpop.f32.mrf.mxu0
        %v4068 = vadd.f32 0.0, %v4067
        %v4069 = vpop.f32.mrf.mxu0
        %4070 = vdwg.mxu0
        %4071 = vmatpush.bf16.msra.mxu0 %v4024
        %4072 = vmatpush.bf16.msra.mxu0 %v4022
        %4073 = vmatpush.bf16.msra.mxu0 %v4020
        %4074 = vmatpush.bf16.msra.mxu0 %v4018
        %4075 = vmatpush.bf16.msra.mxu0 %v4016
        %4076 = vmatpush.bf16.msra.mxu0 %v4014
        %4077 = vmatpush.bf16.msra.mxu0 %v4012
        %4078 = vmatpush.bf16.msra.mxu0 %v4010
        %4079 = vmatmul.bf16.gmra.mxu0 %v3895
        %v4080 = vpop.f32.mrf.mxu0
        %v4081 = vadd.f32 %v4068, %v4080
        %v4082 = vpop.f32.mrf.mxu0
        %4083 = vdwg.mxu0
        %4084 = vmatpush.bf16.msra.mxu0 %v4009
        %4085 = vmatpush.bf16.msra.mxu0 %v4007
        %4086 = vmatpush.bf16.msra.mxu0 %v4005
        %4087 = vmatpush.bf16.msra.mxu0 %v4003
        %4088 = vmatpush.bf16.msra.mxu0 %v4001
        %4089 = vmatpush.bf16.msra.mxu0 %v3999
        %4090 = vmatpush.bf16.msra.mxu0 %v3997
        %4091 = vmatpush.bf16.msra.mxu0 %v3995
        %4092 = vmatmul.bf16.gmra.mxu0 %v3894
        %v4093 = vpop.f32.mrf.mxu0
        %v4094 = vadd.f32 0.0, %v4093
        %v4095 = vpop.f32.mrf.mxu0
        %4096 = vdwg.mxu0
        %4097 = vmatpush.bf16.msra.mxu0 %v4025
        %4098 = vmatpush.bf16.msra.mxu0 %v4023
        %4099 = vmatpush.bf16.msra.mxu0 %v4021
        %4100 = vmatpush.bf16.msra.mxu0 %v4019
        %4101 = vmatpush.bf16.msra.mxu0 %v4017
        %4102 = vmatpush.bf16.msra.mxu0 %v4015
        %4103 = vmatpush.bf16.msra.mxu0 %v4013
        %4104 = vmatpush.bf16.msra.mxu0 %v4011
        %4105 = vmatmul.bf16.gmra.mxu0 %v3895
        %v4106 = vpop.f32.mrf.mxu0
        %v4107 = vadd.f32 %v4094, %v4106
        %v4108 = vpop.f32.mrf.mxu0
        %4109 = vdwg.mxu0
        %v4110 = vadd.f32 %v3840, %v4081
        %v4111 = vadd.f32 %v3841, %v4107
        %s4112 = scalar_lea.vmem [#allocation11], 2048
        %v4113 = vld [vmem:[%s4112] sm:$0xff]
        %v4114 = vld [vmem:[%s4112 + $0x8] sm:$0xff]
        %v4115 = vld [vmem:[%s4112 + $0x10] sm:$0xff]
        %v4116 = vld [vmem:[%s4112 + $0x18] sm:$0xff]
        %v4117 = vld [vmem:[%s4112 + $0x20] sm:$0xff]
        %v4118 = vld [vmem:[%s4112 + $0x28] sm:$0xff]
        %v4119 = vld [vmem:[%s4112 + $0x30] sm:$0xff]
        %v4120 = vld [vmem:[%s4112 + $0x38] sm:$0xff]
        %v4121 = vld [vmem:[%s4112 + $0x40] sm:$0xff]
        %v4122 = vld [vmem:[%s4112 + $0x48] sm:$0xff]
        %v4123 = vld [vmem:[%s4112 + $0x50] sm:$0xff]
        %v4124 = vld [vmem:[%s4112 + $0x58] sm:$0xff]
        %v4125 = vld [vmem:[%s4112 + $0x60] sm:$0xff]
        %v4126 = vld [vmem:[%s4112 + $0x68] sm:$0xff]
        %v4127 = vld [vmem:[%s4112 + $0x70] sm:$0xff]
        %v4128 = vld [vmem:[%s4112 + $0x78] sm:$0xff]
        %v4129 = vld [vmem:[%s4112 + $0x80] sm:$0xff]
        %v4130 = vld [vmem:[%s4112 + $0x88] sm:$0xff]
        %v4131 = vld [vmem:[%s4112 + $0x90] sm:$0xff]
        %v4132 = vld [vmem:[%s4112 + $0x98] sm:$0xff]
        %v4133 = vld [vmem:[%s4112 + $0xa0] sm:$0xff]
        %v4134 = vld [vmem:[%s4112 + $0xa8] sm:$0xff]
        %v4135 = vld [vmem:[%s4112 + $0xb0] sm:$0xff]
        %v4136 = vld [vmem:[%s4112 + $0xb8] sm:$0xff]
        %v4137 = vld [vmem:[%s4112 + $0xc0] sm:$0xff]
        %v4138 = vld [vmem:[%s4112 + $0xc8] sm:$0xff]
        %v4139 = vld [vmem:[%s4112 + $0xd0] sm:$0xff]
        %v4140 = vld [vmem:[%s4112 + $0xd8] sm:$0xff]
        %v4141 = vld [vmem:[%s4112 + $0xe0] sm:$0xff]
        %v4142 = vld [vmem:[%s4112 + $0xe8] sm:$0xff]
        %v4143 = vld [vmem:[%s4112 + $0xf0] sm:$0xff]
        %v4144 = vld [vmem:[%s4112 + $0xf8] sm:$0xff]
        %4145 = vrot.lane.b32.xlu0 %v3885, 64
        %v4146 = vpop.permute.xlu0 %4145
        %4147 = vrot.lane.b32.xlu0 %v3886, 64
        %v4148 = vpop.permute.xlu0 %4147
        %4149 = vrot.lane.b32.xlu0 %v3887, 64
        %v4150 = vpop.permute.xlu0 %4149
        %v4151 = vsel %vm2541, %v4146, %v4148
        %v4152 = vsel %vm2541, %v4148, %v4150
        %v4187 = vunpack.c.l.b16 %v4113
        %v4188 = vunpack.c.h.b16 %v4113
        %v4189 = vunpack.c.l.b16 %v4114
        %v4190 = vunpack.c.h.b16 %v4114
        %v4191 = vunpack.c.l.b16 %v4115
        %v4192 = vunpack.c.h.b16 %v4115
        %v4193 = vunpack.c.l.b16 %v4116
        %v4194 = vunpack.c.h.b16 %v4116
        %v4195 = vunpack.c.l.b16 %v4117
        %v4196 = vunpack.c.h.b16 %v4117
        %v4197 = vunpack.c.l.b16 %v4118
        %v4198 = vunpack.c.h.b16 %v4118
        %v4199 = vunpack.c.l.b16 %v4119
        %v4200 = vunpack.c.h.b16 %v4119
        %v4201 = vunpack.c.l.b16 %v4120
        %v4202 = vunpack.c.h.b16 %v4120
        %v4203 = vunpack.c.l.b16 %v4121
        %v4204 = vunpack.c.h.b16 %v4121
        %v4205 = vunpack.c.l.b16 %v4122
        %v4206 = vunpack.c.h.b16 %v4122
        %v4207 = vunpack.c.l.b16 %v4123
        %v4208 = vunpack.c.h.b16 %v4123
        %v4209 = vunpack.c.l.b16 %v4124
        %v4210 = vunpack.c.h.b16 %v4124
        %v4211 = vunpack.c.l.b16 %v4125
        %v4212 = vunpack.c.h.b16 %v4125
        %v4213 = vunpack.c.l.b16 %v4126
        %v4214 = vunpack.c.h.b16 %v4126
        %v4215 = vunpack.c.l.b16 %v4127
        %v4216 = vunpack.c.h.b16 %v4127
        %v4217 = vunpack.c.l.b16 %v4128
        %v4218 = vunpack.c.h.b16 %v4128
        %v4219 = vunpack.c.l.b16 %v4129
        %v4220 = vunpack.c.h.b16 %v4129
        %v4221 = vunpack.c.l.b16 %v4130
        %v4222 = vunpack.c.h.b16 %v4130
        %v4223 = vunpack.c.l.b16 %v4131
        %v4224 = vunpack.c.h.b16 %v4131
        %v4225 = vunpack.c.l.b16 %v4132
        %v4226 = vunpack.c.h.b16 %v4132
        %v4227 = vunpack.c.l.b16 %v4133
        %v4228 = vunpack.c.h.b16 %v4133
        %v4229 = vunpack.c.l.b16 %v4134
        %v4230 = vunpack.c.h.b16 %v4134
        %v4231 = vunpack.c.l.b16 %v4135
        %v4232 = vunpack.c.h.b16 %v4135
        %v4233 = vunpack.c.l.b16 %v4136
        %v4234 = vunpack.c.h.b16 %v4136
        %v4235 = vunpack.c.l.b16 %v4137
        %v4236 = vunpack.c.h.b16 %v4137
        %v4237 = vunpack.c.l.b16 %v4138
        %v4238 = vunpack.c.h.b16 %v4138
        %v4239 = vunpack.c.l.b16 %v4139
        %v4240 = vunpack.c.h.b16 %v4139
        %v4241 = vunpack.c.l.b16 %v4140
        %v4242 = vunpack.c.h.b16 %v4140
        %v4243 = vunpack.c.l.b16 %v4141
        %v4244 = vunpack.c.h.b16 %v4141
        %v4245 = vunpack.c.l.b16 %v4142
        %v4246 = vunpack.c.h.b16 %v4142
        %v4247 = vunpack.c.l.b16 %v4143
        %v4248 = vunpack.c.h.b16 %v4143
        %v4249 = vunpack.c.l.b16 %v4144
        %v4250 = vunpack.c.h.b16 %v4144
        %v4251 = vpack.c.b16 %v4189, %v4187
        %v4252 = vpack.c.b16 %v4190, %v4188
        %v4253 = vpack.c.b16 %v4193, %v4191
        %v4254 = vpack.c.b16 %v4194, %v4192
        %v4255 = vpack.c.b16 %v4197, %v4195
        %v4256 = vpack.c.b16 %v4198, %v4196
        %v4257 = vpack.c.b16 %v4201, %v4199
        %v4258 = vpack.c.b16 %v4202, %v4200
        %v4259 = vpack.c.b16 %v4205, %v4203
        %v4260 = vpack.c.b16 %v4206, %v4204
        %v4261 = vpack.c.b16 %v4209, %v4207
        %v4262 = vpack.c.b16 %v4210, %v4208
        %v4263 = vpack.c.b16 %v4213, %v4211
        %v4264 = vpack.c.b16 %v4214, %v4212
        %v4265 = vpack.c.b16 %v4217, %v4215
        %v4266 = vpack.c.b16 %v4218, %v4216
        %v4267 = vpack.c.b16 %v4221, %v4219
        %v4268 = vpack.c.b16 %v4222, %v4220
        %v4269 = vpack.c.b16 %v4225, %v4223
        %v4270 = vpack.c.b16 %v4226, %v4224
        %v4271 = vpack.c.b16 %v4229, %v4227
        %v4272 = vpack.c.b16 %v4230, %v4228
        %v4273 = vpack.c.b16 %v4233, %v4231
        %v4274 = vpack.c.b16 %v4234, %v4232
        %v4275 = vpack.c.b16 %v4237, %v4235
        %v4276 = vpack.c.b16 %v4238, %v4236
        %v4277 = vpack.c.b16 %v4241, %v4239
        %v4278 = vpack.c.b16 %v4242, %v4240
        %v4279 = vpack.c.b16 %v4245, %v4243
        %v4280 = vpack.c.b16 %v4246, %v4244
        %v4281 = vpack.c.b16 %v4249, %v4247
        %v4282 = vpack.c.b16 %v4250, %v4248
        %4315 = vmatpush.bf16.msra.mxu0 %v4265
        %4316 = vmatpush.bf16.msra.mxu0 %v4263
        %4317 = vmatpush.bf16.msra.mxu0 %v4261
        %4318 = vmatpush.bf16.msra.mxu0 %v4259
        %4319 = vmatpush.bf16.msra.mxu0 %v4257
        %4320 = vmatpush.bf16.msra.mxu0 %v4255
        %4321 = vmatpush.bf16.msra.mxu0 %v4253
        %4322 = vmatpush.bf16.msra.mxu0 %v4251
        %4323 = vmatmul.bf16.gmra.mxu0 %v4151
        %v4324 = vpop.f32.mrf.mxu0
        %v4325 = vadd.f32 0.0, %v4324
        %v4326 = vpop.f32.mrf.mxu0
        %4327 = vdwg.mxu0
        %4328 = vmatpush.bf16.msra.mxu0 %v4281
        %4329 = vmatpush.bf16.msra.mxu0 %v4279
        %4330 = vmatpush.bf16.msra.mxu0 %v4277
        %4331 = vmatpush.bf16.msra.mxu0 %v4275
        %4332 = vmatpush.bf16.msra.mxu0 %v4273
        %4333 = vmatpush.bf16.msra.mxu0 %v4271
        %4334 = vmatpush.bf16.msra.mxu0 %v4269
        %4335 = vmatpush.bf16.msra.mxu0 %v4267
        %4336 = vmatmul.bf16.gmra.mxu0 %v4152
        %v4337 = vpop.f32.mrf.mxu0
        %v4338 = vadd.f32 %v4325, %v4337
        %v4339 = vpop.f32.mrf.mxu0
        %4340 = vdwg.mxu0
        %4341 = vmatpush.bf16.msra.mxu0 %v4266
        %4342 = vmatpush.bf16.msra.mxu0 %v4264
        %4343 = vmatpush.bf16.msra.mxu0 %v4262
        %4344 = vmatpush.bf16.msra.mxu0 %v4260
        %4345 = vmatpush.bf16.msra.mxu0 %v4258
        %4346 = vmatpush.bf16.msra.mxu0 %v4256
        %4347 = vmatpush.bf16.msra.mxu0 %v4254
        %4348 = vmatpush.bf16.msra.mxu0 %v4252
        %4349 = vmatmul.bf16.gmra.mxu0 %v4151
        %v4350 = vpop.f32.mrf.mxu0
        %v4351 = vadd.f32 0.0, %v4350
        %v4352 = vpop.f32.mrf.mxu0
        %4353 = vdwg.mxu0
        %4354 = vmatpush.bf16.msra.mxu0 %v4282
        %4355 = vmatpush.bf16.msra.mxu0 %v4280
        %4356 = vmatpush.bf16.msra.mxu0 %v4278
        %4357 = vmatpush.bf16.msra.mxu0 %v4276
        %4358 = vmatpush.bf16.msra.mxu0 %v4274
        %4359 = vmatpush.bf16.msra.mxu0 %v4272
        %4360 = vmatpush.bf16.msra.mxu0 %v4270
        %4361 = vmatpush.bf16.msra.mxu0 %v4268
        %4362 = vmatmul.bf16.gmra.mxu0 %v4152
        %v4363 = vpop.f32.mrf.mxu0
        %v4364 = vadd.f32 %v4351, %v4363
        %v4365 = vpop.f32.mrf.mxu0
        %4366 = vdwg.mxu0
        %v4367 = vadd.f32 %v4110, %v4338
        %v4368 = vadd.f32 %v4111, %v4364
        %v4369 = vld [vmem:[#allocation12] sm:$0x3]
        %v4371 = vperm.slane %v4369, 0
        %v4372 = vperm.slane %v4369, 1
        %v4375 = vadd.f32 %v4367, %v4371
        %v4376 = vadd.f32 %v4368, %v4372
        %v4377 = vmax.f32 %v4375, 0.0
        %v4378 = vmax.f32 %v4376, 0.0
        %v4379 = vpack.c.bf16 %v4378, %v4377
        %v4380 = vld [vmem:[#allocation14] sm:$0xf]
        %v4381 = vld [vmem:[#allocation14 + $0x4] sm:$0xf]
        %v4382 = vld [vmem:[#allocation14 + $0x8] sm:$0xf]
        %v4383 = vld [vmem:[#allocation14 + $0xc] sm:$0xf]
        %v4384 = vld [vmem:[#allocation14 + $0x10] sm:$0xf]
        %v4385 = vld [vmem:[#allocation14 + $0x14] sm:$0xf]
        %v4386 = vld [vmem:[#allocation14 + $0x18] sm:$0xf]
        %v4387 = vld [vmem:[#allocation14 + $0x1c] sm:$0xf]
        %v4388 = vld [vmem:[#allocation14 + $0x20] sm:$0xf]
        %v4389 = vld [vmem:[#allocation14 + $0x24] sm:$0xf]
        %v4390 = vld [vmem:[#allocation14 + $0x28] sm:$0xf]
        %v4391 = vld [vmem:[#allocation14 + $0x2c] sm:$0xf]
        %v4392 = vld [vmem:[#allocation14 + $0x30] sm:$0xf]
        %v4393 = vld [vmem:[#allocation14 + $0x34] sm:$0xf]
        %v4394 = vld [vmem:[#allocation14 + $0x38] sm:$0xf]
        %v4395 = vld [vmem:[#allocation14 + $0x3c] sm:$0xf]
        %v4396 = vld [vmem:[#allocation14 + $0x40] sm:$0xf]
        %v4397 = vld [vmem:[#allocation14 + $0x44] sm:$0xf]
        %v4398 = vld [vmem:[#allocation14 + $0x48] sm:$0xf]
        %v4399 = vld [vmem:[#allocation14 + $0x4c] sm:$0xf]
        %v4400 = vld [vmem:[#allocation14 + $0x50] sm:$0xf]
        %v4401 = vld [vmem:[#allocation14 + $0x54] sm:$0xf]
        %v4402 = vld [vmem:[#allocation14 + $0x58] sm:$0xf]
        %v4403 = vld [vmem:[#allocation14 + $0x5c] sm:$0xf]
        %v4404 = vld [vmem:[#allocation14 + $0x60] sm:$0xf]
        %v4405 = vld [vmem:[#allocation14 + $0x64] sm:$0xf]
        %v4406 = vld [vmem:[#allocation14 + $0x68] sm:$0xf]
        %v4407 = vld [vmem:[#allocation14 + $0x6c] sm:$0xf]
        %v4408 = vld [vmem:[#allocation14 + $0x70] sm:$0xf]
        %v4409 = vld [vmem:[#allocation14 + $0x74] sm:$0xf]
        %v4410 = vld [vmem:[#allocation14 + $0x78] sm:$0xf]
        %v4411 = vld [vmem:[#allocation14 + $0x7c] sm:$0xf]
        %s4412 = scalar_lea.vmem [#allocation14], 128
        %v4413 = vld [vmem:[%s4412] sm:$0xf]
        %v4414 = vld [vmem:[%s4412 + $0x4] sm:$0xf]
        %v4415 = vld [vmem:[%s4412 + $0x8] sm:$0xf]
        %v4416 = vld [vmem:[%s4412 + $0xc] sm:$0xf]
        %v4417 = vld [vmem:[%s4412 + $0x10] sm:$0xf]
        %v4418 = vld [vmem:[%s4412 + $0x14] sm:$0xf]
        %v4419 = vld [vmem:[%s4412 + $0x18] sm:$0xf]
        %v4420 = vld [vmem:[%s4412 + $0x1c] sm:$0xf]
        %v4421 = vld [vmem:[%s4412 + $0x20] sm:$0xf]
        %v4422 = vld [vmem:[%s4412 + $0x24] sm:$0xf]
        %v4423 = vld [vmem:[%s4412 + $0x28] sm:$0xf]
        %v4424 = vld [vmem:[%s4412 + $0x2c] sm:$0xf]
        %v4425 = vld [vmem:[%s4412 + $0x30] sm:$0xf]
        %v4426 = vld [vmem:[%s4412 + $0x34] sm:$0xf]
        %v4427 = vld [vmem:[%s4412 + $0x38] sm:$0xf]
        %v4428 = vld [vmem:[%s4412 + $0x3c] sm:$0xf]
        %v4429 = vld [vmem:[%s4412 + $0x40] sm:$0xf]
        %v4430 = vld [vmem:[%s4412 + $0x44] sm:$0xf]
        %v4431 = vld [vmem:[%s4412 + $0x48] sm:$0xf]
        %v4432 = vld [vmem:[%s4412 + $0x4c] sm:$0xf]
        %v4433 = vld [vmem:[%s4412 + $0x50] sm:$0xf]
        %v4434 = vld [vmem:[%s4412 + $0x54] sm:$0xf]
        %v4435 = vld [vmem:[%s4412 + $0x58] sm:$0xf]
        %v4436 = vld [vmem:[%s4412 + $0x5c] sm:$0xf]
        %v4437 = vld [vmem:[%s4412 + $0x60] sm:$0xf]
        %v4438 = vld [vmem:[%s4412 + $0x64] sm:$0xf]
        %v4439 = vld [vmem:[%s4412 + $0x68] sm:$0xf]
        %v4440 = vld [vmem:[%s4412 + $0x6c] sm:$0xf]
        %v4441 = vld [vmem:[%s4412 + $0x70] sm:$0xf]
        %v4442 = vld [vmem:[%s4412 + $0x74] sm:$0xf]
        %v4443 = vld [vmem:[%s4412 + $0x78] sm:$0xf]
        %v4444 = vld [vmem:[%s4412 + $0x7c] sm:$0xf]
        %v4446 = vunpack.c.l.b16 %v4379
        %v4447 = vunpack.c.h.b16 %v4379
        %v4448 = vpack.c.b16 %v4446, %v4446
        %v4449 = vpack.c.b16 %v4447, %v4447
        %v4451 = vshrl.u32 %v4448, 16
        %v4454 = vshrl.u32 %v4449, 16
        %v4490 = vunpack.c.l.b16 %v4413
        %v4491 = vunpack.c.l.b16 %v4414
        %v4492 = vunpack.c.l.b16 %v4415
        %v4493 = vunpack.c.l.b16 %v4416
        %v4494 = vunpack.c.l.b16 %v4417
        %v4495 = vunpack.c.l.b16 %v4418
        %v4496 = vunpack.c.l.b16 %v4419
        %v4497 = vunpack.c.l.b16 %v4420
        %v4498 = vunpack.c.l.b16 %v4421
        %v4499 = vunpack.c.l.b16 %v4422
        %v4500 = vunpack.c.l.b16 %v4423
        %v4501 = vunpack.c.l.b16 %v4424
        %v4502 = vunpack.c.l.b16 %v4425
        %v4503 = vunpack.c.l.b16 %v4426
        %v4504 = vunpack.c.l.b16 %v4427
        %v4505 = vunpack.c.l.b16 %v4428
        %v4506 = vunpack.c.l.b16 %v4429
        %v4507 = vunpack.c.l.b16 %v4430
        %v4508 = vunpack.c.l.b16 %v4431
        %v4509 = vunpack.c.l.b16 %v4432
        %v4510 = vunpack.c.l.b16 %v4433
        %v4511 = vunpack.c.l.b16 %v4434
        %v4512 = vunpack.c.l.b16 %v4435
        %v4513 = vunpack.c.l.b16 %v4436
        %v4514 = vunpack.c.l.b16 %v4437
        %v4515 = vunpack.c.l.b16 %v4438
        %v4516 = vunpack.c.l.b16 %v4439
        %v4517 = vunpack.c.l.b16 %v4440
        %v4518 = vunpack.c.l.b16 %v4441
        %v4519 = vunpack.c.l.b16 %v4442
        %v4520 = vunpack.c.l.b16 %v4443
        %v4521 = vunpack.c.l.b16 %v4444
        %v4522 = vpack.c.b16 %v4491, %v4490
        %v4523 = vpack.c.b16 %v4493, %v4492
        %v4524 = vpack.c.b16 %v4495, %v4494
        %v4525 = vpack.c.b16 %v4497, %v4496
        %v4526 = vpack.c.b16 %v4499, %v4498
        %v4527 = vpack.c.b16 %v4501, %v4500
        %v4528 = vpack.c.b16 %v4503, %v4502
        %v4529 = vpack.c.b16 %v4505, %v4504
        %v4530 = vpack.c.b16 %v4507, %v4506
        %v4531 = vpack.c.b16 %v4509, %v4508
        %v4532 = vpack.c.b16 %v4511, %v4510
        %v4533 = vpack.c.b16 %v4513, %v4512
        %v4534 = vpack.c.b16 %v4515, %v4514
        %v4535 = vpack.c.b16 %v4517, %v4516
        %v4536 = vpack.c.b16 %v4519, %v4518
        %v4537 = vpack.c.b16 %v4521, %v4520
        %4554 = vmatpush.bf16.msra.mxu0 %v4529
        %4555 = vmatpush.bf16.msra.mxu0 %v4528
        %4556 = vmatpush.bf16.msra.mxu0 %v4527
        %4557 = vmatpush.bf16.msra.mxu0 %v4526
        %4558 = vmatpush.bf16.msra.mxu0 %v4525
        %4559 = vmatpush.bf16.msra.mxu0 %v4524
        %4560 = vmatpush.bf16.msra.mxu0 %v4523
        %4561 = vmatpush.bf16.msra.mxu0 %v4522
        %4562 = vmatmul.bf16.gmra.mxu0 %v4451
        %v4563 = vpop.f32.mrf.mxu0
        %v4564 = vadd.f32 0.0, %v4563
        %v4565 = vpop.f32.mrf.mxu0
        %4566 = vdwg.mxu0
        %4567 = vmatpush.bf16.msra.mxu0 %v4537
        %4568 = vmatpush.bf16.msra.mxu0 %v4536
        %4569 = vmatpush.bf16.msra.mxu0 %v4535
        %4570 = vmatpush.bf16.msra.mxu0 %v4534
        %4571 = vmatpush.bf16.msra.mxu0 %v4533
        %4572 = vmatpush.bf16.msra.mxu0 %v4532
        %4573 = vmatpush.bf16.msra.mxu0 %v4531
        %4574 = vmatpush.bf16.msra.mxu0 %v4530
        %4575 = vmatmul.bf16.gmra.mxu0 %v4454
        %v4576 = vpop.f32.mrf.mxu0
        %v4577 = vadd.f32 %v4564, %v4576
        %v4578 = vpop.f32.mrf.mxu0
        %4579 = vdwg.mxu0
        %v4614 = vunpack.c.l.b16 %v4380
        %v4615 = vunpack.c.l.b16 %v4381
        %v4616 = vunpack.c.l.b16 %v4382
        %v4617 = vunpack.c.l.b16 %v4383
        %v4618 = vunpack.c.l.b16 %v4384
        %v4619 = vunpack.c.l.b16 %v4385
        %v4620 = vunpack.c.l.b16 %v4386
        %v4621 = vunpack.c.l.b16 %v4387
        %v4622 = vunpack.c.l.b16 %v4388
        %v4623 = vunpack.c.l.b16 %v4389
        %v4624 = vunpack.c.l.b16 %v4390
        %v4625 = vunpack.c.l.b16 %v4391
        %v4626 = vunpack.c.l.b16 %v4392
        %v4627 = vunpack.c.l.b16 %v4393
        %v4628 = vunpack.c.l.b16 %v4394
        %v4629 = vunpack.c.l.b16 %v4395
        %v4630 = vunpack.c.l.b16 %v4396
        %v4631 = vunpack.c.l.b16 %v4397
        %v4632 = vunpack.c.l.b16 %v4398
        %v4633 = vunpack.c.l.b16 %v4399
        %v4634 = vunpack.c.l.b16 %v4400
        %v4635 = vunpack.c.l.b16 %v4401
        %v4636 = vunpack.c.l.b16 %v4402
        %v4637 = vunpack.c.l.b16 %v4403
        %v4638 = vunpack.c.l.b16 %v4404
        %v4639 = vunpack.c.l.b16 %v4405
        %v4640 = vunpack.c.l.b16 %v4406
        %v4641 = vunpack.c.l.b16 %v4407
        %v4642 = vunpack.c.l.b16 %v4408
        %v4643 = vunpack.c.l.b16 %v4409
        %v4644 = vunpack.c.l.b16 %v4410
        %v4645 = vunpack.c.l.b16 %v4411
        %v4646 = vpack.c.b16 %v4615, %v4614
        %v4647 = vpack.c.b16 %v4617, %v4616
        %v4648 = vpack.c.b16 %v4619, %v4618
        %v4649 = vpack.c.b16 %v4621, %v4620
        %v4650 = vpack.c.b16 %v4623, %v4622
        %v4651 = vpack.c.b16 %v4625, %v4624
        %v4652 = vpack.c.b16 %v4627, %v4626
        %v4653 = vpack.c.b16 %v4629, %v4628
        %v4654 = vpack.c.b16 %v4631, %v4630
        %v4655 = vpack.c.b16 %v4633, %v4632
        %v4656 = vpack.c.b16 %v4635, %v4634
        %v4657 = vpack.c.b16 %v4637, %v4636
        %v4658 = vpack.c.b16 %v4639, %v4638
        %v4659 = vpack.c.b16 %v4641, %v4640
        %v4660 = vpack.c.b16 %v4643, %v4642
        %v4661 = vpack.c.b16 %v4645, %v4644
        %4678 = vmatpush.bf16.msra.mxu0 %v4653
        %4679 = vmatpush.bf16.msra.mxu0 %v4652
        %4680 = vmatpush.bf16.msra.mxu0 %v4651
        %4681 = vmatpush.bf16.msra.mxu0 %v4650
        %4682 = vmatpush.bf16.msra.mxu0 %v4649
        %4683 = vmatpush.bf16.msra.mxu0 %v4648
        %4684 = vmatpush.bf16.msra.mxu0 %v4647
        %4685 = vmatpush.bf16.msra.mxu0 %v4646
        %4686 = vmatmul.bf16.gmra.mxu0 %v4448
        %v4687 = vpop.f32.mrf.mxu0
        %v4688 = vadd.f32 %v4577, %v4687
        %v4689 = vpop.f32.mrf.mxu0
        %4690 = vdwg.mxu0
        %4691 = vmatpush.bf16.msra.mxu0 %v4661
        %4692 = vmatpush.bf16.msra.mxu0 %v4660
        %4693 = vmatpush.bf16.msra.mxu0 %v4659
        %4694 = vmatpush.bf16.msra.mxu0 %v4658
        %4695 = vmatpush.bf16.msra.mxu0 %v4657
        %4696 = vmatpush.bf16.msra.mxu0 %v4656
        %4697 = vmatpush.bf16.msra.mxu0 %v4655
        %4698 = vmatpush.bf16.msra.mxu0 %v4654
        %4699 = vmatmul.bf16.gmra.mxu0 %v4449
        %v4700 = vpop.f32.mrf.mxu0
        %v4701 = vadd.f32 %v4688, %v4700
        %v4702 = vpop.f32.mrf.mxu0
        %4703 = vdwg.mxu0
        %s4704 = scalar_lea.vmem [#allocation14], 256
        %v4705 = vld [vmem:[%s4704] sm:$0xf]
        %v4706 = vld [vmem:[%s4704 + $0x4] sm:$0xf]
        %v4707 = vld [vmem:[%s4704 + $0x8] sm:$0xf]
        %v4708 = vld [vmem:[%s4704 + $0xc] sm:$0xf]
        %v4709 = vld [vmem:[%s4704 + $0x10] sm:$0xf]
        %v4710 = vld [vmem:[%s4704 + $0x14] sm:$0xf]
        %v4711 = vld [vmem:[%s4704 + $0x18] sm:$0xf]
        %v4712 = vld [vmem:[%s4704 + $0x1c] sm:$0xf]
        %v4713 = vld [vmem:[%s4704 + $0x20] sm:$0xf]
        %v4714 = vld [vmem:[%s4704 + $0x24] sm:$0xf]
        %v4715 = vld [vmem:[%s4704 + $0x28] sm:$0xf]
        %v4716 = vld [vmem:[%s4704 + $0x2c] sm:$0xf]
        %v4717 = vld [vmem:[%s4704 + $0x30] sm:$0xf]
        %v4718 = vld [vmem:[%s4704 + $0x34] sm:$0xf]
        %v4719 = vld [vmem:[%s4704 + $0x38] sm:$0xf]
        %v4720 = vld [vmem:[%s4704 + $0x3c] sm:$0xf]
        %v4721 = vld [vmem:[%s4704 + $0x40] sm:$0xf]
        %v4722 = vld [vmem:[%s4704 + $0x44] sm:$0xf]
        %v4723 = vld [vmem:[%s4704 + $0x48] sm:$0xf]
        %v4724 = vld [vmem:[%s4704 + $0x4c] sm:$0xf]
        %v4725 = vld [vmem:[%s4704 + $0x50] sm:$0xf]
        %v4726 = vld [vmem:[%s4704 + $0x54] sm:$0xf]
        %v4727 = vld [vmem:[%s4704 + $0x58] sm:$0xf]
        %v4728 = vld [vmem:[%s4704 + $0x5c] sm:$0xf]
        %v4729 = vld [vmem:[%s4704 + $0x60] sm:$0xf]
        %v4730 = vld [vmem:[%s4704 + $0x64] sm:$0xf]
        %v4731 = vld [vmem:[%s4704 + $0x68] sm:$0xf]
        %v4732 = vld [vmem:[%s4704 + $0x6c] sm:$0xf]
        %v4733 = vld [vmem:[%s4704 + $0x70] sm:$0xf]
        %v4734 = vld [vmem:[%s4704 + $0x74] sm:$0xf]
        %v4735 = vld [vmem:[%s4704 + $0x78] sm:$0xf]
        %v4736 = vld [vmem:[%s4704 + $0x7c] sm:$0xf]
        %v4737 = vrot.slane %v4448, 1
        %v4738 = vrot.slane %v4449, 1
        %v4773 = vunpack.c.l.b16 %v4705
        %v4774 = vunpack.c.l.b16 %v4706
        %v4775 = vunpack.c.l.b16 %v4707
        %v4776 = vunpack.c.l.b16 %v4708
        %v4777 = vunpack.c.l.b16 %v4709
        %v4778 = vunpack.c.l.b16 %v4710
        %v4779 = vunpack.c.l.b16 %v4711
        %v4780 = vunpack.c.l.b16 %v4712
        %v4781 = vunpack.c.l.b16 %v4713
        %v4782 = vunpack.c.l.b16 %v4714
        %v4783 = vunpack.c.l.b16 %v4715
        %v4784 = vunpack.c.l.b16 %v4716
        %v4785 = vunpack.c.l.b16 %v4717
        %v4786 = vunpack.c.l.b16 %v4718
        %v4787 = vunpack.c.l.b16 %v4719
        %v4788 = vunpack.c.l.b16 %v4720
        %v4789 = vunpack.c.l.b16 %v4721
        %v4790 = vunpack.c.l.b16 %v4722
        %v4791 = vunpack.c.l.b16 %v4723
        %v4792 = vunpack.c.l.b16 %v4724
        %v4793 = vunpack.c.l.b16 %v4725
        %v4794 = vunpack.c.l.b16 %v4726
        %v4795 = vunpack.c.l.b16 %v4727
        %v4796 = vunpack.c.l.b16 %v4728
        %v4797 = vunpack.c.l.b16 %v4729
        %v4798 = vunpack.c.l.b16 %v4730
        %v4799 = vunpack.c.l.b16 %v4731
        %v4800 = vunpack.c.l.b16 %v4732
        %v4801 = vunpack.c.l.b16 %v4733
        %v4802 = vunpack.c.l.b16 %v4734
        %v4803 = vunpack.c.l.b16 %v4735
        %v4804 = vunpack.c.l.b16 %v4736
        %v4805 = vpack.c.b16 %v4774, %v4773
        %v4806 = vpack.c.b16 %v4776, %v4775
        %v4807 = vpack.c.b16 %v4778, %v4777
        %v4808 = vpack.c.b16 %v4780, %v4779
        %v4809 = vpack.c.b16 %v4782, %v4781
        %v4810 = vpack.c.b16 %v4784, %v4783
        %v4811 = vpack.c.b16 %v4786, %v4785
        %v4812 = vpack.c.b16 %v4788, %v4787
        %v4813 = vpack.c.b16 %v4790, %v4789
        %v4814 = vpack.c.b16 %v4792, %v4791
        %v4815 = vpack.c.b16 %v4794, %v4793
        %v4816 = vpack.c.b16 %v4796, %v4795
        %v4817 = vpack.c.b16 %v4798, %v4797
        %v4818 = vpack.c.b16 %v4800, %v4799
        %v4819 = vpack.c.b16 %v4802, %v4801
        %v4820 = vpack.c.b16 %v4804, %v4803
        %4837 = vmatpush.bf16.msra.mxu0 %v4812
        %4838 = vmatpush.bf16.msra.mxu0 %v4811
        %4839 = vmatpush.bf16.msra.mxu0 %v4810
        %4840 = vmatpush.bf16.msra.mxu0 %v4809
        %4841 = vmatpush.bf16.msra.mxu0 %v4808
        %4842 = vmatpush.bf16.msra.mxu0 %v4807
        %4843 = vmatpush.bf16.msra.mxu0 %v4806
        %4844 = vmatpush.bf16.msra.mxu0 %v4805
        %4845 = vmatmul.bf16.gmra.mxu0 %v4737
        %v4846 = vpop.f32.mrf.mxu0
        %v4847 = vadd.f32 0.0, %v4846
        %v4848 = vpop.f32.mrf.mxu0
        %4849 = vdwg.mxu0
        %4850 = vmatpush.bf16.msra.mxu0 %v4820
        %4851 = vmatpush.bf16.msra.mxu0 %v4819
        %4852 = vmatpush.bf16.msra.mxu0 %v4818
        %4853 = vmatpush.bf16.msra.mxu0 %v4817
        %4854 = vmatpush.bf16.msra.mxu0 %v4816
        %4855 = vmatpush.bf16.msra.mxu0 %v4815
        %4856 = vmatpush.bf16.msra.mxu0 %v4814
        %4857 = vmatpush.bf16.msra.mxu0 %v4813
        %4858 = vmatmul.bf16.gmra.mxu0 %v4738
        %v4859 = vpop.f32.mrf.mxu0
        %v4860 = vadd.f32 %v4847, %v4859
        %v4861 = vpop.f32.mrf.mxu0
        %4862 = vdwg.mxu0
        %v4863 = vadd.f32 %v4701, %v4860
        %s4864 = scalar_lea.vmem [#allocation14], 384
        %v4865 = vld [vmem:[%s4864] sm:$0xf]
        %v4866 = vld [vmem:[%s4864 + $0x4] sm:$0xf]
        %v4867 = vld [vmem:[%s4864 + $0x8] sm:$0xf]
        %v4868 = vld [vmem:[%s4864 + $0xc] sm:$0xf]
        %v4869 = vld [vmem:[%s4864 + $0x10] sm:$0xf]
        %v4870 = vld [vmem:[%s4864 + $0x14] sm:$0xf]
        %v4871 = vld [vmem:[%s4864 + $0x18] sm:$0xf]
        %v4872 = vld [vmem:[%s4864 + $0x1c] sm:$0xf]
        %v4873 = vld [vmem:[%s4864 + $0x20] sm:$0xf]
        %v4874 = vld [vmem:[%s4864 + $0x24] sm:$0xf]
        %v4875 = vld [vmem:[%s4864 + $0x28] sm:$0xf]
        %v4876 = vld [vmem:[%s4864 + $0x2c] sm:$0xf]
        %v4877 = vld [vmem:[%s4864 + $0x30] sm:$0xf]
        %v4878 = vld [vmem:[%s4864 + $0x34] sm:$0xf]
        %v4879 = vld [vmem:[%s4864 + $0x38] sm:$0xf]
        %v4880 = vld [vmem:[%s4864 + $0x3c] sm:$0xf]
        %v4881 = vld [vmem:[%s4864 + $0x40] sm:$0xf]
        %v4882 = vld [vmem:[%s4864 + $0x44] sm:$0xf]
        %v4883 = vld [vmem:[%s4864 + $0x48] sm:$0xf]
        %v4884 = vld [vmem:[%s4864 + $0x4c] sm:$0xf]
        %v4885 = vld [vmem:[%s4864 + $0x50] sm:$0xf]
        %v4886 = vld [vmem:[%s4864 + $0x54] sm:$0xf]
        %v4887 = vld [vmem:[%s4864 + $0x58] sm:$0xf]
        %v4888 = vld [vmem:[%s4864 + $0x5c] sm:$0xf]
        %v4889 = vld [vmem:[%s4864 + $0x60] sm:$0xf]
        %v4890 = vld [vmem:[%s4864 + $0x64] sm:$0xf]
        %v4891 = vld [vmem:[%s4864 + $0x68] sm:$0xf]
        %v4892 = vld [vmem:[%s4864 + $0x6c] sm:$0xf]
        %v4893 = vld [vmem:[%s4864 + $0x70] sm:$0xf]
        %v4894 = vld [vmem:[%s4864 + $0x74] sm:$0xf]
        %v4895 = vld [vmem:[%s4864 + $0x78] sm:$0xf]
        %v4896 = vld [vmem:[%s4864 + $0x7c] sm:$0xf]
        %v4897 = vrot.slane %v4451, 1
        %v4898 = vrot.slane %v4454, 1
        %v4933 = vunpack.c.l.b16 %v4865
        %v4934 = vunpack.c.l.b16 %v4866
        %v4935 = vunpack.c.l.b16 %v4867
        %v4936 = vunpack.c.l.b16 %v4868
        %v4937 = vunpack.c.l.b16 %v4869
        %v4938 = vunpack.c.l.b16 %v4870
        %v4939 = vunpack.c.l.b16 %v4871
        %v4940 = vunpack.c.l.b16 %v4872
        %v4941 = vunpack.c.l.b16 %v4873
        %v4942 = vunpack.c.l.b16 %v4874
        %v4943 = vunpack.c.l.b16 %v4875
        %v4944 = vunpack.c.l.b16 %v4876
        %v4945 = vunpack.c.l.b16 %v4877
        %v4946 = vunpack.c.l.b16 %v4878
        %v4947 = vunpack.c.l.b16 %v4879
        %v4948 = vunpack.c.l.b16 %v4880
        %v4949 = vunpack.c.l.b16 %v4881
        %v4950 = vunpack.c.l.b16 %v4882
        %v4951 = vunpack.c.l.b16 %v4883
        %v4952 = vunpack.c.l.b16 %v4884
        %v4953 = vunpack.c.l.b16 %v4885
        %v4954 = vunpack.c.l.b16 %v4886
        %v4955 = vunpack.c.l.b16 %v4887
        %v4956 = vunpack.c.l.b16 %v4888
        %v4957 = vunpack.c.l.b16 %v4889
        %v4958 = vunpack.c.l.b16 %v4890
        %v4959 = vunpack.c.l.b16 %v4891
        %v4960 = vunpack.c.l.b16 %v4892
        %v4961 = vunpack.c.l.b16 %v4893
        %v4962 = vunpack.c.l.b16 %v4894
        %v4963 = vunpack.c.l.b16 %v4895
        %v4964 = vunpack.c.l.b16 %v4896
        %v4965 = vpack.c.b16 %v4934, %v4933
        %v4966 = vpack.c.b16 %v4936, %v4935
        %v4967 = vpack.c.b16 %v4938, %v4937
        %v4968 = vpack.c.b16 %v4940, %v4939
        %v4969 = vpack.c.b16 %v4942, %v4941
        %v4970 = vpack.c.b16 %v4944, %v4943
        %v4971 = vpack.c.b16 %v4946, %v4945
        %v4972 = vpack.c.b16 %v4948, %v4947
        %v4973 = vpack.c.b16 %v4950, %v4949
        %v4974 = vpack.c.b16 %v4952, %v4951
        %v4975 = vpack.c.b16 %v4954, %v4953
        %v4976 = vpack.c.b16 %v4956, %v4955
        %v4977 = vpack.c.b16 %v4958, %v4957
        %v4978 = vpack.c.b16 %v4960, %v4959
        %v4979 = vpack.c.b16 %v4962, %v4961
        %v4980 = vpack.c.b16 %v4964, %v4963
        %4997 = vmatpush.bf16.msra.mxu0 %v4972
        %4998 = vmatpush.bf16.msra.mxu0 %v4971
        %4999 = vmatpush.bf16.msra.mxu0 %v4970
        %5000 = vmatpush.bf16.msra.mxu0 %v4969
        %5001 = vmatpush.bf16.msra.mxu0 %v4968
        %5002 = vmatpush.bf16.msra.mxu0 %v4967
        %5003 = vmatpush.bf16.msra.mxu0 %v4966
        %5004 = vmatpush.bf16.msra.mxu0 %v4965
        %5005 = vmatmul.bf16.gmra.mxu0 %v4897
        %v5006 = vpop.f32.mrf.mxu0
        %v5007 = vadd.f32 0.0, %v5006
        %v5008 = vpop.f32.mrf.mxu0
        %5009 = vdwg.mxu0
        %5010 = vmatpush.bf16.msra.mxu0 %v4980
        %5011 = vmatpush.bf16.msra.mxu0 %v4979
        %5012 = vmatpush.bf16.msra.mxu0 %v4978
        %5013 = vmatpush.bf16.msra.mxu0 %v4977
        %5014 = vmatpush.bf16.msra.mxu0 %v4976
        %5015 = vmatpush.bf16.msra.mxu0 %v4975
        %5016 = vmatpush.bf16.msra.mxu0 %v4974
        %5017 = vmatpush.bf16.msra.mxu0 %v4973
        %5018 = vmatmul.bf16.gmra.mxu0 %v4898
        %v5019 = vpop.f32.mrf.mxu0
        %v5020 = vadd.f32 %v5007, %v5019
        %v5021 = vpop.f32.mrf.mxu0
        %5022 = vdwg.mxu0
        %v5023 = vadd.f32 %v4863, %v5020
        %s5024 = scalar_lea.vmem [#allocation14], 512
        %v5025 = vld [vmem:[%s5024] sm:$0xf]
        %v5026 = vld [vmem:[%s5024 + $0x4] sm:$0xf]
        %v5027 = vld [vmem:[%s5024 + $0x8] sm:$0xf]
        %v5028 = vld [vmem:[%s5024 + $0xc] sm:$0xf]
        %v5029 = vld [vmem:[%s5024 + $0x10] sm:$0xf]
        %v5030 = vld [vmem:[%s5024 + $0x14] sm:$0xf]
        %v5031 = vld [vmem:[%s5024 + $0x18] sm:$0xf]
        %v5032 = vld [vmem:[%s5024 + $0x1c] sm:$0xf]
        %v5033 = vld [vmem:[%s5024 + $0x20] sm:$0xf]
        %v5034 = vld [vmem:[%s5024 + $0x24] sm:$0xf]
        %v5035 = vld [vmem:[%s5024 + $0x28] sm:$0xf]
        %v5036 = vld [vmem:[%s5024 + $0x2c] sm:$0xf]
        %v5037 = vld [vmem:[%s5024 + $0x30] sm:$0xf]
        %v5038 = vld [vmem:[%s5024 + $0x34] sm:$0xf]
        %v5039 = vld [vmem:[%s5024 + $0x38] sm:$0xf]
        %v5040 = vld [vmem:[%s5024 + $0x3c] sm:$0xf]
        %v5041 = vld [vmem:[%s5024 + $0x40] sm:$0xf]
        %v5042 = vld [vmem:[%s5024 + $0x44] sm:$0xf]
        %v5043 = vld [vmem:[%s5024 + $0x48] sm:$0xf]
        %v5044 = vld [vmem:[%s5024 + $0x4c] sm:$0xf]
        %v5045 = vld [vmem:[%s5024 + $0x50] sm:$0xf]
        %v5046 = vld [vmem:[%s5024 + $0x54] sm:$0xf]
        %v5047 = vld [vmem:[%s5024 + $0x58] sm:$0xf]
        %v5048 = vld [vmem:[%s5024 + $0x5c] sm:$0xf]
        %v5049 = vld [vmem:[%s5024 + $0x60] sm:$0xf]
        %v5050 = vld [vmem:[%s5024 + $0x64] sm:$0xf]
        %v5051 = vld [vmem:[%s5024 + $0x68] sm:$0xf]
        %v5052 = vld [vmem:[%s5024 + $0x6c] sm:$0xf]
        %v5053 = vld [vmem:[%s5024 + $0x70] sm:$0xf]
        %v5054 = vld [vmem:[%s5024 + $0x74] sm:$0xf]
        %v5055 = vld [vmem:[%s5024 + $0x78] sm:$0xf]
        %v5056 = vld [vmem:[%s5024 + $0x7c] sm:$0xf]
        %v5057 = vrot.slane %v4448, 2
        %v5058 = vrot.slane %v4449, 2
        %v5093 = vunpack.c.l.b16 %v5025
        %v5094 = vunpack.c.l.b16 %v5026
        %v5095 = vunpack.c.l.b16 %v5027
        %v5096 = vunpack.c.l.b16 %v5028
        %v5097 = vunpack.c.l.b16 %v5029
        %v5098 = vunpack.c.l.b16 %v5030
        %v5099 = vunpack.c.l.b16 %v5031
        %v5100 = vunpack.c.l.b16 %v5032
        %v5101 = vunpack.c.l.b16 %v5033
        %v5102 = vunpack.c.l.b16 %v5034
        %v5103 = vunpack.c.l.b16 %v5035
        %v5104 = vunpack.c.l.b16 %v5036
        %v5105 = vunpack.c.l.b16 %v5037
        %v5106 = vunpack.c.l.b16 %v5038
        %v5107 = vunpack.c.l.b16 %v5039
        %v5108 = vunpack.c.l.b16 %v5040
        %v5109 = vunpack.c.l.b16 %v5041
        %v5110 = vunpack.c.l.b16 %v5042
        %v5111 = vunpack.c.l.b16 %v5043
        %v5112 = vunpack.c.l.b16 %v5044
        %v5113 = vunpack.c.l.b16 %v5045
        %v5114 = vunpack.c.l.b16 %v5046
        %v5115 = vunpack.c.l.b16 %v5047
        %v5116 = vunpack.c.l.b16 %v5048
        %v5117 = vunpack.c.l.b16 %v5049
        %v5118 = vunpack.c.l.b16 %v5050
        %v5119 = vunpack.c.l.b16 %v5051
        %v5120 = vunpack.c.l.b16 %v5052
        %v5121 = vunpack.c.l.b16 %v5053
        %v5122 = vunpack.c.l.b16 %v5054
        %v5123 = vunpack.c.l.b16 %v5055
        %v5124 = vunpack.c.l.b16 %v5056
        %v5125 = vpack.c.b16 %v5094, %v5093
        %v5126 = vpack.c.b16 %v5096, %v5095
        %v5127 = vpack.c.b16 %v5098, %v5097
        %v5128 = vpack.c.b16 %v5100, %v5099
        %v5129 = vpack.c.b16 %v5102, %v5101
        %v5130 = vpack.c.b16 %v5104, %v5103
        %v5131 = vpack.c.b16 %v5106, %v5105
        %v5132 = vpack.c.b16 %v5108, %v5107
        %v5133 = vpack.c.b16 %v5110, %v5109
        %v5134 = vpack.c.b16 %v5112, %v5111
        %v5135 = vpack.c.b16 %v5114, %v5113
        %v5136 = vpack.c.b16 %v5116, %v5115
        %v5137 = vpack.c.b16 %v5118, %v5117
        %v5138 = vpack.c.b16 %v5120, %v5119
        %v5139 = vpack.c.b16 %v5122, %v5121
        %v5140 = vpack.c.b16 %v5124, %v5123
        %5157 = vmatpush.bf16.msra.mxu0 %v5132
        %5158 = vmatpush.bf16.msra.mxu0 %v5131
        %5159 = vmatpush.bf16.msra.mxu0 %v5130
        %5160 = vmatpush.bf16.msra.mxu0 %v5129
        %5161 = vmatpush.bf16.msra.mxu0 %v5128
        %5162 = vmatpush.bf16.msra.mxu0 %v5127
        %5163 = vmatpush.bf16.msra.mxu0 %v5126
        %5164 = vmatpush.bf16.msra.mxu0 %v5125
        %5165 = vmatmul.bf16.gmra.mxu0 %v5057
        %v5166 = vpop.f32.mrf.mxu0
        %v5167 = vadd.f32 0.0, %v5166
        %v5168 = vpop.f32.mrf.mxu0
        %5169 = vdwg.mxu0
        %5170 = vmatpush.bf16.msra.mxu0 %v5140
        %5171 = vmatpush.bf16.msra.mxu0 %v5139
        %5172 = vmatpush.bf16.msra.mxu0 %v5138
        %5173 = vmatpush.bf16.msra.mxu0 %v5137
        %5174 = vmatpush.bf16.msra.mxu0 %v5136
        %5175 = vmatpush.bf16.msra.mxu0 %v5135
        %5176 = vmatpush.bf16.msra.mxu0 %v5134
        %5177 = vmatpush.bf16.msra.mxu0 %v5133
        %5178 = vmatmul.bf16.gmra.mxu0 %v5058
        %v5179 = vpop.f32.mrf.mxu0
        %v5180 = vadd.f32 %v5167, %v5179
        %v5181 = vpop.f32.mrf.mxu0
        %5182 = vdwg.mxu0
        %v5183 = vadd.f32 %v5023, %v5180
        %s5184 = scalar_lea.vmem [#allocation14], 640
        %v5185 = vld [vmem:[%s5184] sm:$0xf]
        %v5186 = vld [vmem:[%s5184 + $0x4] sm:$0xf]
        %v5187 = vld [vmem:[%s5184 + $0x8] sm:$0xf]
        %v5188 = vld [vmem:[%s5184 + $0xc] sm:$0xf]
        %v5189 = vld [vmem:[%s5184 + $0x10] sm:$0xf]
        %v5190 = vld [vmem:[%s5184 + $0x14] sm:$0xf]
        %v5191 = vld [vmem:[%s5184 + $0x18] sm:$0xf]
        %v5192 = vld [vmem:[%s5184 + $0x1c] sm:$0xf]
        %v5193 = vld [vmem:[%s5184 + $0x20] sm:$0xf]
        %v5194 = vld [vmem:[%s5184 + $0x24] sm:$0xf]
        %v5195 = vld [vmem:[%s5184 + $0x28] sm:$0xf]
        %v5196 = vld [vmem:[%s5184 + $0x2c] sm:$0xf]
        %v5197 = vld [vmem:[%s5184 + $0x30] sm:$0xf]
        %v5198 = vld [vmem:[%s5184 + $0x34] sm:$0xf]
        %v5199 = vld [vmem:[%s5184 + $0x38] sm:$0xf]
        %v5200 = vld [vmem:[%s5184 + $0x3c] sm:$0xf]
        %v5201 = vld [vmem:[%s5184 + $0x40] sm:$0xf]
        %v5202 = vld [vmem:[%s5184 + $0x44] sm:$0xf]
        %v5203 = vld [vmem:[%s5184 + $0x48] sm:$0xf]
        %v5204 = vld [vmem:[%s5184 + $0x4c] sm:$0xf]
        %v5205 = vld [vmem:[%s5184 + $0x50] sm:$0xf]
        %v5206 = vld [vmem:[%s5184 + $0x54] sm:$0xf]
        %v5207 = vld [vmem:[%s5184 + $0x58] sm:$0xf]
        %v5208 = vld [vmem:[%s5184 + $0x5c] sm:$0xf]
        %v5209 = vld [vmem:[%s5184 + $0x60] sm:$0xf]
        %v5210 = vld [vmem:[%s5184 + $0x64] sm:$0xf]
        %v5211 = vld [vmem:[%s5184 + $0x68] sm:$0xf]
        %v5212 = vld [vmem:[%s5184 + $0x6c] sm:$0xf]
        %v5213 = vld [vmem:[%s5184 + $0x70] sm:$0xf]
        %v5214 = vld [vmem:[%s5184 + $0x74] sm:$0xf]
        %v5215 = vld [vmem:[%s5184 + $0x78] sm:$0xf]
        %v5216 = vld [vmem:[%s5184 + $0x7c] sm:$0xf]
        %v5217 = vrot.slane %v4451, 2
        %v5218 = vrot.slane %v4454, 2
        %v5253 = vunpack.c.l.b16 %v5185
        %v5254 = vunpack.c.l.b16 %v5186
        %v5255 = vunpack.c.l.b16 %v5187
        %v5256 = vunpack.c.l.b16 %v5188
        %v5257 = vunpack.c.l.b16 %v5189
        %v5258 = vunpack.c.l.b16 %v5190
        %v5259 = vunpack.c.l.b16 %v5191
        %v5260 = vunpack.c.l.b16 %v5192
        %v5261 = vunpack.c.l.b16 %v5193
        %v5262 = vunpack.c.l.b16 %v5194
        %v5263 = vunpack.c.l.b16 %v5195
        %v5264 = vunpack.c.l.b16 %v5196
        %v5265 = vunpack.c.l.b16 %v5197
        %v5266 = vunpack.c.l.b16 %v5198
        %v5267 = vunpack.c.l.b16 %v5199
        %v5268 = vunpack.c.l.b16 %v5200
        %v5269 = vunpack.c.l.b16 %v5201
        %v5270 = vunpack.c.l.b16 %v5202
        %v5271 = vunpack.c.l.b16 %v5203
        %v5272 = vunpack.c.l.b16 %v5204
        %v5273 = vunpack.c.l.b16 %v5205
        %v5274 = vunpack.c.l.b16 %v5206
        %v5275 = vunpack.c.l.b16 %v5207
        %v5276 = vunpack.c.l.b16 %v5208
        %v5277 = vunpack.c.l.b16 %v5209
        %v5278 = vunpack.c.l.b16 %v5210
        %v5279 = vunpack.c.l.b16 %v5211
        %v5280 = vunpack.c.l.b16 %v5212
        %v5281 = vunpack.c.l.b16 %v5213
        %v5282 = vunpack.c.l.b16 %v5214
        %v5283 = vunpack.c.l.b16 %v5215
        %v5284 = vunpack.c.l.b16 %v5216
        %v5285 = vpack.c.b16 %v5254, %v5253
        %v5286 = vpack.c.b16 %v5256, %v5255
        %v5287 = vpack.c.b16 %v5258, %v5257
        %v5288 = vpack.c.b16 %v5260, %v5259
        %v5289 = vpack.c.b16 %v5262, %v5261
        %v5290 = vpack.c.b16 %v5264, %v5263
        %v5291 = vpack.c.b16 %v5266, %v5265
        %v5292 = vpack.c.b16 %v5268, %v5267
        %v5293 = vpack.c.b16 %v5270, %v5269
        %v5294 = vpack.c.b16 %v5272, %v5271
        %v5295 = vpack.c.b16 %v5274, %v5273
        %v5296 = vpack.c.b16 %v5276, %v5275
        %v5297 = vpack.c.b16 %v5278, %v5277
        %v5298 = vpack.c.b16 %v5280, %v5279
        %v5299 = vpack.c.b16 %v5282, %v5281
        %v5300 = vpack.c.b16 %v5284, %v5283
        %5317 = vmatpush.bf16.msra.mxu0 %v5292
        %5318 = vmatpush.bf16.msra.mxu0 %v5291
        %5319 = vmatpush.bf16.msra.mxu0 %v5290
        %5320 = vmatpush.bf16.msra.mxu0 %v5289
        %5321 = vmatpush.bf16.msra.mxu0 %v5288
        %5322 = vmatpush.bf16.msra.mxu0 %v5287
        %5323 = vmatpush.bf16.msra.mxu0 %v5286
        %5324 = vmatpush.bf16.msra.mxu0 %v5285
        %5325 = vmatmul.bf16.gmra.mxu0 %v5217
        %v5326 = vpop.f32.mrf.mxu0
        %v5327 = vadd.f32 0.0, %v5326
        %v5328 = vpop.f32.mrf.mxu0
        %5329 = vdwg.mxu0
        %5330 = vmatpush.bf16.msra.mxu0 %v5300
        %5331 = vmatpush.bf16.msra.mxu0 %v5299
        %5332 = vmatpush.bf16.msra.mxu0 %v5298
        %5333 = vmatpush.bf16.msra.mxu0 %v5297
        %5334 = vmatpush.bf16.msra.mxu0 %v5296
        %5335 = vmatpush.bf16.msra.mxu0 %v5295
        %5336 = vmatpush.bf16.msra.mxu0 %v5294
        %5337 = vmatpush.bf16.msra.mxu0 %v5293
        %5338 = vmatmul.bf16.gmra.mxu0 %v5218
        %v5339 = vpop.f32.mrf.mxu0
        %v5340 = vadd.f32 %v5327, %v5339
        %v5341 = vpop.f32.mrf.mxu0
        %5342 = vdwg.mxu0
        %v5343 = vadd.f32 %v5183, %v5340
        %s5344 = scalar_lea.vmem [#allocation14], 768
        %v5345 = vld [vmem:[%s5344] sm:$0xf]
        %v5346 = vld [vmem:[%s5344 + $0x4] sm:$0xf]
        %v5347 = vld [vmem:[%s5344 + $0x8] sm:$0xf]
        %v5348 = vld [vmem:[%s5344 + $0xc] sm:$0xf]
        %v5349 = vld [vmem:[%s5344 + $0x10] sm:$0xf]
        %v5350 = vld [vmem:[%s5344 + $0x14] sm:$0xf]
        %v5351 = vld [vmem:[%s5344 + $0x18] sm:$0xf]
        %v5352 = vld [vmem:[%s5344 + $0x1c] sm:$0xf]
        %v5353 = vld [vmem:[%s5344 + $0x20] sm:$0xf]
        %v5354 = vld [vmem:[%s5344 + $0x24] sm:$0xf]
        %v5355 = vld [vmem:[%s5344 + $0x28] sm:$0xf]
        %v5356 = vld [vmem:[%s5344 + $0x2c] sm:$0xf]
        %v5357 = vld [vmem:[%s5344 + $0x30] sm:$0xf]
        %v5358 = vld [vmem:[%s5344 + $0x34] sm:$0xf]
        %v5359 = vld [vmem:[%s5344 + $0x38] sm:$0xf]
        %v5360 = vld [vmem:[%s5344 + $0x3c] sm:$0xf]
        %v5361 = vld [vmem:[%s5344 + $0x40] sm:$0xf]
        %v5362 = vld [vmem:[%s5344 + $0x44] sm:$0xf]
        %v5363 = vld [vmem:[%s5344 + $0x48] sm:$0xf]
        %v5364 = vld [vmem:[%s5344 + $0x4c] sm:$0xf]
        %v5365 = vld [vmem:[%s5344 + $0x50] sm:$0xf]
        %v5366 = vld [vmem:[%s5344 + $0x54] sm:$0xf]
        %v5367 = vld [vmem:[%s5344 + $0x58] sm:$0xf]
        %v5368 = vld [vmem:[%s5344 + $0x5c] sm:$0xf]
        %v5369 = vld [vmem:[%s5344 + $0x60] sm:$0xf]
        %v5370 = vld [vmem:[%s5344 + $0x64] sm:$0xf]
        %v5371 = vld [vmem:[%s5344 + $0x68] sm:$0xf]
        %v5372 = vld [vmem:[%s5344 + $0x6c] sm:$0xf]
        %v5373 = vld [vmem:[%s5344 + $0x70] sm:$0xf]
        %v5374 = vld [vmem:[%s5344 + $0x74] sm:$0xf]
        %v5375 = vld [vmem:[%s5344 + $0x78] sm:$0xf]
        %v5376 = vld [vmem:[%s5344 + $0x7c] sm:$0xf]
        %v5377 = vrot.slane %v4448, 3
        %v5378 = vrot.slane %v4449, 3
        %v5413 = vunpack.c.l.b16 %v5345
        %v5414 = vunpack.c.l.b16 %v5346
        %v5415 = vunpack.c.l.b16 %v5347
        %v5416 = vunpack.c.l.b16 %v5348
        %v5417 = vunpack.c.l.b16 %v5349
        %v5418 = vunpack.c.l.b16 %v5350
        %v5419 = vunpack.c.l.b16 %v5351
        %v5420 = vunpack.c.l.b16 %v5352
        %v5421 = vunpack.c.l.b16 %v5353
        %v5422 = vunpack.c.l.b16 %v5354
        %v5423 = vunpack.c.l.b16 %v5355
        %v5424 = vunpack.c.l.b16 %v5356
        %v5425 = vunpack.c.l.b16 %v5357
        %v5426 = vunpack.c.l.b16 %v5358
        %v5427 = vunpack.c.l.b16 %v5359
        %v5428 = vunpack.c.l.b16 %v5360
        %v5429 = vunpack.c.l.b16 %v5361
        %v5430 = vunpack.c.l.b16 %v5362
        %v5431 = vunpack.c.l.b16 %v5363
        %v5432 = vunpack.c.l.b16 %v5364
        %v5433 = vunpack.c.l.b16 %v5365
        %v5434 = vunpack.c.l.b16 %v5366
        %v5435 = vunpack.c.l.b16 %v5367
        %v5436 = vunpack.c.l.b16 %v5368
        %v5437 = vunpack.c.l.b16 %v5369
        %v5438 = vunpack.c.l.b16 %v5370
        %v5439 = vunpack.c.l.b16 %v5371
        %v5440 = vunpack.c.l.b16 %v5372
        %v5441 = vunpack.c.l.b16 %v5373
        %v5442 = vunpack.c.l.b16 %v5374
        %v5443 = vunpack.c.l.b16 %v5375
        %v5444 = vunpack.c.l.b16 %v5376
        %v5445 = vpack.c.b16 %v5414, %v5413
        %v5446 = vpack.c.b16 %v5416, %v5415
        %v5447 = vpack.c.b16 %v5418, %v5417
        %v5448 = vpack.c.b16 %v5420, %v5419
        %v5449 = vpack.c.b16 %v5422, %v5421
        %v5450 = vpack.c.b16 %v5424, %v5423
        %v5451 = vpack.c.b16 %v5426, %v5425
        %v5452 = vpack.c.b16 %v5428, %v5427
        %v5453 = vpack.c.b16 %v5430, %v5429
        %v5454 = vpack.c.b16 %v5432, %v5431
        %v5455 = vpack.c.b16 %v5434, %v5433
        %v5456 = vpack.c.b16 %v5436, %v5435
        %v5457 = vpack.c.b16 %v5438, %v5437
        %v5458 = vpack.c.b16 %v5440, %v5439
        %v5459 = vpack.c.b16 %v5442, %v5441
        %v5460 = vpack.c.b16 %v5444, %v5443
        %5477 = vmatpush.bf16.msra.mxu0 %v5452
        %5478 = vmatpush.bf16.msra.mxu0 %v5451
        %5479 = vmatpush.bf16.msra.mxu0 %v5450
        %5480 = vmatpush.bf16.msra.mxu0 %v5449
        %5481 = vmatpush.bf16.msra.mxu0 %v5448
        %5482 = vmatpush.bf16.msra.mxu0 %v5447
        %5483 = vmatpush.bf16.msra.mxu0 %v5446
        %5484 = vmatpush.bf16.msra.mxu0 %v5445
        %5485 = vmatmul.bf16.gmra.mxu0 %v5377
        %v5486 = vpop.f32.mrf.mxu0
        %v5487 = vadd.f32 0.0, %v5486
        %v5488 = vpop.f32.mrf.mxu0
        %5489 = vdwg.mxu0
        %5490 = vmatpush.bf16.msra.mxu0 %v5460
        %5491 = vmatpush.bf16.msra.mxu0 %v5459
        %5492 = vmatpush.bf16.msra.mxu0 %v5458
        %5493 = vmatpush.bf16.msra.mxu0 %v5457
        %5494 = vmatpush.bf16.msra.mxu0 %v5456
        %5495 = vmatpush.bf16.msra.mxu0 %v5455
        %5496 = vmatpush.bf16.msra.mxu0 %v5454
        %5497 = vmatpush.bf16.msra.mxu0 %v5453
        %5498 = vmatmul.bf16.gmra.mxu0 %v5378
        %v5499 = vpop.f32.mrf.mxu0
        %v5500 = vadd.f32 %v5487, %v5499
        %v5501 = vpop.f32.mrf.mxu0
        %5502 = vdwg.mxu0
        %v5503 = vadd.f32 %v5343, %v5500
        %s5504 = scalar_lea.vmem [#allocation14], 896
        %v5505 = vld [vmem:[%s5504] sm:$0xf]
        %v5506 = vld [vmem:[%s5504 + $0x4] sm:$0xf]
        %v5507 = vld [vmem:[%s5504 + $0x8] sm:$0xf]
        %v5508 = vld [vmem:[%s5504 + $0xc] sm:$0xf]
        %v5509 = vld [vmem:[%s5504 + $0x10] sm:$0xf]
        %v5510 = vld [vmem:[%s5504 + $0x14] sm:$0xf]
        %v5511 = vld [vmem:[%s5504 + $0x18] sm:$0xf]
        %v5512 = vld [vmem:[%s5504 + $0x1c] sm:$0xf]
        %v5513 = vld [vmem:[%s5504 + $0x20] sm:$0xf]
        %v5514 = vld [vmem:[%s5504 + $0x24] sm:$0xf]
        %v5515 = vld [vmem:[%s5504 + $0x28] sm:$0xf]
        %v5516 = vld [vmem:[%s5504 + $0x2c] sm:$0xf]
        %v5517 = vld [vmem:[%s5504 + $0x30] sm:$0xf]
        %v5518 = vld [vmem:[%s5504 + $0x34] sm:$0xf]
        %v5519 = vld [vmem:[%s5504 + $0x38] sm:$0xf]
        %v5520 = vld [vmem:[%s5504 + $0x3c] sm:$0xf]
        %v5521 = vld [vmem:[%s5504 + $0x40] sm:$0xf]
        %v5522 = vld [vmem:[%s5504 + $0x44] sm:$0xf]
        %v5523 = vld [vmem:[%s5504 + $0x48] sm:$0xf]
        %v5524 = vld [vmem:[%s5504 + $0x4c] sm:$0xf]
        %v5525 = vld [vmem:[%s5504 + $0x50] sm:$0xf]
        %v5526 = vld [vmem:[%s5504 + $0x54] sm:$0xf]
        %v5527 = vld [vmem:[%s5504 + $0x58] sm:$0xf]
        %v5528 = vld [vmem:[%s5504 + $0x5c] sm:$0xf]
        %v5529 = vld [vmem:[%s5504 + $0x60] sm:$0xf]
        %v5530 = vld [vmem:[%s5504 + $0x64] sm:$0xf]
        %v5531 = vld [vmem:[%s5504 + $0x68] sm:$0xf]
        %v5532 = vld [vmem:[%s5504 + $0x6c] sm:$0xf]
        %v5533 = vld [vmem:[%s5504 + $0x70] sm:$0xf]
        %v5534 = vld [vmem:[%s5504 + $0x74] sm:$0xf]
        %v5535 = vld [vmem:[%s5504 + $0x78] sm:$0xf]
        %v5536 = vld [vmem:[%s5504 + $0x7c] sm:$0xf]
        %v5537 = vrot.slane %v4451, 3
        %v5538 = vrot.slane %v4454, 3
        %v5573 = vunpack.c.l.b16 %v5505
        %v5574 = vunpack.c.l.b16 %v5506
        %v5575 = vunpack.c.l.b16 %v5507
        %v5576 = vunpack.c.l.b16 %v5508
        %v5577 = vunpack.c.l.b16 %v5509
        %v5578 = vunpack.c.l.b16 %v5510
        %v5579 = vunpack.c.l.b16 %v5511
        %v5580 = vunpack.c.l.b16 %v5512
        %v5581 = vunpack.c.l.b16 %v5513
        %v5582 = vunpack.c.l.b16 %v5514
        %v5583 = vunpack.c.l.b16 %v5515
        %v5584 = vunpack.c.l.b16 %v5516
        %v5585 = vunpack.c.l.b16 %v5517
        %v5586 = vunpack.c.l.b16 %v5518
        %v5587 = vunpack.c.l.b16 %v5519
        %v5588 = vunpack.c.l.b16 %v5520
        %v5589 = vunpack.c.l.b16 %v5521
        %v5590 = vunpack.c.l.b16 %v5522
        %v5591 = vunpack.c.l.b16 %v5523
        %v5592 = vunpack.c.l.b16 %v5524
        %v5593 = vunpack.c.l.b16 %v5525
        %v5594 = vunpack.c.l.b16 %v5526
        %v5595 = vunpack.c.l.b16 %v5527
        %v5596 = vunpack.c.l.b16 %v5528
        %v5597 = vunpack.c.l.b16 %v5529
        %v5598 = vunpack.c.l.b16 %v5530
        %v5599 = vunpack.c.l.b16 %v5531
        %v5600 = vunpack.c.l.b16 %v5532
        %v5601 = vunpack.c.l.b16 %v5533
        %v5602 = vunpack.c.l.b16 %v5534
        %v5603 = vunpack.c.l.b16 %v5535
        %v5604 = vunpack.c.l.b16 %v5536
        %v5605 = vpack.c.b16 %v5574, %v5573
        %v5606 = vpack.c.b16 %v5576, %v5575
        %v5607 = vpack.c.b16 %v5578, %v5577
        %v5608 = vpack.c.b16 %v5580, %v5579
        %v5609 = vpack.c.b16 %v5582, %v5581
        %v5610 = vpack.c.b16 %v5584, %v5583
        %v5611 = vpack.c.b16 %v5586, %v5585
        %v5612 = vpack.c.b16 %v5588, %v5587
        %v5613 = vpack.c.b16 %v5590, %v5589
        %v5614 = vpack.c.b16 %v5592, %v5591
        %v5615 = vpack.c.b16 %v5594, %v5593
        %v5616 = vpack.c.b16 %v5596, %v5595
        %v5617 = vpack.c.b16 %v5598, %v5597
        %v5618 = vpack.c.b16 %v5600, %v5599
        %v5619 = vpack.c.b16 %v5602, %v5601
        %v5620 = vpack.c.b16 %v5604, %v5603
        %5637 = vmatpush.bf16.msra.mxu0 %v5612
        %5638 = vmatpush.bf16.msra.mxu0 %v5611
        %5639 = vmatpush.bf16.msra.mxu0 %v5610
        %5640 = vmatpush.bf16.msra.mxu0 %v5609
        %5641 = vmatpush.bf16.msra.mxu0 %v5608
        %5642 = vmatpush.bf16.msra.mxu0 %v5607
        %5643 = vmatpush.bf16.msra.mxu0 %v5606
        %5644 = vmatpush.bf16.msra.mxu0 %v5605
        %5645 = vmatmul.bf16.gmra.mxu0 %v5537
        %v5646 = vpop.f32.mrf.mxu0
        %v5647 = vadd.f32 0.0, %v5646
        %v5648 = vpop.f32.mrf.mxu0
        %5649 = vdwg.mxu0
        %5650 = vmatpush.bf16.msra.mxu0 %v5620
        %5651 = vmatpush.bf16.msra.mxu0 %v5619
        %5652 = vmatpush.bf16.msra.mxu0 %v5618
        %5653 = vmatpush.bf16.msra.mxu0 %v5617
        %5654 = vmatpush.bf16.msra.mxu0 %v5616
        %5655 = vmatpush.bf16.msra.mxu0 %v5615
        %5656 = vmatpush.bf16.msra.mxu0 %v5614
        %5657 = vmatpush.bf16.msra.mxu0 %v5613
        %5658 = vmatmul.bf16.gmra.mxu0 %v5538
        %v5659 = vpop.f32.mrf.mxu0
        %v5660 = vadd.f32 %v5647, %v5659
        %v5661 = vpop.f32.mrf.mxu0
        %5662 = vdwg.mxu0
        %v5663 = vadd.f32 %v5503, %v5660
        %v5664 = vld [vmem:[#allocation15] sm:$0x1]
        %v5665 = vadd.f32 %v5663, %v5664
        %v5666 = vperm.slane %v5665, 0
        %vm5667 = vcmask 523264
        %5668 = vst.msk [vmem:[%s455] sm:$0xff] %vm5667, %v5666
        %p5669 = scmp.lt.s32.totalorder %s25, 1
        %s5670 = scalar_select %p5669, %s25, 1
        %s5671 = smul.addr %s5670, 8
        %s5672 = scalar_lea.vmem %s9, %s5671
        // Predicated region
        $region89: #{forward.1} parent=55 // pred_check
          %p5673 = pneg %p237
        $region90: #{forward.1} parent=55 // pred_check_branch
          %5675 = sbr.rel (%p5673) target = $region92
        $region91: #{forward.1} parent=55 // pred_region
          _
        $region92: #{forward.1} parent=55 // pred_fallthru
          _
      $region56: #{forward.1} parent=5 // pred_fallthru
        _
      %p5676 = scmp.le.s32.totalorder 2, %s20
      // Predicated region
      $region93: #{forward.1} parent=5 // pred_check
        %p5677 = pneg %p5676
      $region94: #{forward.1} parent=5 // pred_check_branch
        %5679 = sbr.rel (%p5677) target = $region96
      $region95: #{forward.1} parent=5 // pred_region
        %s5680 = ssub.s32 %s20, 2
        // Predicated region
        $region97: #{forward.1} parent=95 // pred_check
          %p5681 = pneg %p243
        $region98: #{forward.1} parent=95 // pred_check_branch
          %5683 = sbr.rel (%p5681) target = $region100
        $region99: #{forward.1} parent=95 // pred_region
          %p5684 = scmp.lt.s32.totalorder %s26, 1
          %s5685 = scalar_select %p5684, %s26, 1
          %s5686 = smul.addr %s5685, 8
          %s5687 = scalar_lea.vmem %s9, %s5686
        $region100: #{forward.1} parent=95 // pred_fallthru
          _
      $region96: #{forward.1} parent=5 // pred_fallthru
        _
    $region6: #{forward.1} parent=1 // loop_footer
      %s24 = sadd.s32 1, %s20
    $region7: #{forward.1} parent=1 // loop_footer_branch
      %19 = sbr.rel target = $region3
    $region8: #{forward.1} parent=1 // loop_exit
      _
    %5688 = vsyncpa [#allocation5], 1
    %s5689 = scalar_lea.sflag [#allocation5], 1
    %5690 = vsyncpa %s5689, 1
    %5691 = vsyncpa [#allocation7], 1
    %5692 = vsyncpa [#allocation10], 1
    %5693 = vsyncpa [#allocation13], 1
    %5694 = vsyncpa [#allocation16], 1

</llo_original>
